<compile_context>
chip_gen: v7x
topology: tpu7x:2x2x1
jax: 0.10.0
libtpu: 0.0.40
codegen_flags: <defaults>
</compile_context>

<pallas_src>
import functools

import jax
import jax.numpy as jnp
import numpy as np
from jax.experimental import pallas as pl
from jax.experimental.pallas import tpu as pltpu

_LN_EPS = 1e-5   # nn.LayerNorm default
_BN_EPS = 1e-5   # nn.BatchNorm1d default
_IN_EPS = 1e-5   # nn.InstanceNorm1d default
_PN_EPS = 1e-8   # PixelNorm

# ~4 MiB of f32 working set per row tile (review: 2 MiB left ~25% per-step
# overhead on v7x); 4 MiB single-buffer budget for the 'in' slab paths.
_TARGET_TILE_BYTES = 4 * 1024 * 1024
_IN_SINGLE_BLOCK_BYTES = 4 * 1024 * 1024
_VMEM_LIMIT_BYTES = 48 * 1024 * 1024


def _compiler_params(*semantics):
    return pltpu.CompilerParams(dimension_semantics=tuple(semantics),
                                vmem_limit_bytes=_VMEM_LIMIT_BYTES)


def _pick_row_tile(n_rows, width, itemsize):
    """Rows per block: ~_TARGET_TILE_BYTES of f32 temps, sublane aligned."""
    packing = 8 * max(1, 4 // max(1, itemsize))     # 8 f32 / 16 bf16 / 32 int8
    target = max(1, _TARGET_TILE_BYTES // max(1, width * 4))
    tr = max(packing, (target // packing) * packing)
    if tr >= n_rows:
        return n_rows        # single block == full array dim: always legal
    return tr


# ------------------- fold-dot precision probe (review item 1) ----------------
_FOLD_DOT_PRECISION = None


def _fold_dot_precision():
    """Pick the cheapest MXU precision for the fold-path x@S / (x*x)@S dots.

    S is bf16-exact (entries are powers of two), so per-operand precision or
    HIGH can cut the f32 decomposition pass count.  A tiny pallas probe checks
    (a) the config lowers in Mosaic and (b) it does NOT silently demote to a
    single bf16 pass (which would break 1e-5 accuracy); otherwise fall back to
    HIGHEST, which is known-good.
    """
    global _FOLD_DOT_PRECISION
    if _FOLD_DOT_PRECISION is not None:
        return _FOLD_DOT_PRECISION
    P = jax.lax.Precision
    candidates = [(P.HIGHEST, P.DEFAULT), P.HIGH, P.HIGHEST]

    R, C, k = 256, 32, 4
    W = k * C
    x = jax.random.normal(jax.random.PRNGKey(1), (R, W), jnp.float32) * 3.0 + 0.5
    seg = np.arange(W, dtype=np.int32) // C
    s_np = (seg[:, None] == seg[None, :]).astype(np.float32) / float(C)
    s = jnp.asarray(s_np)
    ref = np.asarray(x, dtype=np.float64) @ s_np.astype(np.float64)

    chosen = P.HIGHEST
    for prec in candidates:
        def probe_kernel(x_ref, s_ref, o_ref, _prec=prec):
            o_ref[...] = jnp.dot(x_ref[...], s_ref[...], precision=_prec,
                                 preferred_element_type=jnp.float32)
        try:
            out = pl.pallas_call(
                probe_kernel,
                out_shape=jax.ShapeDtypeStruct((R, W), jnp.float32),
            )(x, s)
            out = np.asarray(jax.block_until_ready(out))
            if np.allclose(out, ref, atol=2e-5, rtol=1e-5):
                chosen = prec
                break
        except Exception:
            continue
    _FOLD_DOT_PRECISION = chosen
    return chosen


# --------------------------- row-wise kernels (ln / pn) ----------------------
def _ln_kernel(x_ref, w_ref, b_ref, o_ref):
    x = x_ref[...].astype(jnp.float32)
    m = jnp.mean(x, axis=-1, keepdims=True)
    m2 = jnp.mean(x * x, axis=-1, keepdims=True)
    inv = jax.lax.rsqrt(m2 - m * m + _LN_EPS)
    o_ref[...] = ((x - m) * inv * w_ref[...] + b_ref[...]).astype(o_ref.dtype)


def _pn_kernel(x_ref, o_ref):
    x = x_ref[...].astype(jnp.float32)
    ms = jnp.mean(x * x, axis=-1, keepdims=True)
    o_ref[...] = (x * jax.lax.rsqrt(ms + _PN_EPS)).astype(o_ref.dtype)


# Lane-dense variants for small C: k = 128 // C rows are folded into the lane
# dimension ((R, C) -> (R/k, 128)).  The per-row (segment) mean is a matmul
# with a block-diagonal averaging matrix S (S[p, q] = 1/C iff p, q in the same
# length-C segment); the dot precision comes from _fold_dot_precision().
def _ln_fold_kernel(x_ref, s_ref, w_ref, b_ref, o_ref, *, precision):
    x = x_ref[...].astype(jnp.float32)
    s = s_ref[...]
    m = jnp.dot(x, s, precision=precision, preferred_element_type=jnp.float32)
    m2 = jnp.dot(x * x, s, precision=precision,
                 preferred_element_type=jnp.float32)
    inv = jax.lax.rsqrt(m2 - m * m + _LN_EPS)
    o_ref[...] = ((x - m) * inv * w_ref[...] + b_ref[...]).astype(o_ref.dtype)


def _pn_fold_kernel(x_ref, s_ref, o_ref, *, precision):
    x = x_ref[...].astype(jnp.float32)
    ms = jnp.dot(x * x, s_ref[...], precision=precision,
                 preferred_element_type=jnp.float32)
    o_ref[...] = (x * jax.lax.rsqrt(ms + _PN_EPS)).astype(o_ref.dtype)


def _rowwise_call(kernel, x2d, consts=()):
    """Tile (R, W) over rows with ~4 MiB blocks.  `consts` are small 2-D f32
    arrays with a constant block index (loaded into VMEM once).  A partial
    last block is fine: rows are independent, OOB stores are masked."""
    R, W = x2d.shape
    tr = _pick_row_tile(R, W, x2d.dtype.itemsize)
    grid = (pl.cdiv(R, tr),)
    in_specs = [pl.BlockSpec((tr, W), lambda i: (i, 0))]
    for c in consts:
        in_specs.append(pl.BlockSpec(c.shape, lambda i: (0, 0)))
    return pl.pallas_call(
        kernel,
        out_shape=jax.ShapeDtypeStruct((R, W), x2d.dtype),
        grid_spec=pltpu.PrefetchScalarGridSpec(
            num_scalar_prefetch=0,
            grid=grid,
            in_specs=in_specs,
            out_specs=pl.BlockSpec((tr, W), lambda i: (i, 0)),
        ),
        compiler_params=_compiler_params("parallel"),
    )(x2d, *consts)


# ------------------------------- bn kernels ----------------------------------
def _bn_stats_kernel(x_ref, sum_ref, sq_ref, *, total_rows, block_rows,
                     tiles_per_core):
    p = pl.program_id(0)
    i = pl.program_id(1)

    @pl.when(i == 0)
    def _():
        sum_ref[...] = jnp.zeros_like(sum_ref)
        sq_ref[...] = jnp.zeros_like(sq_ref)

    x = x_ref[...].astype(jnp.float32)            # (tr, C)
    # Mask rows beyond R (partial last tile) and the duplicated clamped block
    # that appears when the tile count is odd.
    blk = p * tiles_per_core + i
    row = blk * block_rows + jax.lax.broadcasted_iota(jnp.int32, x.shape, 0)
    x = jnp.where(row < total_rows, x, 0.0)
    sum_ref[...] += jnp.sum(x, axis=0, keepdims=True)[None]
    sq_ref[...] += jnp.sum(x * x, axis=0, keepdims=True)[None]


def _scale_shift_kernel(x_ref, scale_ref, shift_ref, o_ref):
    x = x_ref[...].astype(jnp.float32)
    o_ref[...] = (x * scale_ref[...] + shift_ref[...]).astype(o_ref.dtype)


# ------------------------------- in kernels ----------------------------------
def _in_kernel(x_ref, o_ref):
    x = x_ref[...].astype(jnp.float32)            # (1, N, tc)
    m = jnp.mean(x, axis=1, keepdims=True)
    m2 = jnp.mean(x * x, axis=1, keepdims=True)
    inv = jax.lax.rsqrt(m2 - m * m + _IN_EPS)
    o_ref[...] = ((x - m) * inv).astype(o_ref.dtype)


def _in_fold_kernel(x_ref, o_ref, *, C, k, inv_n):
    # x_ref: (1, N//k, 128), lane l = j*C + c packs k sequence positions per
    # 128-lane row so loads/stores are lane-dense (no masked vst for C<128).
    x = x_ref[...].astype(jnp.float32)
    s1 = jnp.sum(x, axis=1)                       # (1, 128)
    s2 = jnp.sum(x * x, axis=1)                   # (1, 128)

    def seg_sum(v):                               # fold the k lane segments
        acc = v[:, 0:C]
        for j in range(1, k):
            acc = acc + v[:, j * C:(j + 1) * C]
        return acc                                # (1, C)

    m = seg_sum(s1) * inv_n
    m2 = seg_sum(s2) * inv_n
    inv = jax.lax.rsqrt(m2 - m * m + _IN_EPS)
    scale = jnp.concatenate([inv] * k, axis=1)[:, None, :]          # (1,1,128)
    shift = jnp.concatenate([-m * inv] * k, axis=1)[:, None, :]
    o_ref[...] = (x * scale + shift).astype(o_ref.dtype)


def _in_stats_kernel(x_ref, sum_ref, sq_ref, *, total_n, block_n):
    i = pl.program_id(1)

    @pl.when(i == 0)
    def _():
        sum_ref[...] = jnp.zeros_like(sum_ref)
        sq_ref[...] = jnp.zeros_like(sq_ref)

    x = x_ref[...].astype(jnp.float32)            # (1, tn, C)
    n = i * block_n + jax.lax.broadcasted_iota(jnp.int32, x.shape, 1)
    x = jnp.where(n < total_n, x, 0.0)
    sum_ref[...] += jnp.sum(x, axis=1, keepdims=True)
    sq_ref[...] += jnp.sum(x * x, axis=1, keepdims=True)


def _in_apply_kernel(x_ref, scale_ref, shift_ref, o_ref):
    x = x_ref[...].astype(jnp.float32)
    o_ref[...] = (x * scale_ref[...] + shift_ref[...]).astype(o_ref.dtype)


# ------------------------------- module --------------------------------------
class CustomNorm:
    """Forward-only JAX/Pallas port of megatron CustomNorm."""

    def __init__(self, norm_layer: str, dim: int):
        self.norm_type = norm_layer
        self.dim = dim
        # PyTorch default affine init; kept in f32 like torch parameters.
        self.weight = jnp.ones((1, dim), jnp.float32)
        self.bias = jnp.zeros((1, dim), jnp.float32)

    def __call__(self, x):
        B, N, C = x.shape
        assert C == self.dim
        t = self.norm_type
        if t == "none":
            return x
        if t in ("ln", "pn"):
            return self._ln_pn(x, t)
        if t == "bn":
            return self._bn(x)
        if t == "in":
            return self._in(x)
        raise ValueError(f"unknown norm_type {t!r}")

    # ---- ln / pn: per-row reduction over C ----------------------------------
    def _ln_pn(self, x, t):
        B, N, C = x.shape
        R = B * N
        x2d = x.reshape(R, C)
        k = 128 // C if (C < 128 and 128 % C == 0) else 1

        if k > 1 and R % k == 0:
            # Lane-dense fold (avoids masked <128-lane stores, the largest
            # measured overhead for small C).
            W = k * C
            prec = _fold_dot_precision()
            seg = np.arange(W, dtype=np.int32) // C
            S = jnp.asarray(
                (seg[:, None] == seg[None, :]).astype(np.float32) / float(C))
            xf = x2d.reshape(R // k, W)
            if t == "pn":
                kern = functools.partial(_pn_fold_kernel, precision=prec)
                yf = _rowwise_call(kern, xf, (S,))
            else:
                w_t = jnp.tile(self.weight, (1, k))
                b_t = jnp.tile(self.bias, (1, k))
                kern = functools.partial(_ln_fold_kernel, precision=prec)
                yf = _rowwise_call(kern, xf, (S, w_t, b_t))
            return yf.reshape(B, N, C)

        # Ragged R % k != 0, C >= 128, or C not a divisor of 128: plain
        # row-wise kernels (no wrapper pad/slice HBM passes; masked stores
        # only when C < 128).
        if t == "pn":
            y = _rowwise_call(_pn_kernel, x2d)
        else:
            y = _rowwise_call(_ln_kernel, x2d, (self.weight, self.bias))
        return y.reshape(B, N, C)

    # ---- bn: training-mode batch stats over (B, N) per channel --------------
    def _bn(self, x):
        # TODO(synk): running_mean / running_var buffer updates (a training
        # side effect of nn.BatchNorm1d) are not implemented; the forward
        # output uses batch statistics, matching torch training mode.
        B, N, C = x.shape
        R = B * N
        x2d = x.reshape(R, C)
        tr = _pick_row_tile(R, C, x.dtype.itemsize)
        total_tiles = pl.cdiv(R, tr)

        # Split the stats sweep over two partial accumulators so the leading
        # 'parallel' axis can use both v7x TensorCores (no-op on v5e/v6e).
        n_split = 2 if total_tiles >= 2 else 1
        tpc = pl.cdiv(total_tiles, n_split)

        def x_map(p, i):
            # Clamp so the extra step of an odd tile count reads a valid
            # block; its contribution is masked to zero inside the kernel.
            return (jnp.minimum(p * tpc + i, total_tiles - 1), 0)

        stats = functools.partial(_bn_stats_kernel, total_rows=R,
                                  block_rows=tr, tiles_per_core=tpc)
        xsum, xsq = pl.pallas_call(
            stats,
            out_shape=(jax.ShapeDtypeStruct((n_split, 1, C), jnp.float32),
                       jax.ShapeDtypeStruct((n_split, 1, C), jnp.float32)),
            grid_spec=pltpu.PrefetchScalarGridSpec(
                num_scalar_prefetch=0,
                grid=(n_split, tpc),
                in_specs=[pl.BlockSpec((tr, C), x_map)],
                out_specs=(pl.BlockSpec((1, 1, C), lambda p, i: (p, 0, 0)),
                           pl.BlockSpec((1, 1, C), lambda p, i: (p, 0, 0))),
            ),
            compiler_params=_compiler_params("parallel", "arbitrary"),
        )(x2d)

        # Tiny XLA epilogue: combine partials, fold stats + affine into y=x*a+b.
        xsum = jnp.sum(xsum, axis=0)                 # (1, C)
        xsq = jnp.sum(xsq, axis=0)
        mean = xsum / R
        var = xsq / R - mean * mean                  # biased var (torch train)
        scale = jax.lax.rsqrt(var + _BN_EPS) * self.weight
        shift = self.bias - mean * scale

        # Pass 2: row-tiled apply; 'parallel' grid lets v7x use both TCs.
        y = pl.pallas_call(
            _scale_shift_kernel,
            out_shape=jax.ShapeDtypeStruct((R, C), x.dtype),
            grid_spec=pltpu.PrefetchScalarGridSpec(
                num_scalar_prefetch=0,
                grid=(total_tiles,),
                in_specs=[pl.BlockSpec((tr, C), lambda i: (i, 0)),
                          pl.BlockSpec((1, C), lambda i: (0, 0)),
                          pl.BlockSpec((1, C), lambda i: (0, 0))],
                out_specs=pl.BlockSpec((tr, C), lambda i: (i, 0)),
            ),
            compiler_params=_compiler_params("parallel"),
        )(x2d, scale, shift)
        return y.reshape(B, N, C)

    # ---- in: per-(b, c) stats over N (no affine) -----------------------------
    def _in(self, x):
        B, N, C = x.shape
        itemsize = x.dtype.itemsize
        k = 128 // C if (8 <= C < 128 and 128 % C == 0) else 1

        # Lane-dense fold (C in {8,16,32,64}): no masked vst.
        if k > 1 and N % k == 0 and N * C * itemsize <= _IN_SINGLE_BLOCK_BYTES:
            return self._in_fold(x, k)

        # Single-pass: whole N in one block, channels tiled if C > 128.
        if C <= 128:
            tc = C
        else:
            by_budget = (_IN_SINGLE_BLOCK_BYTES
                         // max(1, N * itemsize)) // 128 * 128
            tc = max(128, min(by_budget, (C // 128) * 128))
        if N * tc * itemsize <= _IN_SINGLE_BLOCK_BYTES:
            return self._in_single(x, tc)

        # Large N: bounded-VMEM two-pass (tiled stats over N, then apply).
        # TODO(synk): this fallback keeps C < 128 stores masked; a folded
        # two-pass layout could recover the lane-dense stores for huge N too.
        return self._in_two_pass(x)

    def _in_fold(self, x, k):
        B, N, C = x.shape
        xf = x.reshape(B, N // k, k * C)             # free contiguous regroup
        kern = functools.partial(_in_fold_kernel, C=C, k=k, inv_n=1.0 / N)
        yf = pl.pallas_call(
            kern,
            out_shape=jax.ShapeDtypeStruct(xf.shape, x.dtype),
            grid_spec=pltpu.PrefetchScalarGridSpec(
                num_scalar_prefetch=0,
                grid=(B,),
                in_specs=[pl.BlockSpec((1, N // k, 128), lambda b: (b, 0, 0))],
                out_specs=pl.BlockSpec((1, N // k, 128), lambda b: (b, 0, 0)),
            ),
            compiler_params=_compiler_params("parallel"),
        )(xf)
        return yf.reshape(B, N, C)

    def _in_single(self, x, tc):
        B, N, C = x.shape
        grid = (B, pl.cdiv(C, tc))
        return pl.pallas_call(
            _in_kernel,
            out_shape=jax.ShapeDtypeStruct((B, N, C), x.dtype),
            grid_spec=pltpu.PrefetchScalarGridSpec(
                num_scalar_prefetch=0,
                grid=grid,
                in_specs=[pl.BlockSpec((1, N, tc), lambda b, c: (b, 0, c))],
                out_specs=pl.BlockSpec((1, N, tc), lambda b, c: (b, 0, c)),
            ),
            compiler_params=_compiler_params("parallel", "parallel"),
        )(x)

    def _in_two_pass(self, x):
        B, N, C = x.shape
        tn = max(8, (_TARGET_TILE_BYTES // max(1, C * 4)) // 8 * 8)
        if tn >= N:
            tn = N
        n_tiles = pl.cdiv(N, tn)

        stats = functools.partial(_in_stats_kernel, total_n=N, block_n=tn)
        xsum, xsq = pl.pallas_call(
            stats,
            out_shape=(jax.ShapeDtypeStruct((B, 1, C), jnp.float32),
                       jax.ShapeDtypeStruct((B, 1, C), jnp.float32)),
            grid_spec=pltpu.PrefetchScalarGridSpec(
                num_scalar_prefetch=0,
                grid=(B, n_tiles),
                in_specs=[pl.BlockSpec((1, tn, C), lambda b, i: (b, i, 0))],
                out_specs=(pl.BlockSpec((1, 1, C), lambda b, i: (b, 0, 0)),
                           pl.BlockSpec((1, 1, C), lambda b, i: (b, 0, 0))),
            ),
            compiler_params=_compiler_params("parallel", "arbitrary"),
        )(x)

        mean = xsum / N
        var = xsq / N - mean * mean
        inv = jax.lax.rsqrt(var + _IN_EPS)
        scale = inv                                   # (B, 1, C)
        shift = -mean * inv

        return pl.pallas_call(
            _in_apply_kernel,
            out_shape=jax.ShapeDtypeStruct((B, N, C), x.dtype),
            grid_spec=pltpu.PrefetchScalarGridSpec(
                num_scalar_prefetch=0,
                grid=(B, n_tiles),
                in_specs=[pl.BlockSpec((1, tn, C), lambda b, i: (b, i, 0)),
                          pl.BlockSpec((1, 1, C), lambda b, i: (b, 0, 0)),
                          pl.BlockSpec((1, 1, C), lambda b, i: (b, 0, 0))],
                out_specs=pl.BlockSpec((1, tn, C), lambda b, i: (b, i, 0)),
            ),
            compiler_params=_compiler_params("parallel", "parallel"),
        )(x, scale, shift)


# ----------------------------- reference (pure jnp) ---------------------------
def _reference(norm_type, x, w, b):
    x32 = x.astype(jnp.float32)
    if norm_type == "none":
        return x
    if norm_type == "ln":
        m = jnp.mean(x32, -1, keepdims=True)
        v = jnp.mean((x32 - m) ** 2, -1, keepdims=True)
        return ((x32 - m) * jax.lax.rsqrt(v + _LN_EPS) * w + b).astype(x.dtype)
    if norm_type == "pn":
        ms = jnp.mean(x32 * x32, -1, keepdims=True)
        return (x32 * jax.lax.rsqrt(ms + _PN_EPS)).astype(x.dtype)
    if norm_type == "in":
        m = jnp.mean(x32, 1, keepdims=True)
        v = jnp.mean((x32 - m) ** 2, 1, keepdims=True)
        return ((x32 - m) * jax.lax.rsqrt(v + _IN_EPS)).astype(x.dtype)
    if norm_type == "bn":
        m = jnp.mean(x32, (0, 1), keepdims=True)
        v = jnp.mean((x32 - m) ** 2, (0, 1), keepdims=True)
        return ((x32 - m) * jax.lax.rsqrt(v + _BN_EPS) * w + b).astype(x.dtype)
    raise ValueError(norm_type)


if __name__ == "__main__":
    B, N, C = 2, 16, 32
    x = jax.random.normal(jax.random.PRNGKey(0), (B, N, C), dtype=jnp.float32)

    ok = True
    for nt in ("ln", "bn", "in", "pn", "none"):
        mod = CustomNorm(nt, C)
        y = jax.block_until_ready(mod(x))
        y_ref = _reference(nt, x, mod.weight.reshape(1, 1, C),
                           mod.bias.reshape(1, 1, C))
        if not np.allclose(np.asarray(y), np.asarray(y_ref),
                           atol=1e-5, rtol=1e-5):
            ok = False
            print(f"MISMATCH for norm_type={nt}")
    if ok:
        print("KERNEL_OK")
</pallas_src>

<mosaic_0001>
module attributes {stable_mosaic.version = 11 : i64} {
  func.func @probe_kernel(%arg0: memref<256x128xf32, #tpu.memory_space<vmem>>, %arg1: memref<128x128xf32, #tpu.memory_space<vmem>>, %arg2: memref<256x128xf32, #tpu.memory_space<vmem>>) attributes {dimension_semantics = [], scalar_prefetch = 0 : i64, scratch_operands = 0 : i64, tpu.core_type = #tpu.core_type<tc>} {
    %c0 = arith.constant 0 : index
    %c0_0 = arith.constant 0 : index
    %0 = vector.load %arg0[%c0, %c0_0] : memref<256x128xf32, #tpu.memory_space<vmem>>, vector<256x128xf32>
    %c0_1 = arith.constant 0 : index
    %c0_2 = arith.constant 0 : index
    %1 = vector.load %arg1[%c0_1, %c0_2] : memref<128x128xf32, #tpu.memory_space<vmem>>, vector<128x128xf32>
    %cst = arith.constant dense<0.000000e+00> : vector<256x128xf32>
    %2 = tpu.matmul %0, %1, %cst {dimension_numbers = #tpu.dot_dimension_numbers<[1], [0], [0], [1], [0, 0, 1, 1], [], []>, precision = #tpu.contract_precision<fp32>} : vector<256x128xf32>, vector<128x128xf32>, vector<256x128xf32> -> vector<256x128xf32>
    %c0_3 = arith.constant 0 : index
    %c0_4 = arith.constant 0 : index
    %3 = vector.load %arg2[%c0_3, %c0_4] : memref<256x128xf32, #tpu.memory_space<vmem>>, vector<256x128xf32>
    tpu.vector_store %arg2[%c0_3, %c0_4], %2 {strides = array<i32>} : memref<256x128xf32, #tpu.memory_space<vmem>>, vector<256x128xf32>,
    return
  }
}

module attributes {stable_mosaic.version = 11 : i64} {
  func.func @_ln_fold_kernel(%arg0: i32, %arg1: memref<8x128xf32, #tpu.memory_space<vmem>>, %arg2: memref<128x128xf32, #tpu.memory_space<vmem>>, %arg3: memref<1x128xf32, #tpu.memory_space<vmem>>, %arg4: memref<1x128xf32, #tpu.memory_space<vmem>>, %arg5: memref<8x128xf32, #tpu.memory_space<vmem>>) attributes {dimension_semantics = [#tpu.dimension_semantics<parallel>], iteration_bounds = array<i64: 1>, scalar_prefetch = 0 : i64, scratch_operands = 0 : i64, tpu.core_type = #tpu.core_type<tc>, window_params = [{transform_indices = @transform_0, window_bounds = array<i64: 8, 128>}, {pipeline_mode = #tpu.pipeline_mode<synchronous>, transform_indices = @transform_1, window_bounds = array<i64: 128, 128>}, {pipeline_mode = #tpu.pipeline_mode<synchronous>, transform_indices = @transform_2, window_bounds = array<i64: 1, 128>}, {pipeline_mode = #tpu.pipeline_mode<synchronous>, transform_indices = @transform_3, window_bounds = array<i64: 1, 128>}, {transform_indices = @transform_4, window_bounds = array<i64: 8, 128>}]} {
    %c0 = arith.constant 0 : index
    %c0_0 = arith.constant 0 : index
    %0 = vector.load %arg1[%c0, %c0_0] : memref<8x128xf32, #tpu.memory_space<vmem>>, vector<8x128xf32>
    %c0_1 = arith.constant 0 : index
    %c0_2 = arith.constant 0 : index
    %1 = vector.load %arg2[%c0_1, %c0_2] : memref<128x128xf32, #tpu.memory_space<vmem>>, vector<128x128xf32>
    %cst = arith.constant dense<0.000000e+00> : vector<8x128xf32>
    %2 = tpu.matmul %0, %1, %cst {dimension_numbers = #tpu.dot_dimension_numbers<[1], [0], [0], [1], [0, 0, 1, 1], [], []>, precision = #tpu.contract_precision<fp32>} : vector<8x128xf32>, vector<128x128xf32>, vector<8x128xf32> -> vector<8x128xf32>
    %3 = arith.mulf %0, %0 : vector<8x128xf32>
    %cst_3 = arith.constant dense<0.000000e+00> : vector<8x128xf32>
    %4 = tpu.matmul %3, %1, %cst_3 {dimension_numbers = #tpu.dot_dimension_numbers<[1], [0], [0], [1], [0, 0, 1, 1], [], []>, precision = #tpu.contract_precision<fp32>} : vector<8x128xf32>, vector<128x128xf32>, vector<8x128xf32> -> vector<8x128xf32>
    %5 = arith.mulf %2, %2 : vector<8x128xf32>
    %6 = arith.subf %4, %5 : vector<8x128xf32>
    %cst_4 = arith.constant 9.99999974E-6 : f32
    %7 = vector.broadcast %cst_4 : f32 to vector<8x128xf32>
    %8 = arith.addf %6, %7 : vector<8x128xf32>
    %9 = math.rsqrt %8 : vector<8x128xf32>
    %10 = arith.subf %0, %2 : vector<8x128xf32>
    %11 = arith.mulf %10, %9 : vector<8x128xf32>
    %c0_5 = arith.constant 0 : index
    %c0_6 = arith.constant 0 : index
    %12 = vector.load %arg3[%c0_5, %c0_6] : memref<1x128xf32, #tpu.memory_space<vmem>>, vector<1x128xf32>
    %13 = vector.broadcast %12 : vector<1x128xf32> to vector<8x128xf32>
    %14 = arith.mulf %11, %13 : vector<8x128xf32>
    %c0_7 = arith.constant 0 : index
    %c0_8 = arith.constant 0 : index
    %15 = vector.load %arg4[%c0_7, %c0_8] : memref<1x128xf32, #tpu.memory_space<vmem>>, vector<1x128xf32>
    %16 = vector.broadcast %15 : vector<1x128xf32> to vector<8x128xf32>
    %17 = arith.addf %14, %16 : vector<8x128xf32>
    %c0_9 = arith.constant 0 : index
    %c0_10 = arith.constant 0 : index
    %18 = vector.load %arg5[%c0_9, %c0_10] : memref<8x128xf32, #tpu.memory_space<vmem>>, vector<8x128xf32>
    tpu.vector_store %arg5[%c0_9, %c0_10], %17 {strides = array<i32>} : memref<8x128xf32, #tpu.memory_space<vmem>>, vector<8x128xf32>,
    return
  }
  func.func @transform_0(%arg0: i32) -> (i32, i32) {
    %c0_i32 = arith.constant 0 : i32
    %c0_i32_0 = arith.constant 0 : i32
    return %arg0, %c0_i32 : i32, i32
  }
  func.func @transform_1(%arg0: i32) -> (i32, i32) {
    %c0_i32 = arith.constant 0 : i32
    %c0_i32_0 = arith.constant 0 : i32
    %c0_i32_1 = arith.constant 0 : i32
    return %c0_i32, %c0_i32_0 : i32, i32
  }
  func.func @transform_2(%arg0: i32) -> (i32, i32) {
    %c0_i32 = arith.constant 0 : i32
    %c0_i32_0 = arith.constant 0 : i32
    %c0_i32_1 = arith.constant 0 : i32
    return %c0_i32, %c0_i32_0 : i32, i32
  }
  func.func @transform_3(%arg0: i32) -> (i32, i32) {
    %c0_i32 = arith.constant 0 : i32
    %c0_i32_0 = arith.constant 0 : i32
    %c0_i32_1 = arith.constant 0 : i32
    return %c0_i32, %c0_i32_0 : i32, i32
  }
  func.func @transform_4(%arg0: i32) -> (i32, i32) {
    %c0_i32 = arith.constant 0 : i32
    %c0_i32_0 = arith.constant 0 : i32
    return %arg0, %c0_i32 : i32, i32
  }
}

</mosaic_0001>

<llo_original>
// kernel: tpu_custom_call.1
$region0: #{tpu_custom_call.1}
  #allocation0 [shape = 'u32[]', space=smem, size = 0x4, offset = 0x4, fixed_abs, tag = 'smem constant byte address 0x4 - core index']
  #allocation1 [shape = 'u32[144,128]{1,0:T(1,128)}', space=vmem, size = 0x12000, scoped, tag = 'internal scratch']
  %s0 = inlined_call_operand.hbm [shape: f32[256,128], index: 0, kind: input, shape index: {}]
  %s1 = inlined_call_operand.hbm [shape: f32[128,128], index: 1, kind: input, shape index: {}]
  %s2 = inlined_call_operand.hbm [shape: f32[256,128], index: 2, kind: output, shape index: {}]
  %s3 = sld [smem:[#allocation0]]
  $region26: #{tpu_custom_call.1} parent=0
    _
  %s5 = ssub.s32 1, %s3
  %s6 = scalar_select 0, %s5, %s3
  $region1: #{tpu_custom_call.1} parent=0
    #allocation2 [shape = 'u8[131072]{0}', space=vmem, size = 0x20000, scoped, tag = 'input window, operand 0, single buffered']
    #allocation3 [shape = 's32[1]{0}', space=sflag, size = 0x4, scoped, tag = 'scoped memory for tpu_custom_call.1']
    #allocation4 [shape = 's32[1]{0}', space=sflag, size = 0x4, scoped, tag = 'scoped memory for tpu_custom_call.1']
    #allocation5 [shape = 'u8[65536]{0}', space=vmem, size = 0x10000, scoped, tag = 'input window, operand 1, single buffered']
    #allocation6 [shape = 's32[1]{0}', space=sflag, size = 0x4, scoped, tag = 'scoped memory for tpu_custom_call.1']
    #allocation7 [shape = 'u8[131072]{0}', space=vmem, size = 0x20000, scoped, tag = 'output window, operand 0, single buffered']
    %7 = vsyncpa [#allocation3], 0
    %8 = vsyncpa [#allocation6], 0
    %9 = vsyncpa [#allocation4], 0
    // Predicated region
    $region2: #{tpu_custom_call.1} parent=1 // pred_check
      _
    $region3: #{tpu_custom_call.1} parent=1 // pred_check_branch
      %11 = sbr.rel (0) target = $region5
    $region4: #{tpu_custom_call.1} parent=1 // pred_region
      %s13 = ssub.s32 4096, 4096
      %14 = vsyncadd [#allocation3], %s13
      %s15 = sshll.u32 [#allocation2], 4
      %s16 = int_to_ptr.vmem [resolvable:$true] %s15
      %21 = dma.hbm_to_vmem [thread:$0]  %s0, 4096, %s16, [#allocation3], 128, 128, 8
    $region5: #{tpu_custom_call.1} parent=1 // pred_fallthru
      _
    // Predicated region
    $region6: #{tpu_custom_call.1} parent=1 // pred_check
      _
    $region7: #{tpu_custom_call.1} parent=1 // pred_check_branch
      %23 = sbr.rel (0) target = $region9
    $region8: #{tpu_custom_call.1} parent=1 // pred_region
      %s25 = ssub.s32 2048, 2048
      %26 = vsyncadd [#allocation6], %s25
      %s27 = sshll.u32 [#allocation5], 4
      %s28 = int_to_ptr.vmem [resolvable:$true] %s27
      %33 = dma.hbm_to_vmem [thread:$0]  %s1, 2048, %s28, [#allocation6], 128, 128, 8
    $region9: #{tpu_custom_call.1} parent=1 // pred_fallthru
      _
    // Predicated region
    $region10: #{tpu_custom_call.1} parent=1 // pred_check
      _
    $region11: #{tpu_custom_call.1} parent=1 // pred_check_branch
      %35 = sbr.rel (0) target = $region13
    $region12: #{tpu_custom_call.1} parent=1 // pred_region
      %36 = dma.done [#allocation3], 4096
    $region13: #{tpu_custom_call.1} parent=1 // pred_fallthru
      _
    // Predicated region
    $region14: #{tpu_custom_call.1} parent=1 // pred_check
      _
    $region15: #{tpu_custom_call.1} parent=1 // pred_check_branch
      %38 = sbr.rel (0) target = $region17
    $region16: #{tpu_custom_call.1} parent=1 // pred_region
      %39 = dma.done [#allocation6], 2048
    $region17: #{tpu_custom_call.1} parent=1 // pred_fallthru
      _
    %v40 = vld [vmem:[#allocation2] sm:$0xff]
    %v41 = vld [vmem:[#allocation2 + $0x8] sm:$0xff]
    %v42 = vld [vmem:[#allocation2 + $0x10] sm:$0xff]
    %v43 = vld [vmem:[#allocation2 + $0x18] sm:$0xff]
    %v44 = vld [vmem:[#allocation2 + $0x20] sm:$0xff]
    %v45 = vld [vmem:[#allocation2 + $0x28] sm:$0xff]
    %v46 = vld [vmem:[#allocation2 + $0x30] sm:$0xff]
    %v47 = vld [vmem:[#allocation2 + $0x38] sm:$0xff]
    %v48 = vld [vmem:[#allocation2 + $0x40] sm:$0xff]
    %v49 = vld [vmem:[#allocation2 + $0x48] sm:$0xff]
    %v50 = vld [vmem:[#allocation2 + $0x50] sm:$0xff]
    %v51 = vld [vmem:[#allocation2 + $0x58] sm:$0xff]
    %v52 = vld [vmem:[#allocation2 + $0x60] sm:$0xff]
    %v53 = vld [vmem:[#allocation2 + $0x68] sm:$0xff]
    %v54 = vld [vmem:[#allocation2 + $0x70] sm:$0xff]
    %v55 = vld [vmem:[#allocation2 + $0x78] sm:$0xff]
    %v56 = vld [vmem:[#allocation2 + $0x80] sm:$0xff]
    %v57 = vld [vmem:[#allocation2 + $0x88] sm:$0xff]
    %v58 = vld [vmem:[#allocation2 + $0x90] sm:$0xff]
    %v59 = vld [vmem:[#allocation2 + $0x98] sm:$0xff]
    %v60 = vld [vmem:[#allocation2 + $0xa0] sm:$0xff]
    %v61 = vld [vmem:[#allocation2 + $0xa8] sm:$0xff]
    %v62 = vld [vmem:[#allocation2 + $0xb0] sm:$0xff]
    %v63 = vld [vmem:[#allocation2 + $0xb8] sm:$0xff]
    %v64 = vld [vmem:[#allocation2 + $0xc0] sm:$0xff]
    %v65 = vld [vmem:[#allocation2 + $0xc8] sm:$0xff]
    %v66 = vld [vmem:[#allocation2 + $0xd0] sm:$0xff]
    %v67 = vld [vmem:[#allocation2 + $0xd8] sm:$0xff]
    %v68 = vld [vmem:[#allocation2 + $0xe0] sm:$0xff]
    %v69 = vld [vmem:[#allocation2 + $0xe8] sm:$0xff]
    %v70 = vld [vmem:[#allocation2 + $0xf0] sm:$0xff]
    %v71 = vld [vmem:[#allocation2 + $0xf8] sm:$0xff]
    %v72 = vld [vmem:[#allocation5] sm:$0xff]
    %v73 = vld [vmem:[#allocation5 + $0x8] sm:$0xff]
    %v74 = vld [vmem:[#allocation5 + $0x10] sm:$0xff]
    %v75 = vld [vmem:[#allocation5 + $0x18] sm:$0xff]
    %v76 = vld [vmem:[#allocation5 + $0x20] sm:$0xff]
    %v77 = vld [vmem:[#allocation5 + $0x28] sm:$0xff]
    %v78 = vld [vmem:[#allocation5 + $0x30] sm:$0xff]
    %v79 = vld [vmem:[#allocation5 + $0x38] sm:$0xff]
    %v80 = vld [vmem:[#allocation5 + $0x40] sm:$0xff]
    %v81 = vld [vmem:[#allocation5 + $0x48] sm:$0xff]
    %v82 = vld [vmem:[#allocation5 + $0x50] sm:$0xff]
    %v83 = vld [vmem:[#allocation5 + $0x58] sm:$0xff]
    %v84 = vld [vmem:[#allocation5 + $0x60] sm:$0xff]
    %v85 = vld [vmem:[#allocation5 + $0x68] sm:$0xff]
    %v86 = vld [vmem:[#allocation5 + $0x70] sm:$0xff]
    %v87 = vld [vmem:[#allocation5 + $0x78] sm:$0xff]
    %88 = vmatprep.subr.mxu0 0.0
    %v89 = vand.u32 %v72, 4294901760
    %90 = vmatpush1.msra.mxu0 %v89
    %91 = vmatprep.subr.mxu0 0.0
    %v92 = vand.u32 %v73, 4294901760
    %93 = vmatpush1.msra.mxu0 %v92
    %94 = vmatprep.subr.mxu0 0.0
    %v95 = vand.u32 %v74, 4294901760
    %96 = vmatpush1.msra.mxu0 %v95
    %97 = vmatprep.subr.mxu0 0.0
    %v98 = vand.u32 %v75, 4294901760
    %99 = vmatpush1.msra.mxu0 %v98
    %100 = vmatprep.subr.mxu0 0.0
    %v101 = vand.u32 %v76, 4294901760
    %102 = vmatpush1.msra.mxu0 %v101
    %103 = vmatprep.subr.mxu0 0.0
    %v104 = vand.u32 %v77, 4294901760
    %105 = vmatpush1.msra.mxu0 %v104
    %106 = vmatprep.subr.mxu0 0.0
    %v107 = vand.u32 %v78, 4294901760
    %108 = vmatpush1.msra.mxu0 %v107
    %109 = vmatprep.subr.mxu0 0.0
    %v110 = vand.u32 %v79, 4294901760
    %111 = vmatpush1.msra.mxu0 %v110
    %112 = vmatprep.subr.mxu0 0.0
    %v113 = vand.u32 %v80, 4294901760
    %114 = vmatpush1.msra.mxu0 %v113
    %115 = vmatprep.subr.mxu0 0.0
    %v116 = vand.u32 %v81, 4294901760
    %117 = vmatpush1.msra.mxu0 %v116
    %118 = vmatprep.subr.mxu0 0.0
    %v119 = vand.u32 %v82, 4294901760
    %120 = vmatpush1.msra.mxu0 %v119
    %121 = vmatprep.subr.mxu0 0.0
    %v122 = vand.u32 %v83, 4294901760
    %123 = vmatpush1.msra.mxu0 %v122
    %124 = vmatprep.subr.mxu0 0.0
    %v125 = vand.u32 %v84, 4294901760
    %126 = vmatpush1.msra.mxu0 %v125
    %127 = vmatprep.subr.mxu0 0.0
    %v128 = vand.u32 %v85, 4294901760
    %129 = vmatpush1.msra.mxu0 %v128
    %130 = vmatprep.subr.mxu0 0.0
    %v131 = vand.u32 %v86, 4294901760
    %132 = vmatpush1.msra.mxu0 %v131
    %133 = vmatprep.subr.mxu0 0.0
    %v134 = vand.u32 %v87, 4294901760
    %135 = vmatpush1.msra.mxu0 %v134
    %136 = vmatprep.subr.mxu0 0.0
    %137 = vmatpush1.msra.mxu0 0.0
    %138 = vmatprep.subr.mxu0 0.0
    %139 = vmatpush1.msra.mxu0 0.0
    %140 = vmatprep.subr.mxu0 0.0
    %141 = vmatpush1.msra.mxu0 0.0
    %142 = vmatprep.subr.mxu0 0.0
    %143 = vmatpush1.msra.mxu0 0.0
    %144 = vmatprep.subr.mxu0 0.0
    %145 = vmatpush1.msra.mxu0 0.0
    %146 = vmatprep.subr.mxu0 0.0
    %147 = vmatpush1.msra.mxu0 0.0
    %148 = vmatprep.subr.mxu0 0.0
    %149 = vmatpush1.msra.mxu0 0.0
    %150 = vmatprep.subr.mxu0 0.0
    %151 = vmatpush1.msra.mxu0 0.0
    %152 = vmatprep.subr.mxu0 0.0
    %153 = vmatpush1.msra.mxu0 0.0
    %154 = vmatprep.subr.mxu0 0.0
    %155 = vmatpush1.msra.mxu0 0.0
    %156 = vmatprep.subr.mxu0 0.0
    %157 = vmatpush1.msra.mxu0 0.0
    %158 = vmatprep.subr.mxu0 0.0
    %159 = vmatpush1.msra.mxu0 0.0
    %160 = vmatprep.subr.mxu0 0.0
    %161 = vmatpush1.msra.mxu0 0.0
    %162 = vmatprep.subr.mxu0 0.0
    %163 = vmatpush1.msra.mxu0 0.0
    %164 = vmatprep.subr.mxu0 0.0
    %165 = vmatpush1.msra.mxu0 0.0
    %166 = vmatprep.subr.mxu0 0.0
    %167 = vmatpush1.msra.mxu0 0.0
    %168 = vmatprep.mubr.f32.mxu0 0.0
    %v169 = vand.u32 %v40, 4294901760
    %v170 = vsub.f32 %v40, %v169
    %v171 = vand.u32 %v170, 4294901760
    %v172 = vsub.f32 %v170, %v171
    %v173 = vand.u32 %v172, 4294901760
    %174 = vmatmul.mubr.f32.gmra.mrb[0].mxu0 %v173
    %v175 = vpop.f32.mrb[0].mxu0
    %v176 = vadd.f32 0.0, %v175
    %v177 = vpop.f32.mrb[0].mxu0
    %178 = vmatprep.mubr.f32.mxu0 0.0
    %v179 = vand.u32 %v41, 4294901760
    %v180 = vsub.f32 %v41, %v179
    %v181 = vand.u32 %v180, 4294901760
    %v182 = vsub.f32 %v180, %v181
    %v183 = vand.u32 %v182, 4294901760
    %184 = vmatmul.mubr.f32.gmra.mrb[0].mxu0 %v183
    %v185 = vpop.f32.mrb[0].mxu0
    %v186 = vadd.f32 0.0, %v185
    %v187 = vpop.f32.mrb[0].mxu0
    %188 = vmatprep.mubr.f32.mxu0 0.0
    %v189 = vand.u32 %v42, 4294901760
    %v190 = vsub.f32 %v42, %v189
    %v191 = vand.u32 %v190, 4294901760
    %v192 = vsub.f32 %v190, %v191
    %v193 = vand.u32 %v192, 4294901760
    %194 = vmatmul.mubr.f32.gmra.mrb[0].mxu0 %v193
    %v195 = vpop.f32.mrb[0].mxu0
    %v196 = vadd.f32 0.0, %v195
    %v197 = vpop.f32.mrb[0].mxu0
    %198 = vmatprep.mubr.f32.mxu0 0.0
    %v199 = vand.u32 %v43, 4294901760
    %v200 = vsub.f32 %v43, %v199
    %v201 = vand.u32 %v200, 4294901760
    %v202 = vsub.f32 %v200, %v201
    %v203 = vand.u32 %v202, 4294901760
    %204 = vmatmul.mubr.f32.gmra.mrb[0].mxu0 %v203
    %v205 = vpop.f32.mrb[0].mxu0
    %v206 = vadd.f32 0.0, %v205
    %v207 = vpop.f32.mrb[0].mxu0
    %208 = vmatprep.mubr.f32.mxu0 0.0
    %v209 = vand.u32 %v44, 4294901760
    %v210 = vsub.f32 %v44, %v209
    %v211 = vand.u32 %v210, 4294901760
    %v212 = vsub.f32 %v210, %v211
    %v213 = vand.u32 %v212, 4294901760
    %214 = vmatmul.mubr.f32.gmra.mrb[0].mxu0 %v213
    %v215 = vpop.f32.mrb[0].mxu0
    %v216 = vadd.f32 0.0, %v215
    %v217 = vpop.f32.mrb[0].mxu0
    %218 = vmatprep.mubr.f32.mxu0 0.0
    %v219 = vand.u32 %v45, 4294901760
    %v220 = vsub.f32 %v45, %v219
    %v221 = vand.u32 %v220, 4294901760
    %v222 = vsub.f32 %v220, %v221
    %v223 = vand.u32 %v222, 4294901760
    %224 = vmatmul.mubr.f32.gmra.mrb[0].mxu0 %v223
    %v225 = vpop.f32.mrb[0].mxu0
    %v226 = vadd.f32 0.0, %v225
    %v227 = vpop.f32.mrb[0].mxu0
    %228 = vmatprep.mubr.f32.mxu0 0.0
    %v229 = vand.u32 %v46, 4294901760
    %v230 = vsub.f32 %v46, %v229
    %v231 = vand.u32 %v230, 4294901760
    %v232 = vsub.f32 %v230, %v231
    %v233 = vand.u32 %v232, 4294901760
    %234 = vmatmul.mubr.f32.gmra.mrb[0].mxu0 %v233
    %v235 = vpop.f32.mrb[0].mxu0
    %v236 = vadd.f32 0.0, %v235
    %v237 = vpop.f32.mrb[0].mxu0
    %238 = vmatprep.mubr.f32.mxu0 0.0
    %v239 = vand.u32 %v47, 4294901760
    %v240 = vsub.f32 %v47, %v239
    %v241 = vand.u32 %v240, 4294901760
    %v242 = vsub.f32 %v240, %v241
    %v243 = vand.u32 %v242, 4294901760
    %244 = vmatmul.mubr.f32.gmra.mrb[0].mxu0 %v243
    %v245 = vpop.f32.mrb[0].mxu0
    %v246 = vadd.f32 0.0, %v245
    %v247 = vpop.f32.mrb[0].mxu0
    %248 = vmatprep.mubr.f32.mxu0 0.0
    %v249 = vand.u32 %v48, 4294901760
    %v250 = vsub.f32 %v48, %v249
    %v251 = vand.u32 %v250, 4294901760
    %v252 = vsub.f32 %v250, %v251
    %v253 = vand.u32 %v252, 4294901760
    %254 = vmatmul.mubr.f32.gmra.mrb[0].mxu0 %v253
    %v255 = vpop.f32.mrb[0].mxu0
    %v256 = vadd.f32 0.0, %v255
    %v257 = vpop.f32.mrb[0].mxu0
    %258 = vmatprep.mubr.f32.mxu0 0.0
    %v259 = vand.u32 %v49, 4294901760
    %v260 = vsub.f32 %v49, %v259
    %v261 = vand.u32 %v260, 4294901760
    %v262 = vsub.f32 %v260, %v261
    %v263 = vand.u32 %v262, 4294901760
    %264 = vmatmul.mubr.f32.gmra.mrb[0].mxu0 %v263
    %v265 = vpop.f32.mrb[0].mxu0
    %v266 = vadd.f32 0.0, %v265
    %v267 = vpop.f32.mrb[0].mxu0
    %268 = vmatprep.mubr.f32.mxu0 0.0
    %v269 = vand.u32 %v50, 4294901760
    %v270 = vsub.f32 %v50, %v269
    %v271 = vand.u32 %v270, 4294901760
    %v272 = vsub.f32 %v270, %v271
    %v273 = vand.u32 %v272, 4294901760
    %274 = vmatmul.mubr.f32.gmra.mrb[0].mxu0 %v273
    %v275 = vpop.f32.mrb[0].mxu0
    %v276 = vadd.f32 0.0, %v275
    %v277 = vpop.f32.mrb[0].mxu0
    %278 = vmatprep.mubr.f32.mxu0 0.0
    %v279 = vand.u32 %v51, 4294901760
    %v280 = vsub.f32 %v51, %v279
    %v281 = vand.u32 %v280, 4294901760
    %v282 = vsub.f32 %v280, %v281
    %v283 = vand.u32 %v282, 4294901760
    %284 = vmatmul.mubr.f32.gmra.mrb[0].mxu0 %v283
    %v285 = vpop.f32.mrb[0].mxu0
    %v286 = vadd.f32 0.0, %v285
    %v287 = vpop.f32.mrb[0].mxu0
    %288 = vmatprep.mubr.f32.mxu0 0.0
    %v289 = vand.u32 %v52, 4294901760
    %v290 = vsub.f32 %v52, %v289
    %v291 = vand.u32 %v290, 4294901760
    %v292 = vsub.f32 %v290, %v291
    %v293 = vand.u32 %v292, 4294901760
    %294 = vmatmul.mubr.f32.gmra.mrb[0].mxu0 %v293
    %v295 = vpop.f32.mrb[0].mxu0
    %v296 = vadd.f32 0.0, %v295
    %v297 = vpop.f32.mrb[0].mxu0
    %298 = vmatprep.mubr.f32.mxu0 0.0
    %v299 = vand.u32 %v53, 4294901760
    %v300 = vsub.f32 %v53, %v299
    %v301 = vand.u32 %v300, 4294901760
    %v302 = vsub.f32 %v300, %v301
    %v303 = vand.u32 %v302, 4294901760
    %304 = vmatmul.mubr.f32.gmra.mrb[0].mxu0 %v303
    %v305 = vpop.f32.mrb[0].mxu0
    %v306 = vadd.f32 0.0, %v305
    %v307 = vpop.f32.mrb[0].mxu0
    %308 = vmatprep.mubr.f32.mxu0 0.0
    %v309 = vand.u32 %v54, 4294901760
    %v310 = vsub.f32 %v54, %v309
    %v311 = vand.u32 %v310, 4294901760
    %v312 = vsub.f32 %v310, %v311
    %v313 = vand.u32 %v312, 4294901760
    %314 = vmatmul.mubr.f32.gmra.mrb[0].mxu0 %v313
    %v315 = vpop.f32.mrb[0].mxu0
    %v316 = vadd.f32 0.0, %v315
    %v317 = vpop.f32.mrb[0].mxu0
    %318 = vmatprep.mubr.f32.mxu0 0.0
    %v319 = vand.u32 %v55, 4294901760
    %v320 = vsub.f32 %v55, %v319
    %v321 = vand.u32 %v320, 4294901760
    %v322 = vsub.f32 %v320, %v321
    %v323 = vand.u32 %v322, 4294901760
    %324 = vmatmul.mubr.f32.gmra.mrb[0].mxu0 %v323
    %v325 = vpop.f32.mrb[0].mxu0
    %v326 = vadd.f32 0.0, %v325
    %v327 = vpop.f32.mrb[0].mxu0
    %328 = vmatprep.mubr.f32.mxu0 0.0
    %v329 = vand.u32 %v56, 4294901760
    %v330 = vsub.f32 %v56, %v329
    %v331 = vand.u32 %v330, 4294901760
    %v332 = vsub.f32 %v330, %v331
    %v333 = vand.u32 %v332, 4294901760
    %334 = vmatmul.mubr.f32.gmra.mrb[0].mxu0 %v333
    %v335 = vpop.f32.mrb[0].mxu0
    %v336 = vadd.f32 0.0, %v335
    %v337 = vpop.f32.mrb[0].mxu0
    %338 = vmatprep.mubr.f32.mxu0 0.0
    %v339 = vand.u32 %v57, 4294901760
    %v340 = vsub.f32 %v57, %v339
    %v341 = vand.u32 %v340, 4294901760
    %v342 = vsub.f32 %v340, %v341
    %v343 = vand.u32 %v342, 4294901760
    %344 = vmatmul.mubr.f32.gmra.mrb[0].mxu0 %v343
    %v345 = vpop.f32.mrb[0].mxu0
    %v346 = vadd.f32 0.0, %v345
    %v347 = vpop.f32.mrb[0].mxu0
    %348 = vmatprep.mubr.f32.mxu0 0.0
    %v349 = vand.u32 %v58, 4294901760
    %v350 = vsub.f32 %v58, %v349
    %v351 = vand.u32 %v350, 4294901760
    %v352 = vsub.f32 %v350, %v351
    %v353 = vand.u32 %v352, 4294901760
    %354 = vmatmul.mubr.f32.gmra.mrb[0].mxu0 %v353
    %v355 = vpop.f32.mrb[0].mxu0
    %v356 = vadd.f32 0.0, %v355
    %v357 = vpop.f32.mrb[0].mxu0
    %358 = vmatprep.mubr.f32.mxu0 0.0
    %v359 = vand.u32 %v59, 4294901760
    %v360 = vsub.f32 %v59, %v359
    %v361 = vand.u32 %v360, 4294901760
    %v362 = vsub.f32 %v360, %v361
    %v363 = vand.u32 %v362, 4294901760
    %364 = vmatmul.mubr.f32.gmra.mrb[0].mxu0 %v363
    %v365 = vpop.f32.mrb[0].mxu0
    %v366 = vadd.f32 0.0, %v365
    %v367 = vpop.f32.mrb[0].mxu0
    %368 = vmatprep.mubr.f32.mxu0 0.0
    %v369 = vand.u32 %v60, 4294901760
    %v370 = vsub.f32 %v60, %v369
    %v371 = vand.u32 %v370, 4294901760
    %v372 = vsub.f32 %v370, %v371
    %v373 = vand.u32 %v372, 4294901760
    %374 = vmatmul.mubr.f32.gmra.mrb[0].mxu0 %v373
    %v375 = vpop.f32.mrb[0].mxu0
    %v376 = vadd.f32 0.0, %v375
    %v377 = vpop.f32.mrb[0].mxu0
    %378 = vmatprep.mubr.f32.mxu0 0.0
    %v379 = vand.u32 %v61, 4294901760
    %v380 = vsub.f32 %v61, %v379
    %v381 = vand.u32 %v380, 4294901760
    %v382 = vsub.f32 %v380, %v381
    %v383 = vand.u32 %v382, 4294901760
    %384 = vmatmul.mubr.f32.gmra.mrb[0].mxu0 %v383
    %v385 = vpop.f32.mrb[0].mxu0
    %v386 = vadd.f32 0.0, %v385
    %v387 = vpop.f32.mrb[0].mxu0
    %388 = vmatprep.mubr.f32.mxu0 0.0
    %v389 = vand.u32 %v62, 4294901760
    %v390 = vsub.f32 %v62, %v389
    %v391 = vand.u32 %v390, 4294901760
    %v392 = vsub.f32 %v390, %v391
    %v393 = vand.u32 %v392, 4294901760
    %394 = vmatmul.mubr.f32.gmra.mrb[0].mxu0 %v393
    %v395 = vpop.f32.mrb[0].mxu0
    %v396 = vadd.f32 0.0, %v395
    %v397 = vpop.f32.mrb[0].mxu0
    %398 = vmatprep.mubr.f32.mxu0 0.0
    %v399 = vand.u32 %v63, 4294901760
    %v400 = vsub.f32 %v63, %v399
    %v401 = vand.u32 %v400, 4294901760
    %v402 = vsub.f32 %v400, %v401
    %v403 = vand.u32 %v402, 4294901760
    %404 = vmatmul.mubr.f32.gmra.mrb[0].mxu0 %v403
    %v405 = vpop.f32.mrb[0].mxu0
    %v406 = vadd.f32 0.0, %v405
    %v407 = vpop.f32.mrb[0].mxu0
    %408 = vmatprep.mubr.f32.mxu0 0.0
    %v409 = vand.u32 %v64, 4294901760
    %v410 = vsub.f32 %v64, %v409
    %v411 = vand.u32 %v410, 4294901760
    %v412 = vsub.f32 %v410, %v411
    %v413 = vand.u32 %v412, 4294901760
    %414 = vmatmul.mubr.f32.gmra.mrb[0].mxu0 %v413
    %v415 = vpop.f32.mrb[0].mxu0
    %v416 = vadd.f32 0.0, %v415
    %v417 = vpop.f32.mrb[0].mxu0
    %418 = vmatprep.mubr.f32.mxu0 0.0
    %v419 = vand.u32 %v65, 4294901760
    %v420 = vsub.f32 %v65, %v419
    %v421 = vand.u32 %v420, 4294901760
    %v422 = vsub.f32 %v420, %v421
    %v423 = vand.u32 %v422, 4294901760
    %424 = vmatmul.mubr.f32.gmra.mrb[0].mxu0 %v423
    %v425 = vpop.f32.mrb[0].mxu0
    %v426 = vadd.f32 0.0, %v425
    %v427 = vpop.f32.mrb[0].mxu0
    %428 = vmatprep.mubr.f32.mxu0 0.0
    %v429 = vand.u32 %v66, 4294901760
    %v430 = vsub.f32 %v66, %v429
    %v431 = vand.u32 %v430, 4294901760
    %v432 = vsub.f32 %v430, %v431
    %v433 = vand.u32 %v432, 4294901760
    %434 = vmatmul.mubr.f32.gmra.mrb[0].mxu0 %v433
    %v435 = vpop.f32.mrb[0].mxu0
    %v436 = vadd.f32 0.0, %v435
    %v437 = vpop.f32.mrb[0].mxu0
    %438 = vmatprep.mubr.f32.mxu0 0.0
    %v439 = vand.u32 %v67, 4294901760
    %v440 = vsub.f32 %v67, %v439
    %v441 = vand.u32 %v440, 4294901760
    %v442 = vsub.f32 %v440, %v441
    %v443 = vand.u32 %v442, 4294901760
    %444 = vmatmul.mubr.f32.gmra.mrb[0].mxu0 %v443
    %v445 = vpop.f32.mrb[0].mxu0
    %v446 = vadd.f32 0.0, %v445
    %v447 = vpop.f32.mrb[0].mxu0
    %448 = vmatprep.mubr.f32.mxu0 0.0
    %v449 = vand.u32 %v68, 4294901760
    %v450 = vsub.f32 %v68, %v449
    %v451 = vand.u32 %v450, 4294901760
    %v452 = vsub.f32 %v450, %v451
    %v453 = vand.u32 %v452, 4294901760
    %454 = vmatmul.mubr.f32.gmra.mrb[0].mxu0 %v453
    %v455 = vpop.f32.mrb[0].mxu0
    %v456 = vadd.f32 0.0, %v455
    %v457 = vpop.f32.mrb[0].mxu0
    %458 = vmatprep.mubr.f32.mxu0 0.0
    %v459 = vand.u32 %v69, 4294901760
    %v460 = vsub.f32 %v69, %v459
    %v461 = vand.u32 %v460, 4294901760
    %v462 = vsub.f32 %v460, %v461
    %v463 = vand.u32 %v462, 4294901760
    %464 = vmatmul.mubr.f32.gmra.mrb[0].mxu0 %v463
    %v465 = vpop.f32.mrb[0].mxu0
    %v466 = vadd.f32 0.0, %v465
    %v467 = vpop.f32.mrb[0].mxu0
    %468 = vmatprep.mubr.f32.mxu0 0.0
    %v469 = vand.u32 %v70, 4294901760
    %v470 = vsub.f32 %v70, %v469
    %v471 = vand.u32 %v470, 4294901760
    %v472 = vsub.f32 %v470, %v471
    %v473 = vand.u32 %v472, 4294901760
    %474 = vmatmul.mubr.f32.gmra.mrb[0].mxu0 %v473
    %v475 = vpop.f32.mrb[0].mxu0
    %v476 = vadd.f32 0.0, %v475
    %v477 = vpop.f32.mrb[0].mxu0
    %478 = vmatprep.mubr.f32.mxu0 0.0
    %v479 = vand.u32 %v71, 4294901760
    %v480 = vsub.f32 %v71, %v479
    %v481 = vand.u32 %v480, 4294901760
    %v482 = vsub.f32 %v480, %v481
    %v483 = vand.u32 %v482, 4294901760
    %484 = vmatmul.mubr.f32.gmra.mrb[0].mxu0 %v483
    %v485 = vpop.f32.mrb[0].mxu0
    %v486 = vadd.f32 0.0, %v485
    %v487 = vpop.f32.mrb[0].mxu0
    %488 = vdwg.mxu0
    %489 = vmatprep.subr.mxu0 0.0
    %v490 = vand.u32 %v72, 4294901760
    %v491 = vsub.f32 %v72, %v490
    %v492 = vand.u32 %v491, 4294901760
    %v493 = vsub.f32 %v491, %v492
    %v494 = vand.u32 %v493, 4294901760
    %495 = vmatpush1.msra.mxu0 %v494
    %496 = vmatprep.subr.mxu0 0.0
    %v497 = vand.u32 %v73, 4294901760
    %v498 = vsub.f32 %v73, %v497
    %v499 = vand.u32 %v498, 4294901760
    %v500 = vsub.f32 %v498, %v499
    %v501 = vand.u32 %v500, 4294901760
    %502 = vmatpush1.msra.mxu0 %v501
    %503 = vmatprep.subr.mxu0 0.0
    %v504 = vand.u32 %v74, 4294901760
    %v505 = vsub.f32 %v74, %v504
    %v506 = vand.u32 %v505, 4294901760
    %v507 = vsub.f32 %v505, %v506
    %v508 = vand.u32 %v507, 4294901760
    %509 = vmatpush1.msra.mxu0 %v508
    %510 = vmatprep.subr.mxu0 0.0
    %v511 = vand.u32 %v75, 4294901760
    %v512 = vsub.f32 %v75, %v511
    %v513 = vand.u32 %v512, 4294901760
    %v514 = vsub.f32 %v512, %v513
    %v515 = vand.u32 %v514, 4294901760
    %516 = vmatpush1.msra.mxu0 %v515
    %517 = vmatprep.subr.mxu0 0.0
    %v518 = vand.u32 %v76, 4294901760
    %v519 = vsub.f32 %v76, %v518
    %v520 = vand.u32 %v519, 4294901760
    %v521 = vsub.f32 %v519, %v520
    %v522 = vand.u32 %v521, 4294901760
    %523 = vmatpush1.msra.mxu0 %v522
    %524 = vmatprep.subr.mxu0 0.0
    %v525 = vand.u32 %v77, 4294901760
    %v526 = vsub.f32 %v77, %v525
    %v527 = vand.u32 %v526, 4294901760
    %v528 = vsub.f32 %v526, %v527
    %v529 = vand.u32 %v528, 4294901760
    %530 = vmatpush1.msra.mxu0 %v529
    %531 = vmatprep.subr.mxu0 0.0
    %v532 = vand.u32 %v78, 4294901760
    %v533 = vsub.f32 %v78, %v532
    %v534 = vand.u32 %v533, 4294901760
    %v535 = vsub.f32 %v533, %v534
    %v536 = vand.u32 %v535, 4294901760
    %537 = vmatpush1.msra.mxu0 %v536
    %538 = vmatprep.subr.mxu0 0.0
    %v539 = vand.u32 %v79, 4294901760
    %v540 = vsub.f32 %v79, %v539
    %v541 = vand.u32 %v540, 4294901760
    %v542 = vsub.f32 %v540, %v541
    %v543 = vand.u32 %v542, 4294901760
    %544 = vmatpush1.msra.mxu0 %v543
    %545 = vmatprep.subr.mxu0 0.0
    %v546 = vand.u32 %v80, 4294901760
    %v547 = vsub.f32 %v80, %v546
    %v548 = vand.u32 %v547, 4294901760
    %v549 = vsub.f32 %v547, %v548
    %v550 = vand.u32 %v549, 4294901760
    %551 = vmatpush1.msra.mxu0 %v550
    %552 = vmatprep.subr.mxu0 0.0
    %v553 = vand.u32 %v81, 4294901760
    %v554 = vsub.f32 %v81, %v553
    %v555 = vand.u32 %v554, 4294901760
    %v556 = vsub.f32 %v554, %v555
    %v557 = vand.u32 %v556, 4294901760
    %558 = vmatpush1.msra.mxu0 %v557
    %559 = vmatprep.subr.mxu0 0.0
    %v560 = vand.u32 %v82, 4294901760
    %v561 = vsub.f32 %v82, %v560
    %v562 = vand.u32 %v561, 4294901760
    %v563 = vsub.f32 %v561, %v562
    %v564 = vand.u32 %v563, 4294901760
    %565 = vmatpush1.msra.mxu0 %v564
    %566 = vmatprep.subr.mxu0 0.0
    %v567 = vand.u32 %v83, 4294901760
    %v568 = vsub.f32 %v83, %v567
    %v569 = vand.u32 %v568, 4294901760
    %v570 = vsub.f32 %v568, %v569
    %v571 = vand.u32 %v570, 4294901760
    %572 = vmatpush1.msra.mxu0 %v571
    %573 = vmatprep.subr.mxu0 0.0
    %v574 = vand.u32 %v84, 4294901760
    %v575 = vsub.f32 %v84, %v574
    %v576 = vand.u32 %v575, 4294901760
    %v577 = vsub.f32 %v575, %v576
    %v578 = vand.u32 %v577, 4294901760
    %579 = vmatpush1.msra.mxu0 %v578
    %580 = vmatprep.subr.mxu0 0.0
    %v581 = vand.u32 %v85, 4294901760
    %v582 = vsub.f32 %v85, %v581
    %v583 = vand.u32 %v582, 4294901760
    %v584 = vsub.f32 %v582, %v583
    %v585 = vand.u32 %v584, 4294901760
    %586 = vmatpush1.msra.mxu0 %v585
    %587 = vmatprep.subr.mxu0 0.0
    %v588 = vand.u32 %v86, 4294901760
    %v589 = vsub.f32 %v86, %v588
    %v590 = vand.u32 %v589, 4294901760
    %v591 = vsub.f32 %v589, %v590
    %v592 = vand.u32 %v591, 4294901760
    %593 = vmatpush1.msra.mxu0 %v592
    %594 = vmatprep.subr.mxu0 0.0
    %v595 = vand.u32 %v87, 4294901760
    %v596 = vsub.f32 %v87, %v595
    %v597 = vand.u32 %v596, 4294901760
    %v598 = vsub.f32 %v596, %v597
    %v599 = vand.u32 %v598, 4294901760
    %600 = vmatpush1.msra.mxu0 %v599
    %601 = vmatprep.subr.mxu0 0.0
    %602 = vmatpush1.msra.mxu0 0.0
    %603 = vmatprep.subr.mxu0 0.0
    %604 = vmatpush1.msra.mxu0 0.0
    %605 = vmatprep.subr.mxu0 0.0
    %606 = vmatpush1.msra.mxu0 0.0
    %607 = vmatprep.subr.mxu0 0.0
    %608 = vmatpush1.msra.mxu0 0.0
    %609 = vmatprep.subr.mxu0 0.0
    %610 = vmatpush1.msra.mxu0 0.0
    %611 = vmatprep.subr.mxu0 0.0
    %612 = vmatpush1.msra.mxu0 0.0
    %613 = vmatprep.subr.mxu0 0.0
    %614 = vmatpush1.msra.mxu0 0.0
    %615 = vmatprep.subr.mxu0 0.0
    %616 = vmatpush1.msra.mxu0 0.0
    %617 = vmatprep.subr.mxu0 0.0
    %618 = vmatpush1.msra.mxu0 0.0
    %619 = vmatprep.subr.mxu0 0.0
    %620 = vmatpush1.msra.mxu0 0.0
    %621 = vmatprep.subr.mxu0 0.0
    %622 = vmatpush1.msra.mxu0 0.0
    %623 = vmatprep.subr.mxu0 0.0
    %624 = vmatpush1.msra.mxu0 0.0
    %625 = vmatprep.subr.mxu0 0.0
    %626 = vmatpush1.msra.mxu0 0.0
    %627 = vmatprep.subr.mxu0 0.0
    %628 = vmatpush1.msra.mxu0 0.0
    %629 = vmatprep.subr.mxu0 0.0
    %630 = vmatpush1.msra.mxu0 0.0
    %631 = vmatprep.subr.mxu0 0.0
    %632 = vmatpush1.msra.mxu0 0.0
    %633 = vmatprep.mubr.f32.mxu0 0.0
    %v634 = vand.u32 %v40, 4294901760
    %635 = vmatmul.mubr.f32.gmra.mrb[0].mxu0 %v634
    %v636 = vpop.f32.mrb[0].mxu0
    %v637 = vadd.f32 %v176, %v636
    %v638 = vpop.f32.mrb[0].mxu0
    %639 = vmatprep.mubr.f32.mxu0 0.0
    %v640 = vand.u32 %v41, 4294901760
    %641 = vmatmul.mubr.f32.gmra.mrb[0].mxu0 %v640
    %v642 = vpop.f32.mrb[0].mxu0
    %v643 = vadd.f32 %v186, %v642
    %v644 = vpop.f32.mrb[0].mxu0
    %645 = vmatprep.mubr.f32.mxu0 0.0
    %v646 = vand.u32 %v42, 4294901760
    %647 = vmatmul.mubr.f32.gmra.mrb[0].mxu0 %v646
    %v648 = vpop.f32.mrb[0].mxu0
    %v649 = vadd.f32 %v196, %v648
    %v650 = vpop.f32.mrb[0].mxu0
    %651 = vmatprep.mubr.f32.mxu0 0.0
    %v652 = vand.u32 %v43, 4294901760
    %653 = vmatmul.mubr.f32.gmra.mrb[0].mxu0 %v652
    %v654 = vpop.f32.mrb[0].mxu0
    %v655 = vadd.f32 %v206, %v654
    %v656 = vpop.f32.mrb[0].mxu0
    %657 = vmatprep.mubr.f32.mxu0 0.0
    %v658 = vand.u32 %v44, 4294901760
    %659 = vmatmul.mubr.f32.gmra.mrb[0].mxu0 %v658
    %v660 = vpop.f32.mrb[0].mxu0
    %v661 = vadd.f32 %v216, %v660
    %v662 = vpop.f32.mrb[0].mxu0
    %663 = vmatprep.mubr.f32.mxu0 0.0
    %v664 = vand.u32 %v45, 4294901760
    %665 = vmatmul.mubr.f32.gmra.mrb[0].mxu0 %v664
    %v666 = vpop.f32.mrb[0].mxu0
    %v667 = vadd.f32 %v226, %v666
    %v668 = vpop.f32.mrb[0].mxu0
    %669 = vmatprep.mubr.f32.mxu0 0.0
    %v670 = vand.u32 %v46, 4294901760
    %671 = vmatmul.mubr.f32.gmra.mrb[0].mxu0 %v670
    %v672 = vpop.f32.mrb[0].mxu0
    %v673 = vadd.f32 %v236, %v672
    %v674 = vpop.f32.mrb[0].mxu0
    %675 = vmatprep.mubr.f32.mxu0 0.0
    %v676 = vand.u32 %v47, 4294901760
    %677 = vmatmul.mubr.f32.gmra.mrb[0].mxu0 %v676
    %v678 = vpop.f32.mrb[0].mxu0
    %v679 = vadd.f32 %v246, %v678
    %v680 = vpop.f32.mrb[0].mxu0
    %681 = vmatprep.mubr.f32.mxu0 0.0
    %v682 = vand.u32 %v48, 4294901760
    %683 = vmatmul.mubr.f32.gmra.mrb[0].mxu0 %v682
    %v684 = vpop.f32.mrb[0].mxu0
    %v685 = vadd.f32 %v256, %v684
    %v686 = vpop.f32.mrb[0].mxu0
    %687 = vmatprep.mubr.f32.mxu0 0.0
    %v688 = vand.u32 %v49, 4294901760
    %689 = vmatmul.mubr.f32.gmra.mrb[0].mxu0 %v688
    %v690 = vpop.f32.mrb[0].mxu0
    %v691 = vadd.f32 %v266, %v690
    %v692 = vpop.f32.mrb[0].mxu0
    %693 = vmatprep.mubr.f32.mxu0 0.0
    %v694 = vand.u32 %v50, 4294901760
    %695 = vmatmul.mubr.f32.gmra.mrb[0].mxu0 %v694
    %v696 = vpop.f32.mrb[0].mxu0
    %v697 = vadd.f32 %v276, %v696
    %v698 = vpop.f32.mrb[0].mxu0
    %699 = vmatprep.mubr.f32.mxu0 0.0
    %v700 = vand.u32 %v51, 4294901760
    %701 = vmatmul.mubr.f32.gmra.mrb[0].mxu0 %v700
    %v702 = vpop.f32.mrb[0].mxu0
    %v703 = vadd.f32 %v286, %v702
    %v704 = vpop.f32.mrb[0].mxu0
    %705 = vmatprep.mubr.f32.mxu0 0.0
    %v706 = vand.u32 %v52, 4294901760
    %707 = vmatmul.mubr.f32.gmra.mrb[0].mxu0 %v706
    %v708 = vpop.f32.mrb[0].mxu0
    %v709 = vadd.f32 %v296, %v708
    %v710 = vpop.f32.mrb[0].mxu0
    %711 = vmatprep.mubr.f32.mxu0 0.0
    %v712 = vand.u32 %v53, 4294901760
    %713 = vmatmul.mubr.f32.gmra.mrb[0].mxu0 %v712
    %v714 = vpop.f32.mrb[0].mxu0
    %v715 = vadd.f32 %v306, %v714
    %v716 = vpop.f32.mrb[0].mxu0
    %717 = vmatprep.mubr.f32.mxu0 0.0
    %v718 = vand.u32 %v54, 4294901760
    %719 = vmatmul.mubr.f32.gmra.mrb[0].mxu0 %v718
    %v720 = vpop.f32.mrb[0].mxu0
    %v721 = vadd.f32 %v316, %v720
    %v722 = vpop.f32.mrb[0].mxu0
    %723 = vmatprep.mubr.f32.mxu0 0.0
    %v724 = vand.u32 %v55, 4294901760
    %725 = vmatmul.mubr.f32.gmra.mrb[0].mxu0 %v724
    %v726 = vpop.f32.mrb[0].mxu0
    %v727 = vadd.f32 %v326, %v726
    %v728 = vpop.f32.mrb[0].mxu0
    %729 = vmatprep.mubr.f32.mxu0 0.0
    %v730 = vand.u32 %v56, 4294901760
    %731 = vmatmul.mubr.f32.gmra.mrb[0].mxu0 %v730
    %v732 = vpop.f32.mrb[0].mxu0
    %v733 = vadd.f32 %v336, %v732
    %v734 = vpop.f32.mrb[0].mxu0
    %735 = vmatprep.mubr.f32.mxu0 0.0
    %v736 = vand.u32 %v57, 4294901760
    %737 = vmatmul.mubr.f32.gmra.mrb[0].mxu0 %v736
    %v738 = vpop.f32.mrb[0].mxu0
    %v739 = vadd.f32 %v346, %v738
    %v740 = vpop.f32.mrb[0].mxu0
    %741 = vmatprep.mubr.f32.mxu0 0.0
    %v742 = vand.u32 %v58, 4294901760
    %743 = vmatmul.mubr.f32.gmra.mrb[0].mxu0 %v742
    %v744 = vpop.f32.mrb[0].mxu0
    %v745 = vadd.f32 %v356, %v744
    %v746 = vpop.f32.mrb[0].mxu0
    %747 = vmatprep.mubr.f32.mxu0 0.0
    %v748 = vand.u32 %v59, 4294901760
    %749 = vmatmul.mubr.f32.gmra.mrb[0].mxu0 %v748
    %v750 = vpop.f32.mrb[0].mxu0
    %v751 = vadd.f32 %v366, %v750
    %v752 = vpop.f32.mrb[0].mxu0
    %753 = vmatprep.mubr.f32.mxu0 0.0
    %v754 = vand.u32 %v60, 4294901760
    %755 = vmatmul.mubr.f32.gmra.mrb[0].mxu0 %v754
    %v756 = vpop.f32.mrb[0].mxu0
    %v757 = vadd.f32 %v376, %v756
    %v758 = vpop.f32.mrb[0].mxu0
    %759 = vmatprep.mubr.f32.mxu0 0.0
    %v760 = vand.u32 %v61, 4294901760
    %761 = vmatmul.mubr.f32.gmra.mrb[0].mxu0 %v760
    %v762 = vpop.f32.mrb[0].mxu0
    %v763 = vadd.f32 %v386, %v762
    %v764 = vpop.f32.mrb[0].mxu0
    %765 = vmatprep.mubr.f32.mxu0 0.0
    %v766 = vand.u32 %v62, 4294901760
    %767 = vmatmul.mubr.f32.gmra.mrb[0].mxu0 %v766
    %v768 = vpop.f32.mrb[0].mxu0
    %v769 = vadd.f32 %v396, %v768
    %v770 = vpop.f32.mrb[0].mxu0
    %771 = vmatprep.mubr.f32.mxu0 0.0
    %v772 = vand.u32 %v63, 4294901760
    %773 = vmatmul.mubr.f32.gmra.mrb[0].mxu0 %v772
    %v774 = vpop.f32.mrb[0].mxu0
    %v775 = vadd.f32 %v406, %v774
    %v776 = vpop.f32.mrb[0].mxu0
    %777 = vmatprep.mubr.f32.mxu0 0.0
    %v778 = vand.u32 %v64, 4294901760
    %779 = vmatmul.mubr.f32.gmra.mrb[0].mxu0 %v778
    %v780 = vpop.f32.mrb[0].mxu0
    %v781 = vadd.f32 %v416, %v780
    %v782 = vpop.f32.mrb[0].mxu0
    %783 = vmatprep.mubr.f32.mxu0 0.0
    %v784 = vand.u32 %v65, 4294901760
    %785 = vmatmul.mubr.f32.gmra.mrb[0].mxu0 %v784
    %v786 = vpop.f32.mrb[0].mxu0
    %v787 = vadd.f32 %v426, %v786
    %v788 = vpop.f32.mrb[0].mxu0
    %789 = vmatprep.mubr.f32.mxu0 0.0
    %v790 = vand.u32 %v66, 4294901760
    %791 = vmatmul.mubr.f32.gmra.mrb[0].mxu0 %v790
    %v792 = vpop.f32.mrb[0].mxu0
    %v793 = vadd.f32 %v436, %v792
    %v794 = vpop.f32.mrb[0].mxu0
    %795 = vmatprep.mubr.f32.mxu0 0.0
    %v796 = vand.u32 %v67, 4294901760
    %797 = vmatmul.mubr.f32.gmra.mrb[0].mxu0 %v796
    %v798 = vpop.f32.mrb[0].mxu0
    %v799 = vadd.f32 %v446, %v798
    %v800 = vpop.f32.mrb[0].mxu0
    %801 = vmatprep.mubr.f32.mxu0 0.0
    %v802 = vand.u32 %v68, 4294901760
    %803 = vmatmul.mubr.f32.gmra.mrb[0].mxu0 %v802
    %v804 = vpop.f32.mrb[0].mxu0
    %v805 = vadd.f32 %v456, %v804
    %v806 = vpop.f32.mrb[0].mxu0
    %807 = vmatprep.mubr.f32.mxu0 0.0
    %v808 = vand.u32 %v69, 4294901760
    %809 = vmatmul.mubr.f32.gmra.mrb[0].mxu0 %v808
    %v810 = vpop.f32.mrb[0].mxu0
    %v811 = vadd.f32 %v466, %v810
    %v812 = vpop.f32.mrb[0].mxu0
    %813 = vmatprep.mubr.f32.mxu0 0.0
    %v814 = vand.u32 %v70, 4294901760
    %815 = vmatmul.mubr.f32.gmra.mrb[0].mxu0 %v814
    %v816 = vpop.f32.mrb[0].mxu0
    %v817 = vadd.f32 %v476, %v816
    %v818 = vpop.f32.mrb[0].mxu0
    %819 = vmatprep.mubr.f32.mxu0 0.0
    %v820 = vand.u32 %v71, 4294901760
    %821 = vmatmul.mubr.f32.gmra.mrb[0].mxu0 %v820
    %v822 = vpop.f32.mrb[0].mxu0
    %v823 = vadd.f32 %v486, %v822
    %v824 = vpop.f32.mrb[0].mxu0
    %825 = vdwg.mxu0
    %826 = vmatprep.subr.mxu0 0.0
    %v827 = vand.u32 %v72, 4294901760
    %v828 = vsub.f32 %v72, %v827
    %829 = vmatpush1.msra.mxu0 %v828
    %830 = vmatprep.subr.mxu0 0.0
    %v831 = vand.u32 %v73, 4294901760
    %v832 = vsub.f32 %v73, %v831
    %833 = vmatpush1.msra.mxu0 %v832
    %834 = vmatprep.subr.mxu0 0.0
    %v835 = vand.u32 %v74, 4294901760
    %v836 = vsub.f32 %v74, %v835
    %837 = vmatpush1.msra.mxu0 %v836
    %838 = vmatprep.subr.mxu0 0.0
    %v839 = vand.u32 %v75, 4294901760
    %v840 = vsub.f32 %v75, %v839
    %841 = vmatpush1.msra.mxu0 %v840
    %842 = vmatprep.subr.mxu0 0.0
    %v843 = vand.u32 %v76, 4294901760
    %v844 = vsub.f32 %v76, %v843
    %845 = vmatpush1.msra.mxu0 %v844
    %846 = vmatprep.subr.mxu0 0.0
    %v847 = vand.u32 %v77, 4294901760
    %v848 = vsub.f32 %v77, %v847
    %849 = vmatpush1.msra.mxu0 %v848
    %850 = vmatprep.subr.mxu0 0.0
    %v851 = vand.u32 %v78, 4294901760
    %v852 = vsub.f32 %v78, %v851
    %853 = vmatpush1.msra.mxu0 %v852
    %854 = vmatprep.subr.mxu0 0.0
    %v855 = vand.u32 %v79, 4294901760
    %v856 = vsub.f32 %v79, %v855
    %857 = vmatpush1.msra.mxu0 %v856
    %858 = vmatprep.subr.mxu0 0.0
    %v859 = vand.u32 %v80, 4294901760
    %v860 = vsub.f32 %v80, %v859
    %861 = vmatpush1.msra.mxu0 %v860
    %862 = vmatprep.subr.mxu0 0.0
    %v863 = vand.u32 %v81, 4294901760
    %v864 = vsub.f32 %v81, %v863
    %865 = vmatpush1.msra.mxu0 %v864
    %866 = vmatprep.subr.mxu0 0.0
    %v867 = vand.u32 %v82, 4294901760
    %v868 = vsub.f32 %v82, %v867
    %869 = vmatpush1.msra.mxu0 %v868
    %870 = vmatprep.subr.mxu0 0.0
    %v871 = vand.u32 %v83, 4294901760
    %v872 = vsub.f32 %v83, %v871
    %873 = vmatpush1.msra.mxu0 %v872
    %874 = vmatprep.subr.mxu0 0.0
    %v875 = vand.u32 %v84, 4294901760
    %v876 = vsub.f32 %v84, %v875
    %877 = vmatpush1.msra.mxu0 %v876
    %878 = vmatprep.subr.mxu0 0.0
    %v879 = vand.u32 %v85, 4294901760
    %v880 = vsub.f32 %v85, %v879
    %881 = vmatpush1.msra.mxu0 %v880
    %882 = vmatprep.subr.mxu0 0.0
    %v883 = vand.u32 %v86, 4294901760
    %v884 = vsub.f32 %v86, %v883
    %885 = vmatpush1.msra.mxu0 %v884
    %886 = vmatprep.subr.mxu0 0.0
    %v887 = vand.u32 %v87, 4294901760
    %v888 = vsub.f32 %v87, %v887
    %889 = vmatpush1.msra.mxu0 %v888
    %890 = vmatprep.subr.mxu0 0.0
    %891 = vmatpush1.msra.mxu0 0.0
    %892 = vmatprep.subr.mxu0 0.0
    %893 = vmatpush1.msra.mxu0 0.0
    %894 = vmatprep.subr.mxu0 0.0
    %895 = vmatpush1.msra.mxu0 0.0
    %896 = vmatprep.subr.mxu0 0.0
    %897 = vmatpush1.msra.mxu0 0.0
    %898 = vmatprep.subr.mxu0 0.0
    %899 = vmatpush1.msra.mxu0 0.0
    %900 = vmatprep.subr.mxu0 0.0
    %901 = vmatpush1.msra.mxu0 0.0
    %902 = vmatprep.subr.mxu0 0.0
    %903 = vmatpush1.msra.mxu0 0.0
    %904 = vmatprep.subr.mxu0 0.0
    %905 = vmatpush1.msra.mxu0 0.0
    %906 = vmatprep.subr.mxu0 0.0
    %907 = vmatpush1.msra.mxu0 0.0
    %908 = vmatprep.subr.mxu0 0.0
    %909 = vmatpush1.msra.mxu0 0.0
    %910 = vmatprep.subr.mxu0 0.0
    %911 = vmatpush1.msra.mxu0 0.0
    %912 = vmatprep.subr.mxu0 0.0
    %913 = vmatpush1.msra.mxu0 0.0
    %914 = vmatprep.subr.mxu0 0.0
    %915 = vmatpush1.msra.mxu0 0.0
    %916 = vmatprep.subr.mxu0 0.0
    %917 = vmatpush1.msra.mxu0 0.0
    %918 = vmatprep.subr.mxu0 0.0
    %919 = vmatpush1.msra.mxu0 0.0
    %920 = vmatprep.subr.mxu0 0.0
    %921 = vmatpush1.msra.mxu0 0.0
    %922 = vmatprep.mubr.f32.mxu0 0.0
    %v923 = vand.u32 %v40, 4294901760
    %v924 = vsub.f32 %v40, %v923
    %925 = vmatmul.mubr.f32.gmra.mrb[0].mxu0 %v924
    %v926 = vpop.f32.mrb[0].mxu0
    %v927 = vadd.f32 %v637, %v926
    %v928 = vpop.f32.mrb[0].mxu0
    %929 = vmatprep.mubr.f32.mxu0 0.0
    %v930 = vand.u32 %v41, 4294901760
    %v931 = vsub.f32 %v41, %v930
    %932 = vmatmul.mubr.f32.gmra.mrb[0].mxu0 %v931
    %v933 = vpop.f32.mrb[0].mxu0
    %v934 = vadd.f32 %v643, %v933
    %v935 = vpop.f32.mrb[0].mxu0
    %936 = vmatprep.mubr.f32.mxu0 0.0
    %v937 = vand.u32 %v42, 4294901760
    %v938 = vsub.f32 %v42, %v937
    %939 = vmatmul.mubr.f32.gmra.mrb[0].mxu0 %v938
    %v940 = vpop.f32.mrb[0].mxu0
    %v941 = vadd.f32 %v649, %v940
    %v942 = vpop.f32.mrb[0].mxu0
    %943 = vmatprep.mubr.f32.mxu0 0.0
    %v944 = vand.u32 %v43, 4294901760
    %v945 = vsub.f32 %v43, %v944
    %946 = vmatmul.mubr.f32.gmra.mrb[0].mxu0 %v945
    %v947 = vpop.f32.mrb[0].mxu0
    %v948 = vadd.f32 %v655, %v947
    %v949 = vpop.f32.mrb[0].mxu0
    %950 = vmatprep.mubr.f32.mxu0 0.0
    %v951 = vand.u32 %v44, 4294901760
    %v952 = vsub.f32 %v44, %v951
    %953 = vmatmul.mubr.f32.gmra.mrb[0].mxu0 %v952
    %v954 = vpop.f32.mrb[0].mxu0
    %v955 = vadd.f32 %v661, %v954
    %v956 = vpop.f32.mrb[0].mxu0
    %957 = vmatprep.mubr.f32.mxu0 0.0
    %v958 = vand.u32 %v45, 4294901760
    %v959 = vsub.f32 %v45, %v958
    %960 = vmatmul.mubr.f32.gmra.mrb[0].mxu0 %v959
    %v961 = vpop.f32.mrb[0].mxu0
    %v962 = vadd.f32 %v667, %v961
    %v963 = vpop.f32.mrb[0].mxu0
    %964 = vmatprep.mubr.f32.mxu0 0.0
    %v965 = vand.u32 %v46, 4294901760
    %v966 = vsub.f32 %v46, %v965
    %967 = vmatmul.mubr.f32.gmra.mrb[0].mxu0 %v966
    %v968 = vpop.f32.mrb[0].mxu0
    %v969 = vadd.f32 %v673, %v968
    %v970 = vpop.f32.mrb[0].mxu0
    %971 = vmatprep.mubr.f32.mxu0 0.0
    %v972 = vand.u32 %v47, 4294901760
    %v973 = vsub.f32 %v47, %v972
    %974 = vmatmul.mubr.f32.gmra.mrb[0].mxu0 %v973
    %v975 = vpop.f32.mrb[0].mxu0
    %v976 = vadd.f32 %v679, %v975
    %v977 = vpop.f32.mrb[0].mxu0
    %978 = vmatprep.mubr.f32.mxu0 0.0
    %v979 = vand.u32 %v48, 4294901760
    %v980 = vsub.f32 %v48, %v979
    %981 = vmatmul.mubr.f32.gmra.mrb[0].mxu0 %v980
    %v982 = vpop.f32.mrb[0].mxu0
    %v983 = vadd.f32 %v685, %v982
    %v984 = vpop.f32.mrb[0].mxu0
    %985 = vmatprep.mubr.f32.mxu0 0.0
    %v986 = vand.u32 %v49, 4294901760
    %v987 = vsub.f32 %v49, %v986
    %988 = vmatmul.mubr.f32.gmra.mrb[0].mxu0 %v987
    %v989 = vpop.f32.mrb[0].mxu0
    %v990 = vadd.f32 %v691, %v989
    %v991 = vpop.f32.mrb[0].mxu0
    %992 = vmatprep.mubr.f32.mxu0 0.0
    %v993 = vand.u32 %v50, 4294901760
    %v994 = vsub.f32 %v50, %v993
    %995 = vmatmul.mubr.f32.gmra.mrb[0].mxu0 %v994
    %v996 = vpop.f32.mrb[0].mxu0
    %v997 = vadd.f32 %v697, %v996
    %v998 = vpop.f32.mrb[0].mxu0
    %999 = vmatprep.mubr.f32.mxu0 0.0
    %v1000 = vand.u32 %v51, 4294901760
    %v1001 = vsub.f32 %v51, %v1000
    %1002 = vmatmul.mubr.f32.gmra.mrb[0].mxu0 %v1001
    %v1003 = vpop.f32.mrb[0].mxu0
    %v1004 = vadd.f32 %v703, %v1003
    %v1005 = vpop.f32.mrb[0].mxu0
    %1006 = vmatprep.mubr.f32.mxu0 0.0
    %v1007 = vand.u32 %v52, 4294901760
    %v1008 = vsub.f32 %v52, %v1007
    %1009 = vmatmul.mubr.f32.gmra.mrb[0].mxu0 %v1008
    %v1010 = vpop.f32.mrb[0].mxu0
    %v1011 = vadd.f32 %v709, %v1010
    %v1012 = vpop.f32.mrb[0].mxu0
    %1013 = vmatprep.mubr.f32.mxu0 0.0
    %v1014 = vand.u32 %v53, 4294901760
    %v1015 = vsub.f32 %v53, %v1014
    %1016 = vmatmul.mubr.f32.gmra.mrb[0].mxu0 %v1015
    %v1017 = vpop.f32.mrb[0].mxu0
    %v1018 = vadd.f32 %v715, %v1017
    %v1019 = vpop.f32.mrb[0].mxu0
    %1020 = vmatprep.mubr.f32.mxu0 0.0
    %v1021 = vand.u32 %v54, 4294901760
    %v1022 = vsub.f32 %v54, %v1021
    %1023 = vmatmul.mubr.f32.gmra.mrb[0].mxu0 %v1022
    %v1024 = vpop.f32.mrb[0].mxu0
    %v1025 = vadd.f32 %v721, %v1024
    %v1026 = vpop.f32.mrb[0].mxu0
    %1027 = vmatprep.mubr.f32.mxu0 0.0
    %v1028 = vand.u32 %v55, 4294901760
    %v1029 = vsub.f32 %v55, %v1028
    %1030 = vmatmul.mubr.f32.gmra.mrb[0].mxu0 %v1029
    %v1031 = vpop.f32.mrb[0].mxu0
    %v1032 = vadd.f32 %v727, %v1031
    %v1033 = vpop.f32.mrb[0].mxu0
    %1034 = vmatprep.mubr.f32.mxu0 0.0
    %v1035 = vand.u32 %v56, 4294901760
    %v1036 = vsub.f32 %v56, %v1035
    %1037 = vmatmul.mubr.f32.gmra.mrb[0].mxu0 %v1036
    %v1038 = vpop.f32.mrb[0].mxu0
    %v1039 = vadd.f32 %v733, %v1038
    %v1040 = vpop.f32.mrb[0].mxu0
    %1041 = vmatprep.mubr.f32.mxu0 0.0
    %v1042 = vand.u32 %v57, 4294901760
    %v1043 = vsub.f32 %v57, %v1042
    %1044 = vmatmul.mubr.f32.gmra.mrb[0].mxu0 %v1043
    %v1045 = vpop.f32.mrb[0].mxu0
    %v1046 = vadd.f32 %v739, %v1045
    %v1047 = vpop.f32.mrb[0].mxu0
    %1048 = vmatprep.mubr.f32.mxu0 0.0
    %v1049 = vand.u32 %v58, 4294901760
    %v1050 = vsub.f32 %v58, %v1049
    %1051 = vmatmul.mubr.f32.gmra.mrb[0].mxu0 %v1050
    %v1052 = vpop.f32.mrb[0].mxu0
    %v1053 = vadd.f32 %v745, %v1052
    %v1054 = vpop.f32.mrb[0].mxu0
    %1055 = vmatprep.mubr.f32.mxu0 0.0
    %v1056 = vand.u32 %v59, 4294901760
    %v1057 = vsub.f32 %v59, %v1056
    %1058 = vmatmul.mubr.f32.gmra.mrb[0].mxu0 %v1057
    %v1059 = vpop.f32.mrb[0].mxu0
    %v1060 = vadd.f32 %v751, %v1059
    %v1061 = vpop.f32.mrb[0].mxu0
    %1062 = vmatprep.mubr.f32.mxu0 0.0
    %v1063 = vand.u32 %v60, 4294901760
    %v1064 = vsub.f32 %v60, %v1063
    %1065 = vmatmul.mubr.f32.gmra.mrb[0].mxu0 %v1064
    %v1066 = vpop.f32.mrb[0].mxu0
    %v1067 = vadd.f32 %v757, %v1066
    %v1068 = vpop.f32.mrb[0].mxu0
    %1069 = vmatprep.mubr.f32.mxu0 0.0
    %v1070 = vand.u32 %v61, 4294901760
    %v1071 = vsub.f32 %v61, %v1070
    %1072 = vmatmul.mubr.f32.gmra.mrb[0].mxu0 %v1071
    %v1073 = vpop.f32.mrb[0].mxu0
    %v1074 = vadd.f32 %v763, %v1073
    %v1075 = vpop.f32.mrb[0].mxu0
    %1076 = vmatprep.mubr.f32.mxu0 0.0
    %v1077 = vand.u32 %v62, 4294901760
    %v1078 = vsub.f32 %v62, %v1077
    %1079 = vmatmul.mubr.f32.gmra.mrb[0].mxu0 %v1078
    %v1080 = vpop.f32.mrb[0].mxu0
    %v1081 = vadd.f32 %v769, %v1080
    %v1082 = vpop.f32.mrb[0].mxu0
    %1083 = vmatprep.mubr.f32.mxu0 0.0
    %v1084 = vand.u32 %v63, 4294901760
    %v1085 = vsub.f32 %v63, %v1084
    %1086 = vmatmul.mubr.f32.gmra.mrb[0].mxu0 %v1085
    %v1087 = vpop.f32.mrb[0].mxu0
    %v1088 = vadd.f32 %v775, %v1087
    %v1089 = vpop.f32.mrb[0].mxu0
    %1090 = vmatprep.mubr.f32.mxu0 0.0
    %v1091 = vand.u32 %v64, 4294901760
    %v1092 = vsub.f32 %v64, %v1091
    %1093 = vmatmul.mubr.f32.gmra.mrb[0].mxu0 %v1092
    %v1094 = vpop.f32.mrb[0].mxu0
    %v1095 = vadd.f32 %v781, %v1094
    %v1096 = vpop.f32.mrb[0].mxu0
    %1097 = vmatprep.mubr.f32.mxu0 0.0
    %v1098 = vand.u32 %v65, 4294901760
    %v1099 = vsub.f32 %v65, %v1098
    %1100 = vmatmul.mubr.f32.gmra.mrb[0].mxu0 %v1099
    %v1101 = vpop.f32.mrb[0].mxu0
    %v1102 = vadd.f32 %v787, %v1101
    %v1103 = vpop.f32.mrb[0].mxu0
    %1104 = vmatprep.mubr.f32.mxu0 0.0
    %v1105 = vand.u32 %v66, 4294901760
    %v1106 = vsub.f32 %v66, %v1105
    %1107 = vmatmul.mubr.f32.gmra.mrb[0].mxu0 %v1106
    %v1108 = vpop.f32.mrb[0].mxu0
    %v1109 = vadd.f32 %v793, %v1108
    %v1110 = vpop.f32.mrb[0].mxu0
    %1111 = vmatprep.mubr.f32.mxu0 0.0
    %v1112 = vand.u32 %v67, 4294901760
    %v1113 = vsub.f32 %v67, %v1112
    %1114 = vmatmul.mubr.f32.gmra.mrb[0].mxu0 %v1113
    %v1115 = vpop.f32.mrb[0].mxu0
    %v1116 = vadd.f32 %v799, %v1115
    %v1117 = vpop.f32.mrb[0].mxu0
    %1118 = vmatprep.mubr.f32.mxu0 0.0
    %v1119 = vand.u32 %v68, 4294901760
    %v1120 = vsub.f32 %v68, %v1119
    %1121 = vmatmul.mubr.f32.gmra.mrb[0].mxu0 %v1120
    %v1122 = vpop.f32.mrb[0].mxu0
    %v1123 = vadd.f32 %v805, %v1122
    %v1124 = vpop.f32.mrb[0].mxu0
    %1125 = vmatprep.mubr.f32.mxu0 0.0
    %v1126 = vand.u32 %v69, 4294901760
    %v1127 = vsub.f32 %v69, %v1126
    %1128 = vmatmul.mubr.f32.gmra.mrb[0].mxu0 %v1127
    %v1129 = vpop.f32.mrb[0].mxu0
    %v1130 = vadd.f32 %v811, %v1129
    %v1131 = vpop.f32.mrb[0].mxu0
    %1132 = vmatprep.mubr.f32.mxu0 0.0
    %v1133 = vand.u32 %v70, 4294901760
    %v1134 = vsub.f32 %v70, %v1133
    %1135 = vmatmul.mubr.f32.gmra.mrb[0].mxu0 %v1134
    %v1136 = vpop.f32.mrb[0].mxu0
    %v1137 = vadd.f32 %v817, %v1136
    %v1138 = vpop.f32.mrb[0].mxu0
    %1139 = vmatprep.mubr.f32.mxu0 0.0
    %v1140 = vand.u32 %v71, 4294901760
    %v1141 = vsub.f32 %v71, %v1140
    %1142 = vmatmul.mubr.f32.gmra.mrb[0].mxu0 %v1141
    %v1143 = vpop.f32.mrb[0].mxu0
    %v1144 = vadd.f32 %v823, %v1143
    %v1145 = vpop.f32.mrb[0].mxu0
    %1146 = vdwg.mxu0
    %1147 = vmatprep.subr.mxu0 0.0
    %v1148 = vand.u32 %v72, 4294901760
    %1149 = vmatpush1.msra.mxu0 %v1148
    %1150 = vmatprep.subr.mxu0 0.0
    %v1151 = vand.u32 %v73, 4294901760
    %1152 = vmatpush1.msra.mxu0 %v1151
    %1153 = vmatprep.subr.mxu0 0.0
    %v1154 = vand.u32 %v74, 4294901760
    %1155 = vmatpush1.msra.mxu0 %v1154
    %1156 = vmatprep.subr.mxu0 0.0
    %v1157 = vand.u32 %v75, 4294901760
    %1158 = vmatpush1.msra.mxu0 %v1157
    %1159 = vmatprep.subr.mxu0 0.0
    %v1160 = vand.u32 %v76, 4294901760
    %1161 = vmatpush1.msra.mxu0 %v1160
    %1162 = vmatprep.subr.mxu0 0.0
    %v1163 = vand.u32 %v77, 4294901760
    %1164 = vmatpush1.msra.mxu0 %v1163
    %1165 = vmatprep.subr.mxu0 0.0
    %v1166 = vand.u32 %v78, 4294901760
    %1167 = vmatpush1.msra.mxu0 %v1166
    %1168 = vmatprep.subr.mxu0 0.0
    %v1169 = vand.u32 %v79, 4294901760
    %1170 = vmatpush1.msra.mxu0 %v1169
    %1171 = vmatprep.subr.mxu0 0.0
    %v1172 = vand.u32 %v80, 4294901760
    %1173 = vmatpush1.msra.mxu0 %v1172
    %1174 = vmatprep.subr.mxu0 0.0
    %v1175 = vand.u32 %v81, 4294901760
    %1176 = vmatpush1.msra.mxu0 %v1175
    %1177 = vmatprep.subr.mxu0 0.0
    %v1178 = vand.u32 %v82, 4294901760
    %1179 = vmatpush1.msra.mxu0 %v1178
    %1180 = vmatprep.subr.mxu0 0.0
    %v1181 = vand.u32 %v83, 4294901760
    %1182 = vmatpush1.msra.mxu0 %v1181
    %1183 = vmatprep.subr.mxu0 0.0
    %v1184 = vand.u32 %v84, 4294901760
    %1185 = vmatpush1.msra.mxu0 %v1184
    %1186 = vmatprep.subr.mxu0 0.0
    %v1187 = vand.u32 %v85, 4294901760
    %1188 = vmatpush1.msra.mxu0 %v1187
    %1189 = vmatprep.subr.mxu0 0.0
    %v1190 = vand.u32 %v86, 4294901760
    %1191 = vmatpush1.msra.mxu0 %v1190
    %1192 = vmatprep.subr.mxu0 0.0
    %v1193 = vand.u32 %v87, 4294901760
    %1194 = vmatpush1.msra.mxu0 %v1193
    %1195 = vmatprep.subr.mxu0 0.0
    %1196 = vmatpush1.msra.mxu0 0.0
    %1197 = vmatprep.subr.mxu0 0.0
    %1198 = vmatpush1.msra.mxu0 0.0
    %1199 = vmatprep.subr.mxu0 0.0
    %1200 = vmatpush1.msra.mxu0 0.0
    %1201 = vmatprep.subr.mxu0 0.0
    %1202 = vmatpush1.msra.mxu0 0.0
    %1203 = vmatprep.subr.mxu0 0.0
    %1204 = vmatpush1.msra.mxu0 0.0
    %1205 = vmatprep.subr.mxu0 0.0
    %1206 = vmatpush1.msra.mxu0 0.0
    %1207 = vmatprep.subr.mxu0 0.0
    %1208 = vmatpush1.msra.mxu0 0.0
    %1209 = vmatprep.subr.mxu0 0.0
    %1210 = vmatpush1.msra.mxu0 0.0
    %1211 = vmatprep.subr.mxu0 0.0
    %1212 = vmatpush1.msra.mxu0 0.0
    %1213 = vmatprep.subr.mxu0 0.0
    %1214 = vmatpush1.msra.mxu0 0.0
    %1215 = vmatprep.subr.mxu0 0.0
    %1216 = vmatpush1.msra.mxu0 0.0
    %1217 = vmatprep.subr.mxu0 0.0
    %1218 = vmatpush1.msra.mxu0 0.0
    %1219 = vmatprep.subr.mxu0 0.0
    %1220 = vmatpush1.msra.mxu0 0.0
    %1221 = vmatprep.subr.mxu0 0.0
    %1222 = vmatpush1.msra.mxu0 0.0
    %1223 = vmatprep.subr.mxu0 0.0
    %1224 = vmatpush1.msra.mxu0 0.0
    %1225 = vmatprep.subr.mxu0 0.0
    %1226 = vmatpush1.msra.mxu0 0.0
    %1227 = vmatprep.mubr.f32.mxu0 0.0
    %v1228 = vand.u32 %v40, 4294901760
    %v1229 = vsub.f32 %v40, %v1228
    %v1230 = vand.u32 %v1229, 4294901760
    %1231 = vmatmul.mubr.f32.gmra.mrb[0].mxu0 %v1230
    %v1232 = vpop.f32.mrb[0].mxu0
    %v1233 = vadd.f32 %v927, %v1232
    %v1234 = vpop.f32.mrb[0].mxu0
    %1235 = vmatprep.mubr.f32.mxu0 0.0
    %v1236 = vand.u32 %v41, 4294901760
    %v1237 = vsub.f32 %v41, %v1236
    %v1238 = vand.u32 %v1237, 4294901760
    %1239 = vmatmul.mubr.f32.gmra.mrb[0].mxu0 %v1238
    %v1240 = vpop.f32.mrb[0].mxu0
    %v1241 = vadd.f32 %v934, %v1240
    %v1242 = vpop.f32.mrb[0].mxu0
    %1243 = vmatprep.mubr.f32.mxu0 0.0
    %v1244 = vand.u32 %v42, 4294901760
    %v1245 = vsub.f32 %v42, %v1244
    %v1246 = vand.u32 %v1245, 4294901760
    %1247 = vmatmul.mubr.f32.gmra.mrb[0].mxu0 %v1246
    %v1248 = vpop.f32.mrb[0].mxu0
    %v1249 = vadd.f32 %v941, %v1248
    %v1250 = vpop.f32.mrb[0].mxu0
    %1251 = vmatprep.mubr.f32.mxu0 0.0
    %v1252 = vand.u32 %v43, 4294901760
    %v1253 = vsub.f32 %v43, %v1252
    %v1254 = vand.u32 %v1253, 4294901760
    %1255 = vmatmul.mubr.f32.gmra.mrb[0].mxu0 %v1254
    %v1256 = vpop.f32.mrb[0].mxu0
    %v1257 = vadd.f32 %v948, %v1256
    %v1258 = vpop.f32.mrb[0].mxu0
    %1259 = vmatprep.mubr.f32.mxu0 0.0
    %v1260 = vand.u32 %v44, 4294901760
    %v1261 = vsub.f32 %v44, %v1260
    %v1262 = vand.u32 %v1261, 4294901760
    %1263 = vmatmul.mubr.f32.gmra.mrb[0].mxu0 %v1262
    %v1264 = vpop.f32.mrb[0].mxu0
    %v1265 = vadd.f32 %v955, %v1264
    %v1266 = vpop.f32.mrb[0].mxu0
    %1267 = vmatprep.mubr.f32.mxu0 0.0
    %v1268 = vand.u32 %v45, 4294901760
    %v1269 = vsub.f32 %v45, %v1268
    %v1270 = vand.u32 %v1269, 4294901760
    %1271 = vmatmul.mubr.f32.gmra.mrb[0].mxu0 %v1270
    %v1272 = vpop.f32.mrb[0].mxu0
    %v1273 = vadd.f32 %v962, %v1272
    %v1274 = vpop.f32.mrb[0].mxu0
    %1275 = vmatprep.mubr.f32.mxu0 0.0
    %v1276 = vand.u32 %v46, 4294901760
    %v1277 = vsub.f32 %v46, %v1276
    %v1278 = vand.u32 %v1277, 4294901760
    %1279 = vmatmul.mubr.f32.gmra.mrb[0].mxu0 %v1278
    %v1280 = vpop.f32.mrb[0].mxu0
    %v1281 = vadd.f32 %v969, %v1280
    %v1282 = vpop.f32.mrb[0].mxu0
    %1283 = vmatprep.mubr.f32.mxu0 0.0
    %v1284 = vand.u32 %v47, 4294901760
    %v1285 = vsub.f32 %v47, %v1284
    %v1286 = vand.u32 %v1285, 4294901760
    %1287 = vmatmul.mubr.f32.gmra.mrb[0].mxu0 %v1286
    %v1288 = vpop.f32.mrb[0].mxu0
    %v1289 = vadd.f32 %v976, %v1288
    %v1290 = vpop.f32.mrb[0].mxu0
    %1291 = vmatprep.mubr.f32.mxu0 0.0
    %v1292 = vand.u32 %v48, 4294901760
    %v1293 = vsub.f32 %v48, %v1292
    %v1294 = vand.u32 %v1293, 4294901760
    %1295 = vmatmul.mubr.f32.gmra.mrb[0].mxu0 %v1294
    %v1296 = vpop.f32.mrb[0].mxu0
    %v1297 = vadd.f32 %v983, %v1296
    %v1298 = vpop.f32.mrb[0].mxu0
    %1299 = vmatprep.mubr.f32.mxu0 0.0
    %v1300 = vand.u32 %v49, 4294901760
    %v1301 = vsub.f32 %v49, %v1300
    %v1302 = vand.u32 %v1301, 4294901760
    %1303 = vmatmul.mubr.f32.gmra.mrb[0].mxu0 %v1302
    %v1304 = vpop.f32.mrb[0].mxu0
    %v1305 = vadd.f32 %v990, %v1304
    %v1306 = vpop.f32.mrb[0].mxu0
    %1307 = vmatprep.mubr.f32.mxu0 0.0
    %v1308 = vand.u32 %v50, 4294901760
    %v1309 = vsub.f32 %v50, %v1308
    %v1310 = vand.u32 %v1309, 4294901760
    %1311 = vmatmul.mubr.f32.gmra.mrb[0].mxu0 %v1310
    %v1312 = vpop.f32.mrb[0].mxu0
    %v1313 = vadd.f32 %v997, %v1312
    %v1314 = vpop.f32.mrb[0].mxu0
    %1315 = vmatprep.mubr.f32.mxu0 0.0
    %v1316 = vand.u32 %v51, 4294901760
    %v1317 = vsub.f32 %v51, %v1316
    %v1318 = vand.u32 %v1317, 4294901760
    %1319 = vmatmul.mubr.f32.gmra.mrb[0].mxu0 %v1318
    %v1320 = vpop.f32.mrb[0].mxu0
    %v1321 = vadd.f32 %v1004, %v1320
    %v1322 = vpop.f32.mrb[0].mxu0
    %1323 = vmatprep.mubr.f32.mxu0 0.0
    %v1324 = vand.u32 %v52, 4294901760
    %v1325 = vsub.f32 %v52, %v1324
    %v1326 = vand.u32 %v1325, 4294901760
    %1327 = vmatmul.mubr.f32.gmra.mrb[0].mxu0 %v1326
    %v1328 = vpop.f32.mrb[0].mxu0
    %v1329 = vadd.f32 %v1011, %v1328
    %v1330 = vpop.f32.mrb[0].mxu0
    %1331 = vmatprep.mubr.f32.mxu0 0.0
    %v1332 = vand.u32 %v53, 4294901760
    %v1333 = vsub.f32 %v53, %v1332
    %v1334 = vand.u32 %v1333, 4294901760
    %1335 = vmatmul.mubr.f32.gmra.mrb[0].mxu0 %v1334
    %v1336 = vpop.f32.mrb[0].mxu0
    %v1337 = vadd.f32 %v1018, %v1336
    %v1338 = vpop.f32.mrb[0].mxu0
    %1339 = vmatprep.mubr.f32.mxu0 0.0
    %v1340 = vand.u32 %v54, 4294901760
    %v1341 = vsub.f32 %v54, %v1340
    %v1342 = vand.u32 %v1341, 4294901760
    %1343 = vmatmul.mubr.f32.gmra.mrb[0].mxu0 %v1342
    %v1344 = vpop.f32.mrb[0].mxu0
    %v1345 = vadd.f32 %v1025, %v1344
    %v1346 = vpop.f32.mrb[0].mxu0
    %1347 = vmatprep.mubr.f32.mxu0 0.0
    %v1348 = vand.u32 %v55, 4294901760
    %v1349 = vsub.f32 %v55, %v1348
    %v1350 = vand.u32 %v1349, 4294901760
    %1351 = vmatmul.mubr.f32.gmra.mrb[0].mxu0 %v1350
    %v1352 = vpop.f32.mrb[0].mxu0
    %v1353 = vadd.f32 %v1032, %v1352
    %v1354 = vpop.f32.mrb[0].mxu0
    %1355 = vmatprep.mubr.f32.mxu0 0.0
    %v1356 = vand.u32 %v56, 4294901760
    %v1357 = vsub.f32 %v56, %v1356
    %v1358 = vand.u32 %v1357, 4294901760
    %1359 = vmatmul.mubr.f32.gmra.mrb[0].mxu0 %v1358
    %v1360 = vpop.f32.mrb[0].mxu0
    %v1361 = vadd.f32 %v1039, %v1360
    %v1362 = vpop.f32.mrb[0].mxu0
    %1363 = vmatprep.mubr.f32.mxu0 0.0
    %v1364 = vand.u32 %v57, 4294901760
    %v1365 = vsub.f32 %v57, %v1364
    %v1366 = vand.u32 %v1365, 4294901760
    %1367 = vmatmul.mubr.f32.gmra.mrb[0].mxu0 %v1366
    %v1368 = vpop.f32.mrb[0].mxu0
    %v1369 = vadd.f32 %v1046, %v1368
    %v1370 = vpop.f32.mrb[0].mxu0
    %1371 = vmatprep.mubr.f32.mxu0 0.0
    %v1372 = vand.u32 %v58, 4294901760
    %v1373 = vsub.f32 %v58, %v1372
    %v1374 = vand.u32 %v1373, 4294901760
    %1375 = vmatmul.mubr.f32.gmra.mrb[0].mxu0 %v1374
    %v1376 = vpop.f32.mrb[0].mxu0
    %v1377 = vadd.f32 %v1053, %v1376
    %v1378 = vpop.f32.mrb[0].mxu0
    %1379 = vmatprep.mubr.f32.mxu0 0.0
    %v1380 = vand.u32 %v59, 4294901760
    %v1381 = vsub.f32 %v59, %v1380
    %v1382 = vand.u32 %v1381, 4294901760
    %1383 = vmatmul.mubr.f32.gmra.mrb[0].mxu0 %v1382
    %v1384 = vpop.f32.mrb[0].mxu0
    %v1385 = vadd.f32 %v1060, %v1384
    %v1386 = vpop.f32.mrb[0].mxu0
    %1387 = vmatprep.mubr.f32.mxu0 0.0
    %v1388 = vand.u32 %v60, 4294901760
    %v1389 = vsub.f32 %v60, %v1388
    %v1390 = vand.u32 %v1389, 4294901760
    %1391 = vmatmul.mubr.f32.gmra.mrb[0].mxu0 %v1390
    %v1392 = vpop.f32.mrb[0].mxu0
    %v1393 = vadd.f32 %v1067, %v1392
    %v1394 = vpop.f32.mrb[0].mxu0
    %1395 = vmatprep.mubr.f32.mxu0 0.0
    %v1396 = vand.u32 %v61, 4294901760
    %v1397 = vsub.f32 %v61, %v1396
    %v1398 = vand.u32 %v1397, 4294901760
    %1399 = vmatmul.mubr.f32.gmra.mrb[0].mxu0 %v1398
    %v1400 = vpop.f32.mrb[0].mxu0
    %v1401 = vadd.f32 %v1074, %v1400
    %v1402 = vpop.f32.mrb[0].mxu0
    %1403 = vmatprep.mubr.f32.mxu0 0.0
    %v1404 = vand.u32 %v62, 4294901760
    %v1405 = vsub.f32 %v62, %v1404
    %v1406 = vand.u32 %v1405, 4294901760
    %1407 = vmatmul.mubr.f32.gmra.mrb[0].mxu0 %v1406
    %v1408 = vpop.f32.mrb[0].mxu0
    %v1409 = vadd.f32 %v1081, %v1408
    %v1410 = vpop.f32.mrb[0].mxu0
    %1411 = vmatprep.mubr.f32.mxu0 0.0
    %v1412 = vand.u32 %v63, 4294901760
    %v1413 = vsub.f32 %v63, %v1412
    %v1414 = vand.u32 %v1413, 4294901760
    %1415 = vmatmul.mubr.f32.gmra.mrb[0].mxu0 %v1414
    %v1416 = vpop.f32.mrb[0].mxu0
    %v1417 = vadd.f32 %v1088, %v1416
    %v1418 = vpop.f32.mrb[0].mxu0
    %1419 = vmatprep.mubr.f32.mxu0 0.0
    %v1420 = vand.u32 %v64, 4294901760
    %v1421 = vsub.f32 %v64, %v1420
    %v1422 = vand.u32 %v1421, 4294901760
    %1423 = vmatmul.mubr.f32.gmra.mrb[0].mxu0 %v1422
    %v1424 = vpop.f32.mrb[0].mxu0
    %v1425 = vadd.f32 %v1095, %v1424
    %v1426 = vpop.f32.mrb[0].mxu0
    %1427 = vmatprep.mubr.f32.mxu0 0.0
    %v1428 = vand.u32 %v65, 4294901760
    %v1429 = vsub.f32 %v65, %v1428
    %v1430 = vand.u32 %v1429, 4294901760
    %1431 = vmatmul.mubr.f32.gmra.mrb[0].mxu0 %v1430
    %v1432 = vpop.f32.mrb[0].mxu0
    %v1433 = vadd.f32 %v1102, %v1432
    %v1434 = vpop.f32.mrb[0].mxu0
    %1435 = vmatprep.mubr.f32.mxu0 0.0
    %v1436 = vand.u32 %v66, 4294901760
    %v1437 = vsub.f32 %v66, %v1436
    %v1438 = vand.u32 %v1437, 4294901760
    %1439 = vmatmul.mubr.f32.gmra.mrb[0].mxu0 %v1438
    %v1440 = vpop.f32.mrb[0].mxu0
    %v1441 = vadd.f32 %v1109, %v1440
    %v1442 = vpop.f32.mrb[0].mxu0
    %1443 = vmatprep.mubr.f32.mxu0 0.0
    %v1444 = vand.u32 %v67, 4294901760
    %v1445 = vsub.f32 %v67, %v1444
    %v1446 = vand.u32 %v1445, 4294901760
    %1447 = vmatmul.mubr.f32.gmra.mrb[0].mxu0 %v1446
    %v1448 = vpop.f32.mrb[0].mxu0
    %v1449 = vadd.f32 %v1116, %v1448
    %v1450 = vpop.f32.mrb[0].mxu0
    %1451 = vmatprep.mubr.f32.mxu0 0.0
    %v1452 = vand.u32 %v68, 4294901760
    %v1453 = vsub.f32 %v68, %v1452
    %v1454 = vand.u32 %v1453, 4294901760
    %1455 = vmatmul.mubr.f32.gmra.mrb[0].mxu0 %v1454
    %v1456 = vpop.f32.mrb[0].mxu0
    %v1457 = vadd.f32 %v1123, %v1456
    %v1458 = vpop.f32.mrb[0].mxu0
    %1459 = vmatprep.mubr.f32.mxu0 0.0
    %v1460 = vand.u32 %v69, 4294901760
    %v1461 = vsub.f32 %v69, %v1460
    %v1462 = vand.u32 %v1461, 4294901760
    %1463 = vmatmul.mubr.f32.gmra.mrb[0].mxu0 %v1462
    %v1464 = vpop.f32.mrb[0].mxu0
    %v1465 = vadd.f32 %v1130, %v1464
    %v1466 = vpop.f32.mrb[0].mxu0
    %1467 = vmatprep.mubr.f32.mxu0 0.0
    %v1468 = vand.u32 %v70, 4294901760
    %v1469 = vsub.f32 %v70, %v1468
    %v1470 = vand.u32 %v1469, 4294901760
    %1471 = vmatmul.mubr.f32.gmra.mrb[0].mxu0 %v1470
    %v1472 = vpop.f32.mrb[0].mxu0
    %v1473 = vadd.f32 %v1137, %v1472
    %v1474 = vpop.f32.mrb[0].mxu0
    %1475 = vmatprep.mubr.f32.mxu0 0.0
    %v1476 = vand.u32 %v71, 4294901760
    %v1477 = vsub.f32 %v71, %v1476
    %v1478 = vand.u32 %v1477, 4294901760
    %1479 = vmatmul.mubr.f32.gmra.mrb[0].mxu0 %v1478
    %v1480 = vpop.f32.mrb[0].mxu0
    %v1481 = vadd.f32 %v1144, %v1480
    %v1482 = vpop.f32.mrb[0].mxu0
    %1483 = vdwg.mxu0
    %1484 = vmatprep.subr.mxu0 0.0
    %v1485 = vand.u32 %v72, 4294901760
    %v1486 = vsub.f32 %v72, %v1485
    %v1487 = vand.u32 %v1486, 4294901760
    %1488 = vmatpush1.msra.mxu0 %v1487
    %1489 = vmatprep.subr.mxu0 0.0
    %v1490 = vand.u32 %v73, 4294901760
    %v1491 = vsub.f32 %v73, %v1490
    %v1492 = vand.u32 %v1491, 4294901760
    %1493 = vmatpush1.msra.mxu0 %v1492
    %1494 = vmatprep.subr.mxu0 0.0
    %v1495 = vand.u32 %v74, 4294901760
    %v1496 = vsub.f32 %v74, %v1495
    %v1497 = vand.u32 %v1496, 4294901760
    %1498 = vmatpush1.msra.mxu0 %v1497
    %1499 = vmatprep.subr.mxu0 0.0
    %v1500 = vand.u32 %v75, 4294901760
    %v1501 = vsub.f32 %v75, %v1500
    %v1502 = vand.u32 %v1501, 4294901760
    %1503 = vmatpush1.msra.mxu0 %v1502
    %1504 = vmatprep.subr.mxu0 0.0
    %v1505 = vand.u32 %v76, 4294901760
    %v1506 = vsub.f32 %v76, %v1505
    %v1507 = vand.u32 %v1506, 4294901760
    %1508 = vmatpush1.msra.mxu0 %v1507
    %1509 = vmatprep.subr.mxu0 0.0
    %v1510 = vand.u32 %v77, 4294901760
    %v1511 = vsub.f32 %v77, %v1510
    %v1512 = vand.u32 %v1511, 4294901760
    %1513 = vmatpush1.msra.mxu0 %v1512
    %1514 = vmatprep.subr.mxu0 0.0
    %v1515 = vand.u32 %v78, 4294901760
    %v1516 = vsub.f32 %v78, %v1515
    %v1517 = vand.u32 %v1516, 4294901760
    %1518 = vmatpush1.msra.mxu0 %v1517
    %1519 = vmatprep.subr.mxu0 0.0
    %v1520 = vand.u32 %v79, 4294901760
    %v1521 = vsub.f32 %v79, %v1520
    %v1522 = vand.u32 %v1521, 4294901760
    %1523 = vmatpush1.msra.mxu0 %v1522
    %1524 = vmatprep.subr.mxu0 0.0
    %v1525 = vand.u32 %v80, 4294901760
    %v1526 = vsub.f32 %v80, %v1525
    %v1527 = vand.u32 %v1526, 4294901760
    %1528 = vmatpush1.msra.mxu0 %v1527
    %1529 = vmatprep.subr.mxu0 0.0
    %v1530 = vand.u32 %v81, 4294901760
    %v1531 = vsub.f32 %v81, %v1530
    %v1532 = vand.u32 %v1531, 4294901760
    %1533 = vmatpush1.msra.mxu0 %v1532
    %1534 = vmatprep.subr.mxu0 0.0
    %v1535 = vand.u32 %v82, 4294901760
    %v1536 = vsub.f32 %v82, %v1535
    %v1537 = vand.u32 %v1536, 4294901760
    %1538 = vmatpush1.msra.mxu0 %v1537
    %1539 = vmatprep.subr.mxu0 0.0
    %v1540 = vand.u32 %v83, 4294901760
    %v1541 = vsub.f32 %v83, %v1540
    %v1542 = vand.u32 %v1541, 4294901760
    %1543 = vmatpush1.msra.mxu0 %v1542
    %1544 = vmatprep.subr.mxu0 0.0
    %v1545 = vand.u32 %v84, 4294901760
    %v1546 = vsub.f32 %v84, %v1545
    %v1547 = vand.u32 %v1546, 4294901760
    %1548 = vmatpush1.msra.mxu0 %v1547
    %1549 = vmatprep.subr.mxu0 0.0
    %v1550 = vand.u32 %v85, 4294901760
    %v1551 = vsub.f32 %v85, %v1550
    %v1552 = vand.u32 %v1551, 4294901760
    %1553 = vmatpush1.msra.mxu0 %v1552
    %1554 = vmatprep.subr.mxu0 0.0
    %v1555 = vand.u32 %v86, 4294901760
    %v1556 = vsub.f32 %v86, %v1555
    %v1557 = vand.u32 %v1556, 4294901760
    %1558 = vmatpush1.msra.mxu0 %v1557
    %1559 = vmatprep.subr.mxu0 0.0
    %v1560 = vand.u32 %v87, 4294901760
    %v1561 = vsub.f32 %v87, %v1560
    %v1562 = vand.u32 %v1561, 4294901760
    %1563 = vmatpush1.msra.mxu0 %v1562
    %1564 = vmatprep.subr.mxu0 0.0
    %1565 = vmatpush1.msra.mxu0 0.0
    %1566 = vmatprep.subr.mxu0 0.0
    %1567 = vmatpush1.msra.mxu0 0.0
    %1568 = vmatprep.subr.mxu0 0.0
    %1569 = vmatpush1.msra.mxu0 0.0
    %1570 = vmatprep.subr.mxu0 0.0
    %1571 = vmatpush1.msra.mxu0 0.0
    %1572 = vmatprep.subr.mxu0 0.0
    %1573 = vmatpush1.msra.mxu0 0.0
    %1574 = vmatprep.subr.mxu0 0.0
    %1575 = vmatpush1.msra.mxu0 0.0
    %1576 = vmatprep.subr.mxu0 0.0
    %1577 = vmatpush1.msra.mxu0 0.0
    %1578 = vmatprep.subr.mxu0 0.0
    %1579 = vmatpush1.msra.mxu0 0.0
    %1580 = vmatprep.subr.mxu0 0.0
    %1581 = vmatpush1.msra.mxu0 0.0
    %1582 = vmatprep.subr.mxu0 0.0
    %1583 = vmatpush1.msra.mxu0 0.0
    %1584 = vmatprep.subr.mxu0 0.0
    %1585 = vmatpush1.msra.mxu0 0.0
    %1586 = vmatprep.subr.mxu0 0.0
    %1587 = vmatpush1.msra.mxu0 0.0
    %1588 = vmatprep.subr.mxu0 0.0
    %1589 = vmatpush1.msra.mxu0 0.0
    %1590 = vmatprep.subr.mxu0 0.0
    %1591 = vmatpush1.msra.mxu0 0.0
    %1592 = vmatprep.subr.mxu0 0.0
    %1593 = vmatpush1.msra.mxu0 0.0
    %1594 = vmatprep.subr.mxu0 0.0
    %1595 = vmatpush1.msra.mxu0 0.0
    %1596 = vmatprep.mubr.f32.mxu0 0.0
    %v1597 = vand.u32 %v40, 4294901760
    %1598 = vmatmul.mubr.f32.gmra.mrb[0].mxu0 %v1597
    %v1599 = vpop.f32.mrb[0].mxu0
    %v1600 = vadd.f32 %v1233, %v1599
    %v1601 = vpop.f32.mrb[0].mxu0
    %1602 = vmatprep.mubr.f32.mxu0 0.0
    %v1603 = vand.u32 %v41, 4294901760
    %1604 = vmatmul.mubr.f32.gmra.mrb[0].mxu0 %v1603
    %v1605 = vpop.f32.mrb[0].mxu0
    %v1606 = vadd.f32 %v1241, %v1605
    %v1607 = vpop.f32.mrb[0].mxu0
    %1608 = vmatprep.mubr.f32.mxu0 0.0
    %v1609 = vand.u32 %v42, 4294901760
    %1610 = vmatmul.mubr.f32.gmra.mrb[0].mxu0 %v1609
    %v1611 = vpop.f32.mrb[0].mxu0
    %v1612 = vadd.f32 %v1249, %v1611
    %v1613 = vpop.f32.mrb[0].mxu0
    %1614 = vmatprep.mubr.f32.mxu0 0.0
    %v1615 = vand.u32 %v43, 4294901760
    %1616 = vmatmul.mubr.f32.gmra.mrb[0].mxu0 %v1615
    %v1617 = vpop.f32.mrb[0].mxu0
    %v1618 = vadd.f32 %v1257, %v1617
    %v1619 = vpop.f32.mrb[0].mxu0
    %1620 = vmatprep.mubr.f32.mxu0 0.0
    %v1621 = vand.u32 %v44, 4294901760
    %1622 = vmatmul.mubr.f32.gmra.mrb[0].mxu0 %v1621
    %v1623 = vpop.f32.mrb[0].mxu0
    %v1624 = vadd.f32 %v1265, %v1623
    %v1625 = vpop.f32.mrb[0].mxu0
    %1626 = vmatprep.mubr.f32.mxu0 0.0
    %v1627 = vand.u32 %v45, 4294901760
    %1628 = vmatmul.mubr.f32.gmra.mrb[0].mxu0 %v1627
    %v1629 = vpop.f32.mrb[0].mxu0
    %v1630 = vadd.f32 %v1273, %v1629
    %v1631 = vpop.f32.mrb[0].mxu0
    %1632 = vmatprep.mubr.f32.mxu0 0.0
    %v1633 = vand.u32 %v46, 4294901760
    %1634 = vmatmul.mubr.f32.gmra.mrb[0].mxu0 %v1633
    %v1635 = vpop.f32.mrb[0].mxu0
    %v1636 = vadd.f32 %v1281, %v1635
    %v1637 = vpop.f32.mrb[0].mxu0
    %1638 = vmatprep.mubr.f32.mxu0 0.0
    %v1639 = vand.u32 %v47, 4294901760
    %1640 = vmatmul.mubr.f32.gmra.mrb[0].mxu0 %v1639
    %v1641 = vpop.f32.mrb[0].mxu0
    %v1642 = vadd.f32 %v1289, %v1641
    %v1643 = vpop.f32.mrb[0].mxu0
    %1644 = vmatprep.mubr.f32.mxu0 0.0
    %v1645 = vand.u32 %v48, 4294901760
    %1646 = vmatmul.mubr.f32.gmra.mrb[0].mxu0 %v1645
    %v1647 = vpop.f32.mrb[0].mxu0
    %v1648 = vadd.f32 %v1297, %v1647
    %v1649 = vpop.f32.mrb[0].mxu0
    %1650 = vmatprep.mubr.f32.mxu0 0.0
    %v1651 = vand.u32 %v49, 4294901760
    %1652 = vmatmul.mubr.f32.gmra.mrb[0].mxu0 %v1651
    %v1653 = vpop.f32.mrb[0].mxu0
    %v1654 = vadd.f32 %v1305, %v1653
    %v1655 = vpop.f32.mrb[0].mxu0
    %1656 = vmatprep.mubr.f32.mxu0 0.0
    %v1657 = vand.u32 %v50, 4294901760
    %1658 = vmatmul.mubr.f32.gmra.mrb[0].mxu0 %v1657
    %v1659 = vpop.f32.mrb[0].mxu0
    %v1660 = vadd.f32 %v1313, %v1659
    %v1661 = vpop.f32.mrb[0].mxu0
    %1662 = vmatprep.mubr.f32.mxu0 0.0
    %v1663 = vand.u32 %v51, 4294901760
    %1664 = vmatmul.mubr.f32.gmra.mrb[0].mxu0 %v1663
    %v1665 = vpop.f32.mrb[0].mxu0
    %v1666 = vadd.f32 %v1321, %v1665
    %v1667 = vpop.f32.mrb[0].mxu0
    %1668 = vmatprep.mubr.f32.mxu0 0.0
    %v1669 = vand.u32 %v52, 4294901760
    %1670 = vmatmul.mubr.f32.gmra.mrb[0].mxu0 %v1669
    %v1671 = vpop.f32.mrb[0].mxu0
    %v1672 = vadd.f32 %v1329, %v1671
    %v1673 = vpop.f32.mrb[0].mxu0
    %1674 = vmatprep.mubr.f32.mxu0 0.0
    %v1675 = vand.u32 %v53, 4294901760
    %1676 = vmatmul.mubr.f32.gmra.mrb[0].mxu0 %v1675
    %v1677 = vpop.f32.mrb[0].mxu0
    %v1678 = vadd.f32 %v1337, %v1677
    %v1679 = vpop.f32.mrb[0].mxu0
    %1680 = vmatprep.mubr.f32.mxu0 0.0
    %v1681 = vand.u32 %v54, 4294901760
    %1682 = vmatmul.mubr.f32.gmra.mrb[0].mxu0 %v1681
    %v1683 = vpop.f32.mrb[0].mxu0
    %v1684 = vadd.f32 %v1345, %v1683
    %v1685 = vpop.f32.mrb[0].mxu0
    %1686 = vmatprep.mubr.f32.mxu0 0.0
    %v1687 = vand.u32 %v55, 4294901760
    %1688 = vmatmul.mubr.f32.gmra.mrb[0].mxu0 %v1687
    %v1689 = vpop.f32.mrb[0].mxu0
    %v1690 = vadd.f32 %v1353, %v1689
    %v1691 = vpop.f32.mrb[0].mxu0
    %1692 = vmatprep.mubr.f32.mxu0 0.0
    %v1693 = vand.u32 %v56, 4294901760
    %1694 = vmatmul.mubr.f32.gmra.mrb[0].mxu0 %v1693
    %v1695 = vpop.f32.mrb[0].mxu0
    %v1696 = vadd.f32 %v1361, %v1695
    %v1697 = vpop.f32.mrb[0].mxu0
    %1698 = vmatprep.mubr.f32.mxu0 0.0
    %v1699 = vand.u32 %v57, 4294901760
    %1700 = vmatmul.mubr.f32.gmra.mrb[0].mxu0 %v1699
    %v1701 = vpop.f32.mrb[0].mxu0
    %v1702 = vadd.f32 %v1369, %v1701
    %v1703 = vpop.f32.mrb[0].mxu0
    %1704 = vmatprep.mubr.f32.mxu0 0.0
    %v1705 = vand.u32 %v58, 4294901760
    %1706 = vmatmul.mubr.f32.gmra.mrb[0].mxu0 %v1705
    %v1707 = vpop.f32.mrb[0].mxu0
    %v1708 = vadd.f32 %v1377, %v1707
    %v1709 = vpop.f32.mrb[0].mxu0
    %1710 = vmatprep.mubr.f32.mxu0 0.0
    %v1711 = vand.u32 %v59, 4294901760
    %1712 = vmatmul.mubr.f32.gmra.mrb[0].mxu0 %v1711
    %v1713 = vpop.f32.mrb[0].mxu0
    %v1714 = vadd.f32 %v1385, %v1713
    %v1715 = vpop.f32.mrb[0].mxu0
    %1716 = vmatprep.mubr.f32.mxu0 0.0
    %v1717 = vand.u32 %v60, 4294901760
    %1718 = vmatmul.mubr.f32.gmra.mrb[0].mxu0 %v1717
    %v1719 = vpop.f32.mrb[0].mxu0
    %v1720 = vadd.f32 %v1393, %v1719
    %v1721 = vpop.f32.mrb[0].mxu0
    %1722 = vmatprep.mubr.f32.mxu0 0.0
    %v1723 = vand.u32 %v61, 4294901760
    %1724 = vmatmul.mubr.f32.gmra.mrb[0].mxu0 %v1723
    %v1725 = vpop.f32.mrb[0].mxu0
    %v1726 = vadd.f32 %v1401, %v1725
    %v1727 = vpop.f32.mrb[0].mxu0
    %1728 = vmatprep.mubr.f32.mxu0 0.0
    %v1729 = vand.u32 %v62, 4294901760
    %1730 = vmatmul.mubr.f32.gmra.mrb[0].mxu0 %v1729
    %v1731 = vpop.f32.mrb[0].mxu0
    %v1732 = vadd.f32 %v1409, %v1731
    %v1733 = vpop.f32.mrb[0].mxu0
    %1734 = vmatprep.mubr.f32.mxu0 0.0
    %v1735 = vand.u32 %v63, 4294901760
    %1736 = vmatmul.mubr.f32.gmra.mrb[0].mxu0 %v1735
    %v1737 = vpop.f32.mrb[0].mxu0
    %v1738 = vadd.f32 %v1417, %v1737
    %v1739 = vpop.f32.mrb[0].mxu0
    %1740 = vmatprep.mubr.f32.mxu0 0.0
    %v1741 = vand.u32 %v64, 4294901760
    %1742 = vmatmul.mubr.f32.gmra.mrb[0].mxu0 %v1741
    %v1743 = vpop.f32.mrb[0].mxu0
    %v1744 = vadd.f32 %v1425, %v1743
    %v1745 = vpop.f32.mrb[0].mxu0
    %1746 = vmatprep.mubr.f32.mxu0 0.0
    %v1747 = vand.u32 %v65, 4294901760
    %1748 = vmatmul.mubr.f32.gmra.mrb[0].mxu0 %v1747
    %v1749 = vpop.f32.mrb[0].mxu0
    %v1750 = vadd.f32 %v1433, %v1749
    %v1751 = vpop.f32.mrb[0].mxu0
    %1752 = vmatprep.mubr.f32.mxu0 0.0
    %v1753 = vand.u32 %v66, 4294901760
    %1754 = vmatmul.mubr.f32.gmra.mrb[0].mxu0 %v1753
    %v1755 = vpop.f32.mrb[0].mxu0
    %v1756 = vadd.f32 %v1441, %v1755
    %v1757 = vpop.f32.mrb[0].mxu0
    %1758 = vmatprep.mubr.f32.mxu0 0.0
    %v1759 = vand.u32 %v67, 4294901760
    %1760 = vmatmul.mubr.f32.gmra.mrb[0].mxu0 %v1759
    %v1761 = vpop.f32.mrb[0].mxu0
    %v1762 = vadd.f32 %v1449, %v1761
    %v1763 = vpop.f32.mrb[0].mxu0
    %1764 = vmatprep.mubr.f32.mxu0 0.0
    %v1765 = vand.u32 %v68, 4294901760
    %1766 = vmatmul.mubr.f32.gmra.mrb[0].mxu0 %v1765
    %v1767 = vpop.f32.mrb[0].mxu0
    %v1768 = vadd.f32 %v1457, %v1767
    %v1769 = vpop.f32.mrb[0].mxu0
    %1770 = vmatprep.mubr.f32.mxu0 0.0
    %v1771 = vand.u32 %v69, 4294901760
    %1772 = vmatmul.mubr.f32.gmra.mrb[0].mxu0 %v1771
    %v1773 = vpop.f32.mrb[0].mxu0
    %v1774 = vadd.f32 %v1465, %v1773
    %v1775 = vpop.f32.mrb[0].mxu0
    %1776 = vmatprep.mubr.f32.mxu0 0.0
    %v1777 = vand.u32 %v70, 4294901760
    %1778 = vmatmul.mubr.f32.gmra.mrb[0].mxu0 %v1777
    %v1779 = vpop.f32.mrb[0].mxu0
    %v1780 = vadd.f32 %v1473, %v1779
    %v1781 = vpop.f32.mrb[0].mxu0
    %1782 = vmatprep.mubr.f32.mxu0 0.0
    %v1783 = vand.u32 %v71, 4294901760
    %1784 = vmatmul.mubr.f32.gmra.mrb[0].mxu0 %v1783
    %v1785 = vpop.f32.mrb[0].mxu0
    %v1786 = vadd.f32 %v1481, %v1785
    %v1787 = vpop.f32.mrb[0].mxu0
    %1788 = vdwg.mxu0
    %1789 = vmatprep.subr.mxu0 0.0
    %v1790 = vand.u32 %v72, 4294901760
    %1791 = vmatpush1.msra.mxu0 %v1790
    %1792 = vmatprep.subr.mxu0 0.0
    %v1793 = vand.u32 %v73, 4294901760
    %1794 = vmatpush1.msra.mxu0 %v1793
    %1795 = vmatprep.subr.mxu0 0.0
    %v1796 = vand.u32 %v74, 4294901760
    %1797 = vmatpush1.msra.mxu0 %v1796
    %1798 = vmatprep.subr.mxu0 0.0
    %v1799 = vand.u32 %v75, 4294901760
    %1800 = vmatpush1.msra.mxu0 %v1799
    %1801 = vmatprep.subr.mxu0 0.0
    %v1802 = vand.u32 %v76, 4294901760
    %1803 = vmatpush1.msra.mxu0 %v1802
    %1804 = vmatprep.subr.mxu0 0.0
    %v1805 = vand.u32 %v77, 4294901760
    %1806 = vmatpush1.msra.mxu0 %v1805
    %1807 = vmatprep.subr.mxu0 0.0
    %v1808 = vand.u32 %v78, 4294901760
    %1809 = vmatpush1.msra.mxu0 %v1808
    %1810 = vmatprep.subr.mxu0 0.0
    %v1811 = vand.u32 %v79, 4294901760
    %1812 = vmatpush1.msra.mxu0 %v1811
    %1813 = vmatprep.subr.mxu0 0.0
    %v1814 = vand.u32 %v80, 4294901760
    %1815 = vmatpush1.msra.mxu0 %v1814
    %1816 = vmatprep.subr.mxu0 0.0
    %v1817 = vand.u32 %v81, 4294901760
    %1818 = vmatpush1.msra.mxu0 %v1817
    %1819 = vmatprep.subr.mxu0 0.0
    %v1820 = vand.u32 %v82, 4294901760
    %1821 = vmatpush1.msra.mxu0 %v1820
    %1822 = vmatprep.subr.mxu0 0.0
    %v1823 = vand.u32 %v83, 4294901760
    %1824 = vmatpush1.msra.mxu0 %v1823
    %1825 = vmatprep.subr.mxu0 0.0
    %v1826 = vand.u32 %v84, 4294901760
    %1827 = vmatpush1.msra.mxu0 %v1826
    %1828 = vmatprep.subr.mxu0 0.0
    %v1829 = vand.u32 %v85, 4294901760
    %1830 = vmatpush1.msra.mxu0 %v1829
    %1831 = vmatprep.subr.mxu0 0.0
    %v1832 = vand.u32 %v86, 4294901760
    %1833 = vmatpush1.msra.mxu0 %v1832
    %1834 = vmatprep.subr.mxu0 0.0
    %v1835 = vand.u32 %v87, 4294901760
    %1836 = vmatpush1.msra.mxu0 %v1835
    %1837 = vmatprep.subr.mxu0 0.0
    %1838 = vmatpush1.msra.mxu0 0.0
    %1839 = vmatprep.subr.mxu0 0.0
    %1840 = vmatpush1.msra.mxu0 0.0
    %1841 = vmatprep.subr.mxu0 0.0
    %1842 = vmatpush1.msra.mxu0 0.0
    %1843 = vmatprep.subr.mxu0 0.0
    %1844 = vmatpush1.msra.mxu0 0.0
    %1845 = vmatprep.subr.mxu0 0.0
    %1846 = vmatpush1.msra.mxu0 0.0
    %1847 = vmatprep.subr.mxu0 0.0
    %1848 = vmatpush1.msra.mxu0 0.0
    %1849 = vmatprep.subr.mxu0 0.0
    %1850 = vmatpush1.msra.mxu0 0.0
    %1851 = vmatprep.subr.mxu0 0.0
    %1852 = vmatpush1.msra.mxu0 0.0
    %1853 = vmatprep.subr.mxu0 0.0
    %1854 = vmatpush1.msra.mxu0 0.0
    %1855 = vmatprep.subr.mxu0 0.0
    %1856 = vmatpush1.msra.mxu0 0.0
    %1857 = vmatprep.subr.mxu0 0.0
    %1858 = vmatpush1.msra.mxu0 0.0
    %1859 = vmatprep.subr.mxu0 0.0
    %1860 = vmatpush1.msra.mxu0 0.0
    %1861 = vmatprep.subr.mxu0 0.0
    %1862 = vmatpush1.msra.mxu0 0.0
    %1863 = vmatprep.subr.mxu0 0.0
    %1864 = vmatpush1.msra.mxu0 0.0
    %1865 = vmatprep.subr.mxu0 0.0
    %1866 = vmatpush1.msra.mxu0 0.0
    %1867 = vmatprep.subr.mxu0 0.0
    %1868 = vmatpush1.msra.mxu0 0.0
    %1869 = vmatprep.mubr.f32.mxu0 0.0
    %v1870 = vand.u32 %v40, 4294901760
    %1871 = vmatmul.mubr.f32.gmra.mrb[0].mxu0 %v1870
    %v1872 = vpop.f32.mrb[0].mxu0
    %v1873 = vadd.f32 %v1600, %v1872
    %v1874 = vpop.f32.mrb[0].mxu0
    %1875 = vmatprep.mubr.f32.mxu0 0.0
    %v1876 = vand.u32 %v41, 4294901760
    %1877 = vmatmul.mubr.f32.gmra.mrb[0].mxu0 %v1876
    %v1878 = vpop.f32.mrb[0].mxu0
    %v1879 = vadd.f32 %v1606, %v1878
    %v1880 = vpop.f32.mrb[0].mxu0
    %1881 = vmatprep.mubr.f32.mxu0 0.0
    %v1882 = vand.u32 %v42, 4294901760
    %1883 = vmatmul.mubr.f32.gmra.mrb[0].mxu0 %v1882
    %v1884 = vpop.f32.mrb[0].mxu0
    %v1885 = vadd.f32 %v1612, %v1884
    %v1886 = vpop.f32.mrb[0].mxu0
    %1887 = vmatprep.mubr.f32.mxu0 0.0
    %v1888 = vand.u32 %v43, 4294901760
    %1889 = vmatmul.mubr.f32.gmra.mrb[0].mxu0 %v1888
    %v1890 = vpop.f32.mrb[0].mxu0
    %v1891 = vadd.f32 %v1618, %v1890
    %v1892 = vpop.f32.mrb[0].mxu0
    %1893 = vmatprep.mubr.f32.mxu0 0.0
    %v1894 = vand.u32 %v44, 4294901760
    %1895 = vmatmul.mubr.f32.gmra.mrb[0].mxu0 %v1894
    %v1896 = vpop.f32.mrb[0].mxu0
    %v1897 = vadd.f32 %v1624, %v1896
    %v1898 = vpop.f32.mrb[0].mxu0
    %1899 = vmatprep.mubr.f32.mxu0 0.0
    %v1900 = vand.u32 %v45, 4294901760
    %1901 = vmatmul.mubr.f32.gmra.mrb[0].mxu0 %v1900
    %v1902 = vpop.f32.mrb[0].mxu0
    %v1903 = vadd.f32 %v1630, %v1902
    %v1904 = vpop.f32.mrb[0].mxu0
    %1905 = vmatprep.mubr.f32.mxu0 0.0
    %v1906 = vand.u32 %v46, 4294901760
    %1907 = vmatmul.mubr.f32.gmra.mrb[0].mxu0 %v1906
    %v1908 = vpop.f32.mrb[0].mxu0
    %v1909 = vadd.f32 %v1636, %v1908
    %v1910 = vpop.f32.mrb[0].mxu0
    %1911 = vmatprep.mubr.f32.mxu0 0.0
    %v1912 = vand.u32 %v47, 4294901760
    %1913 = vmatmul.mubr.f32.gmra.mrb[0].mxu0 %v1912
    %v1914 = vpop.f32.mrb[0].mxu0
    %v1915 = vadd.f32 %v1642, %v1914
    %v1916 = vpop.f32.mrb[0].mxu0
    %1917 = vmatprep.mubr.f32.mxu0 0.0
    %v1918 = vand.u32 %v48, 4294901760
    %1919 = vmatmul.mubr.f32.gmra.mrb[0].mxu0 %v1918
    %v1920 = vpop.f32.mrb[0].mxu0
    %v1921 = vadd.f32 %v1648, %v1920
    %v1922 = vpop.f32.mrb[0].mxu0
    %1923 = vmatprep.mubr.f32.mxu0 0.0
    %v1924 = vand.u32 %v49, 4294901760
    %1925 = vmatmul.mubr.f32.gmra.mrb[0].mxu0 %v1924
    %v1926 = vpop.f32.mrb[0].mxu0
    %v1927 = vadd.f32 %v1654, %v1926
    %v1928 = vpop.f32.mrb[0].mxu0
    %1929 = vmatprep.mubr.f32.mxu0 0.0
    %v1930 = vand.u32 %v50, 4294901760
    %1931 = vmatmul.mubr.f32.gmra.mrb[0].mxu0 %v1930
    %v1932 = vpop.f32.mrb[0].mxu0
    %v1933 = vadd.f32 %v1660, %v1932
    %v1934 = vpop.f32.mrb[0].mxu0
    %1935 = vmatprep.mubr.f32.mxu0 0.0
    %v1936 = vand.u32 %v51, 4294901760
    %1937 = vmatmul.mubr.f32.gmra.mrb[0].mxu0 %v1936
    %v1938 = vpop.f32.mrb[0].mxu0
    %v1939 = vadd.f32 %v1666, %v1938
    %v1940 = vpop.f32.mrb[0].mxu0
    %1941 = vmatprep.mubr.f32.mxu0 0.0
    %v1942 = vand.u32 %v52, 4294901760
    %1943 = vmatmul.mubr.f32.gmra.mrb[0].mxu0 %v1942
    %v1944 = vpop.f32.mrb[0].mxu0
    %v1945 = vadd.f32 %v1672, %v1944
    %v1946 = vpop.f32.mrb[0].mxu0
    %1947 = vmatprep.mubr.f32.mxu0 0.0
    %v1948 = vand.u32 %v53, 4294901760
    %1949 = vmatmul.mubr.f32.gmra.mrb[0].mxu0 %v1948
    %v1950 = vpop.f32.mrb[0].mxu0
    %v1951 = vadd.f32 %v1678, %v1950
    %v1952 = vpop.f32.mrb[0].mxu0
    %1953 = vmatprep.mubr.f32.mxu0 0.0
    %v1954 = vand.u32 %v54, 4294901760
    %1955 = vmatmul.mubr.f32.gmra.mrb[0].mxu0 %v1954
    %v1956 = vpop.f32.mrb[0].mxu0
    %v1957 = vadd.f32 %v1684, %v1956
    %v1958 = vpop.f32.mrb[0].mxu0
    %1959 = vmatprep.mubr.f32.mxu0 0.0
    %v1960 = vand.u32 %v55, 4294901760
    %1961 = vmatmul.mubr.f32.gmra.mrb[0].mxu0 %v1960
    %v1962 = vpop.f32.mrb[0].mxu0
    %v1963 = vadd.f32 %v1690, %v1962
    %v1964 = vpop.f32.mrb[0].mxu0
    %1965 = vmatprep.mubr.f32.mxu0 0.0
    %v1966 = vand.u32 %v56, 4294901760
    %1967 = vmatmul.mubr.f32.gmra.mrb[0].mxu0 %v1966
    %v1968 = vpop.f32.mrb[0].mxu0
    %v1969 = vadd.f32 %v1696, %v1968
    %v1970 = vpop.f32.mrb[0].mxu0
    %1971 = vmatprep.mubr.f32.mxu0 0.0
    %v1972 = vand.u32 %v57, 4294901760
    %1973 = vmatmul.mubr.f32.gmra.mrb[0].mxu0 %v1972
    %v1974 = vpop.f32.mrb[0].mxu0
    %v1975 = vadd.f32 %v1702, %v1974
    %v1976 = vpop.f32.mrb[0].mxu0
    %1977 = vmatprep.mubr.f32.mxu0 0.0
    %v1978 = vand.u32 %v58, 4294901760
    %1979 = vmatmul.mubr.f32.gmra.mrb[0].mxu0 %v1978
    %v1980 = vpop.f32.mrb[0].mxu0
    %v1981 = vadd.f32 %v1708, %v1980
    %v1982 = vpop.f32.mrb[0].mxu0
    %1983 = vmatprep.mubr.f32.mxu0 0.0
    %v1984 = vand.u32 %v59, 4294901760
    %1985 = vmatmul.mubr.f32.gmra.mrb[0].mxu0 %v1984
    %v1986 = vpop.f32.mrb[0].mxu0
    %v1987 = vadd.f32 %v1714, %v1986
    %v1988 = vpop.f32.mrb[0].mxu0
    %1989 = vmatprep.mubr.f32.mxu0 0.0
    %v1990 = vand.u32 %v60, 4294901760
    %1991 = vmatmul.mubr.f32.gmra.mrb[0].mxu0 %v1990
    %v1992 = vpop.f32.mrb[0].mxu0
    %v1993 = vadd.f32 %v1720, %v1992
    %v1994 = vpop.f32.mrb[0].mxu0
    %1995 = vmatprep.mubr.f32.mxu0 0.0
    %v1996 = vand.u32 %v61, 4294901760
    %1997 = vmatmul.mubr.f32.gmra.mrb[0].mxu0 %v1996
    %v1998 = vpop.f32.mrb[0].mxu0
    %v1999 = vadd.f32 %v1726, %v1998
    %v2000 = vpop.f32.mrb[0].mxu0
    %2001 = vmatprep.mubr.f32.mxu0 0.0
    %v2002 = vand.u32 %v62, 4294901760
    %2003 = vmatmul.mubr.f32.gmra.mrb[0].mxu0 %v2002
    %v2004 = vpop.f32.mrb[0].mxu0
    %v2005 = vadd.f32 %v1732, %v2004
    %v2006 = vpop.f32.mrb[0].mxu0
    %2007 = vmatprep.mubr.f32.mxu0 0.0
    %v2008 = vand.u32 %v63, 4294901760
    %2009 = vmatmul.mubr.f32.gmra.mrb[0].mxu0 %v2008
    %v2010 = vpop.f32.mrb[0].mxu0
    %v2011 = vadd.f32 %v1738, %v2010
    %v2012 = vpop.f32.mrb[0].mxu0
    %2013 = vmatprep.mubr.f32.mxu0 0.0
    %v2014 = vand.u32 %v64, 4294901760
    %2015 = vmatmul.mubr.f32.gmra.mrb[0].mxu0 %v2014
    %v2016 = vpop.f32.mrb[0].mxu0
    %v2017 = vadd.f32 %v1744, %v2016
    %v2018 = vpop.f32.mrb[0].mxu0
    %2019 = vmatprep.mubr.f32.mxu0 0.0
    %v2020 = vand.u32 %v65, 4294901760
    %2021 = vmatmul.mubr.f32.gmra.mrb[0].mxu0 %v2020
    %v2022 = vpop.f32.mrb[0].mxu0
    %v2023 = vadd.f32 %v1750, %v2022
    %v2024 = vpop.f32.mrb[0].mxu0
    %2025 = vmatprep.mubr.f32.mxu0 0.0
    %v2026 = vand.u32 %v66, 4294901760
    %2027 = vmatmul.mubr.f32.gmra.mrb[0].mxu0 %v2026
    %v2028 = vpop.f32.mrb[0].mxu0
    %v2029 = vadd.f32 %v1756, %v2028
    %v2030 = vpop.f32.mrb[0].mxu0
    %2031 = vmatprep.mubr.f32.mxu0 0.0
    %v2032 = vand.u32 %v67, 4294901760
    %2033 = vmatmul.mubr.f32.gmra.mrb[0].mxu0 %v2032
    %v2034 = vpop.f32.mrb[0].mxu0
    %v2035 = vadd.f32 %v1762, %v2034
    %v2036 = vpop.f32.mrb[0].mxu0
    %2037 = vmatprep.mubr.f32.mxu0 0.0
    %v2038 = vand.u32 %v68, 4294901760
    %2039 = vmatmul.mubr.f32.gmra.mrb[0].mxu0 %v2038
    %v2040 = vpop.f32.mrb[0].mxu0
    %v2041 = vadd.f32 %v1768, %v2040
    %v2042 = vpop.f32.mrb[0].mxu0
    %2043 = vmatprep.mubr.f32.mxu0 0.0
    %v2044 = vand.u32 %v69, 4294901760
    %2045 = vmatmul.mubr.f32.gmra.mrb[0].mxu0 %v2044
    %v2046 = vpop.f32.mrb[0].mxu0
    %v2047 = vadd.f32 %v1774, %v2046
    %v2048 = vpop.f32.mrb[0].mxu0
    %2049 = vmatprep.mubr.f32.mxu0 0.0
    %v2050 = vand.u32 %v70, 4294901760
    %2051 = vmatmul.mubr.f32.gmra.mrb[0].mxu0 %v2050
    %v2052 = vpop.f32.mrb[0].mxu0
    %v2053 = vadd.f32 %v1780, %v2052
    %v2054 = vpop.f32.mrb[0].mxu0
    %2055 = vmatprep.mubr.f32.mxu0 0.0
    %v2056 = vand.u32 %v71, 4294901760
    %2057 = vmatmul.mubr.f32.gmra.mrb[0].mxu0 %v2056
    %v2058 = vpop.f32.mrb[0].mxu0
    %v2059 = vadd.f32 %v1786, %v2058
    %v2060 = vpop.f32.mrb[0].mxu0
    %2061 = vdwg.mxu0
    %2062 = vst [vmem:[#allocation7] sm:$0xff] %v1873
    %2063 = vst [vmem:[#allocation7 + $0x8] sm:$0xff] %v1879
    %2064 = vst [vmem:[#allocation7 + $0x10] sm:$0xff] %v1885
    %2065 = vst [vmem:[#allocation7 + $0x18] sm:$0xff] %v1891
    %2066 = vst [vmem:[#allocation7 + $0x20] sm:$0xff] %v1897
    %2067 = vst [vmem:[#allocation7 + $0x28] sm:$0xff] %v1903
    %2068 = vst [vmem:[#allocation7 + $0x30] sm:$0xff] %v1909
    %2069 = vst [vmem:[#allocation7 + $0x38] sm:$0xff] %v1915
    %2070 = vst [vmem:[#allocation7 + $0x40] sm:$0xff] %v1921
    %2071 = vst [vmem:[#allocation7 + $0x48] sm:$0xff] %v1927
    %2072 = vst [vmem:[#allocation7 + $0x50] sm:$0xff] %v1933
    %2073 = vst [vmem:[#allocation7 + $0x58] sm:$0xff] %v1939
    %2074 = vst [vmem:[#allocation7 + $0x60] sm:$0xff] %v1945
    %2075 = vst [vmem:[#allocation7 + $0x68] sm:$0xff] %v1951
    %2076 = vst [vmem:[#allocation7 + $0x70] sm:$0xff] %v1957
    %2077 = vst [vmem:[#allocation7 + $0x78] sm:$0xff] %v1963
    %2078 = vst [vmem:[#allocation7 + $0x80] sm:$0xff] %v1969
    %2079 = vst [vmem:[#allocation7 + $0x88] sm:$0xff] %v1975
    %2080 = vst [vmem:[#allocation7 + $0x90] sm:$0xff] %v1981
    %2081 = vst [vmem:[#allocation7 + $0x98] sm:$0xff] %v1987
    %2082 = vst [vmem:[#allocation7 + $0xa0] sm:$0xff] %v1993
    %2083 = vst [vmem:[#allocation7 + $0xa8] sm:$0xff] %v1999
    %2084 = vst [vmem:[#allocation7 + $0xb0] sm:$0xff] %v2005
    %2085 = vst [vmem:[#allocation7 + $0xb8] sm:$0xff] %v2011
    %2086 = vst [vmem:[#allocation7 + $0xc0] sm:$0xff] %v2017
    %2087 = vst [vmem:[#allocation7 + $0xc8] sm:$0xff] %v2023
    %2088 = vst [vmem:[#allocation7 + $0xd0] sm:$0xff] %v2029
    %2089 = vst [vmem:[#allocation7 + $0xd8] sm:$0xff] %v2035
    %2090 = vst [vmem:[#allocation7 + $0xe0] sm:$0xff] %v2041
    %2091 = vst [vmem:[#allocation7 + $0xe8] sm:$0xff] %v2047
    %2092 = vst [vmem:[#allocation7 + $0xf0] sm:$0xff] %v2053
    %2093 = vst [vmem:[#allocation7 + $0xf8] sm:$0xff] %v2059
    // Predicated region
    $region18: #{tpu_custom_call.1} parent=1 // pred_check
      _
    $region19: #{tpu_custom_call.1} parent=1 // pred_check_branch
      %2095 = sbr.rel (0) target = $region21
    $region20: #{tpu_custom_call.1} parent=1 // pred_region
      %s2097 = ssub.s32 4096, 4096
      %2098 = vsyncadd [#allocation4], %s2097
      %s2099 = sshll.u32 [#allocation7], 4
      %s2100 = int_to_ptr.vmem [resolvable:$true] %s2099
      %2105 = dma.vmem_to_hbm [thread:$0]  %s2100, 4096, %s2, [#allocation4], 128, 128, 8
    $region21: #{tpu_custom_call.1} parent=1 // pred_fallthru
      _
    // Predicated region
    $region22: #{tpu_custom_call.1} parent=1 // pred_check
      _
    $region23: #{tpu_custom_call.1} parent=1 // pred_check_branch
      %2107 = sbr.rel (0) target = $region25
    $region24: #{tpu_custom_call.1} parent=1 // pred_region
      %2108 = dma.done [#allocation4], 4096
    $region25: #{tpu_custom_call.1} parent=1 // pred_fallthru
      _
    %2109 = vsyncpa [#allocation3], 1
    %2110 = vsyncpa [#allocation6], 1
    %2111 = vsyncpa [#allocation4], 1

// kernel: tpu_custom_call.1
$region0: #{tpu_custom_call.1}
  #allocation0 [shape = 'u32[]', space=smem, size = 0x4, offset = 0x4, fixed_abs, tag = 'smem constant byte address 0x4 - core index']
  #allocation1 [shape = 'u32[144,128]{1,0:T(1,128)}', space=vmem, size = 0x12000, scoped, tag = 'internal scratch']
  %s0 = inlined_call_operand.hbm [shape: f32[8,128], index: 0, kind: input, shape index: {}]
  %s1 = inlined_call_operand.hbm [shape: f32[128,128], index: 1, kind: input, shape index: {}]
  %s2 = inlined_call_operand.vmem [shape: f32[1,128], index: 2, kind: input, shape index: {}]
  %s3 = inlined_call_operand.vmem [shape: f32[1,128], index: 3, kind: input, shape index: {}]
  %s4 = inlined_call_operand.hbm [shape: f32[8,128], index: 4, kind: output, shape index: {}]
  %s5 = sld [smem:[#allocation0]]
  $region34: #{tpu_custom_call.1} parent=0
    _
  %s7 = ssub.s32 1, %s5
  %s8 = scalar_select 0, %s7, %s5
  $region1: #{tpu_custom_call.1} parent=0
    #allocation2 [shape = 'u8[4096]{0}', space=vmem, size = 0x1000, scoped, tag = 'input window, operand 0, single buffered']
    #allocation3 [shape = 's32[1]{0}', space=sflag, size = 0x4, scoped, tag = 'scoped memory for tpu_custom_call.1']
    #allocation4 [shape = 's32[1]{0}', space=sflag, size = 0x4, scoped, tag = 'scoped memory for tpu_custom_call.1']
    #allocation5 [shape = 'u8[65536]{0}', space=vmem, size = 0x10000, scoped, tag = 'input window, operand 1, single buffered']
    #allocation6 [shape = 's32[1]{0}', space=sflag, size = 0x4, scoped, tag = 'scoped memory for tpu_custom_call.1']
    #allocation7 [shape = 'u8[4096]{0}', space=vmem, size = 0x1000, scoped, tag = 'output window, operand 0, single buffered']
    %9 = vsyncpa [#allocation3], 0
    %10 = vsyncpa [#allocation6], 0
    %11 = vsyncpa [#allocation4], 0
    // Predicated region
    $region2: #{tpu_custom_call.1} parent=1 // pred_check
      _
    $region3: #{tpu_custom_call.1} parent=1 // pred_check_branch
      %13 = sbr.rel (0) target = $region5
    $region4: #{tpu_custom_call.1} parent=1 // pred_region
      %s15 = ssub.s32 128, 128
      %16 = vsyncadd [#allocation3], %s15
      %s18 = sshll.u32 [#allocation2], 4
      %s19 = int_to_ptr.vmem [resolvable:$true] %s18
      %21 = dma.hbm_to_vmem [thread:$0]  %s0, 128, %s19, [#allocation3]
    $region5: #{tpu_custom_call.1} parent=1 // pred_fallthru
      _
    // Predicated region
    $region6: #{tpu_custom_call.1} parent=1 // pred_check
      _
    $region7: #{tpu_custom_call.1} parent=1 // pred_check_branch
      %23 = sbr.rel (0) target = $region9
    $region8: #{tpu_custom_call.1} parent=1 // pred_region
      %s25 = ssub.s32 2048, 2048
      %26 = vsyncadd [#allocation6], %s25
      %s27 = sshll.u32 [#allocation5], 4
      %s28 = int_to_ptr.vmem [resolvable:$true] %s27
      %33 = dma.hbm_to_vmem [thread:$0]  %s1, 2048, %s28, [#allocation6], 128, 128, 8
    $region9: #{tpu_custom_call.1} parent=1 // pred_fallthru
      _
    // Predicated region
    $region10: #{tpu_custom_call.1} parent=1 // pred_check
      _
    $region11: #{tpu_custom_call.1} parent=1 // pred_check_branch
      %35 = sbr.rel (0) target = $region13
    $region12: #{tpu_custom_call.1} parent=1 // pred_region
      _
    $region13: #{tpu_custom_call.1} parent=1 // pred_fallthru
      _
    // Predicated region
    $region14: #{tpu_custom_call.1} parent=1 // pred_check
      _
    $region15: #{tpu_custom_call.1} parent=1 // pred_check_branch
      %37 = sbr.rel (0) target = $region17
    $region16: #{tpu_custom_call.1} parent=1 // pred_region
      _
    $region17: #{tpu_custom_call.1} parent=1 // pred_fallthru
      _
    // Predicated region
    $region18: #{tpu_custom_call.1} parent=1 // pred_check
      _
    $region19: #{tpu_custom_call.1} parent=1 // pred_check_branch
      %39 = sbr.rel (0) target = $region21
    $region20: #{tpu_custom_call.1} parent=1 // pred_region
      %40 = dma.done [#allocation3], 128
    $region21: #{tpu_custom_call.1} parent=1 // pred_fallthru
      _
    // Predicated region
    $region22: #{tpu_custom_call.1} parent=1 // pred_check
      _
    $region23: #{tpu_custom_call.1} parent=1 // pred_check_branch
      %42 = sbr.rel (0) target = $region25
    $region24: #{tpu_custom_call.1} parent=1 // pred_region
      %43 = dma.done [#allocation6], 2048
    $region25: #{tpu_custom_call.1} parent=1 // pred_fallthru
      _
    %v44 = vld [vmem:[#allocation2] sm:$0xff]
    %v45 = vld [vmem:[#allocation5] sm:$0xff]
    %v46 = vld [vmem:[#allocation5 + $0x8] sm:$0xff]
    %v47 = vld [vmem:[#allocation5 + $0x10] sm:$0xff]
    %v48 = vld [vmem:[#allocation5 + $0x18] sm:$0xff]
    %v49 = vld [vmem:[#allocation5 + $0x20] sm:$0xff]
    %v50 = vld [vmem:[#allocation5 + $0x28] sm:$0xff]
    %v51 = vld [vmem:[#allocation5 + $0x30] sm:$0xff]
    %v52 = vld [vmem:[#allocation5 + $0x38] sm:$0xff]
    %v53 = vld [vmem:[#allocation5 + $0x40] sm:$0xff]
    %v54 = vld [vmem:[#allocation5 + $0x48] sm:$0xff]
    %v55 = vld [vmem:[#allocation5 + $0x50] sm:$0xff]
    %v56 = vld [vmem:[#allocation5 + $0x58] sm:$0xff]
    %v57 = vld [vmem:[#allocation5 + $0x60] sm:$0xff]
    %v58 = vld [vmem:[#allocation5 + $0x68] sm:$0xff]
    %v59 = vld [vmem:[#allocation5 + $0x70] sm:$0xff]
    %v60 = vld [vmem:[#allocation5 + $0x78] sm:$0xff]
    %61 = vmatprep.subr.mxu0 0.0
    %v62 = vand.u32 %v45, 4294901760
    %63 = vmatpush1.msra.mxu0 %v62
    %64 = vmatprep.subr.mxu0 0.0
    %v65 = vand.u32 %v46, 4294901760
    %66 = vmatpush1.msra.mxu0 %v65
    %67 = vmatprep.subr.mxu0 0.0
    %v68 = vand.u32 %v47, 4294901760
    %69 = vmatpush1.msra.mxu0 %v68
    %70 = vmatprep.subr.mxu0 0.0
    %v71 = vand.u32 %v48, 4294901760
    %72 = vmatpush1.msra.mxu0 %v71
    %73 = vmatprep.subr.mxu0 0.0
    %v74 = vand.u32 %v49, 4294901760
    %75 = vmatpush1.msra.mxu0 %v74
    %76 = vmatprep.subr.mxu0 0.0
    %v77 = vand.u32 %v50, 4294901760
    %78 = vmatpush1.msra.mxu0 %v77
    %79 = vmatprep.subr.mxu0 0.0
    %v80 = vand.u32 %v51, 4294901760
    %81 = vmatpush1.msra.mxu0 %v80
    %82 = vmatprep.subr.mxu0 0.0
    %v83 = vand.u32 %v52, 4294901760
    %84 = vmatpush1.msra.mxu0 %v83
    %85 = vmatprep.subr.mxu0 0.0
    %v86 = vand.u32 %v53, 4294901760
    %87 = vmatpush1.msra.mxu0 %v86
    %88 = vmatprep.subr.mxu0 0.0
    %v89 = vand.u32 %v54, 4294901760
    %90 = vmatpush1.msra.mxu0 %v89
    %91 = vmatprep.subr.mxu0 0.0
    %v92 = vand.u32 %v55, 4294901760
    %93 = vmatpush1.msra.mxu0 %v92
    %94 = vmatprep.subr.mxu0 0.0
    %v95 = vand.u32 %v56, 4294901760
    %96 = vmatpush1.msra.mxu0 %v95
    %97 = vmatprep.subr.mxu0 0.0
    %v98 = vand.u32 %v57, 4294901760
    %99 = vmatpush1.msra.mxu0 %v98
    %100 = vmatprep.subr.mxu0 0.0
    %v101 = vand.u32 %v58, 4294901760
    %102 = vmatpush1.msra.mxu0 %v101
    %103 = vmatprep.subr.mxu0 0.0
    %v104 = vand.u32 %v59, 4294901760
    %105 = vmatpush1.msra.mxu0 %v104
    %106 = vmatprep.subr.mxu0 0.0
    %v107 = vand.u32 %v60, 4294901760
    %108 = vmatpush1.msra.mxu0 %v107
    %109 = vmatprep.subr.mxu0 0.0
    %110 = vmatpush1.msra.mxu0 0.0
    %111 = vmatprep.subr.mxu0 0.0
    %112 = vmatpush1.msra.mxu0 0.0
    %113 = vmatprep.subr.mxu0 0.0
    %114 = vmatpush1.msra.mxu0 0.0
    %115 = vmatprep.subr.mxu0 0.0
    %116 = vmatpush1.msra.mxu0 0.0
    %117 = vmatprep.subr.mxu0 0.0
    %118 = vmatpush1.msra.mxu0 0.0
    %119 = vmatprep.subr.mxu0 0.0
    %120 = vmatpush1.msra.mxu0 0.0
    %121 = vmatprep.subr.mxu0 0.0
    %122 = vmatpush1.msra.mxu0 0.0
    %123 = vmatprep.subr.mxu0 0.0
    %124 = vmatpush1.msra.mxu0 0.0
    %125 = vmatprep.subr.mxu0 0.0
    %126 = vmatpush1.msra.mxu0 0.0
    %127 = vmatprep.subr.mxu0 0.0
    %128 = vmatpush1.msra.mxu0 0.0
    %129 = vmatprep.subr.mxu0 0.0
    %130 = vmatpush1.msra.mxu0 0.0
    %131 = vmatprep.subr.mxu0 0.0
    %132 = vmatpush1.msra.mxu0 0.0
    %133 = vmatprep.subr.mxu0 0.0
    %134 = vmatpush1.msra.mxu0 0.0
    %135 = vmatprep.subr.mxu0 0.0
    %136 = vmatpush1.msra.mxu0 0.0
    %137 = vmatprep.subr.mxu0 0.0
    %138 = vmatpush1.msra.mxu0 0.0
    %139 = vmatprep.subr.mxu0 0.0
    %140 = vmatpush1.msra.mxu0 0.0
    %141 = vmatprep.mubr.f32.mxu0 0.0
    %v142 = vand.u32 %v44, 4294901760
    %v143 = vsub.f32 %v44, %v142
    %v144 = vand.u32 %v143, 4294901760
    %v145 = vsub.f32 %v143, %v144
    %v146 = vand.u32 %v145, 4294901760
    %147 = vmatmul.mubr.f32.gmra.mrb[0].mxu0 %v146
    %v148 = vpop.f32.mrb[0].mxu0
    %v149 = vadd.f32 0.0, %v148
    %v150 = vpop.f32.mrb[0].mxu0
    %151 = vdwg.mxu0
    %152 = vmatprep.subr.mxu0 0.0
    %v153 = vand.u32 %v45, 4294901760
    %v154 = vsub.f32 %v45, %v153
    %v155 = vand.u32 %v154, 4294901760
    %v156 = vsub.f32 %v154, %v155
    %v157 = vand.u32 %v156, 4294901760
    %158 = vmatpush1.msra.mxu0 %v157
    %159 = vmatprep.subr.mxu0 0.0
    %v160 = vand.u32 %v46, 4294901760
    %v161 = vsub.f32 %v46, %v160
    %v162 = vand.u32 %v161, 4294901760
    %v163 = vsub.f32 %v161, %v162
    %v164 = vand.u32 %v163, 4294901760
    %165 = vmatpush1.msra.mxu0 %v164
    %166 = vmatprep.subr.mxu0 0.0
    %v167 = vand.u32 %v47, 4294901760
    %v168 = vsub.f32 %v47, %v167
    %v169 = vand.u32 %v168, 4294901760
    %v170 = vsub.f32 %v168, %v169
    %v171 = vand.u32 %v170, 4294901760
    %172 = vmatpush1.msra.mxu0 %v171
    %173 = vmatprep.subr.mxu0 0.0
    %v174 = vand.u32 %v48, 4294901760
    %v175 = vsub.f32 %v48, %v174
    %v176 = vand.u32 %v175, 4294901760
    %v177 = vsub.f32 %v175, %v176
    %v178 = vand.u32 %v177, 4294901760
    %179 = vmatpush1.msra.mxu0 %v178
    %180 = vmatprep.subr.mxu0 0.0
    %v181 = vand.u32 %v49, 4294901760
    %v182 = vsub.f32 %v49, %v181
    %v183 = vand.u32 %v182, 4294901760
    %v184 = vsub.f32 %v182, %v183
    %v185 = vand.u32 %v184, 4294901760
    %186 = vmatpush1.msra.mxu0 %v185
    %187 = vmatprep.subr.mxu0 0.0
    %v188 = vand.u32 %v50, 4294901760
    %v189 = vsub.f32 %v50, %v188
    %v190 = vand.u32 %v189, 4294901760
    %v191 = vsub.f32 %v189, %v190
    %v192 = vand.u32 %v191, 4294901760
    %193 = vmatpush1.msra.mxu0 %v192
    %194 = vmatprep.subr.mxu0 0.0
    %v195 = vand.u32 %v51, 4294901760
    %v196 = vsub.f32 %v51, %v195
    %v197 = vand.u32 %v196, 4294901760
    %v198 = vsub.f32 %v196, %v197
    %v199 = vand.u32 %v198, 4294901760
    %200 = vmatpush1.msra.mxu0 %v199
    %201 = vmatprep.subr.mxu0 0.0
    %v202 = vand.u32 %v52, 4294901760
    %v203 = vsub.f32 %v52, %v202
    %v204 = vand.u32 %v203, 4294901760
    %v205 = vsub.f32 %v203, %v204
    %v206 = vand.u32 %v205, 4294901760
    %207 = vmatpush1.msra.mxu0 %v206
    %208 = vmatprep.subr.mxu0 0.0
    %v209 = vand.u32 %v53, 4294901760
    %v210 = vsub.f32 %v53, %v209
    %v211 = vand.u32 %v210, 4294901760
    %v212 = vsub.f32 %v210, %v211
    %v213 = vand.u32 %v212, 4294901760
    %214 = vmatpush1.msra.mxu0 %v213
    %215 = vmatprep.subr.mxu0 0.0
    %v216 = vand.u32 %v54, 4294901760
    %v217 = vsub.f32 %v54, %v216
    %v218 = vand.u32 %v217, 4294901760
    %v219 = vsub.f32 %v217, %v218
    %v220 = vand.u32 %v219, 4294901760
    %221 = vmatpush1.msra.mxu0 %v220
    %222 = vmatprep.subr.mxu0 0.0
    %v223 = vand.u32 %v55, 4294901760
    %v224 = vsub.f32 %v55, %v223
    %v225 = vand.u32 %v224, 4294901760
    %v226 = vsub.f32 %v224, %v225
    %v227 = vand.u32 %v226, 4294901760
    %228 = vmatpush1.msra.mxu0 %v227
    %229 = vmatprep.subr.mxu0 0.0
    %v230 = vand.u32 %v56, 4294901760
    %v231 = vsub.f32 %v56, %v230
    %v232 = vand.u32 %v231, 4294901760
    %v233 = vsub.f32 %v231, %v232
    %v234 = vand.u32 %v233, 4294901760
    %235 = vmatpush1.msra.mxu0 %v234
    %236 = vmatprep.subr.mxu0 0.0
    %v237 = vand.u32 %v57, 4294901760
    %v238 = vsub.f32 %v57, %v237
    %v239 = vand.u32 %v238, 4294901760
    %v240 = vsub.f32 %v238, %v239
    %v241 = vand.u32 %v240, 4294901760
    %242 = vmatpush1.msra.mxu0 %v241
    %243 = vmatprep.subr.mxu0 0.0
    %v244 = vand.u32 %v58, 4294901760
    %v245 = vsub.f32 %v58, %v244
    %v246 = vand.u32 %v245, 4294901760
    %v247 = vsub.f32 %v245, %v246
    %v248 = vand.u32 %v247, 4294901760
    %249 = vmatpush1.msra.mxu0 %v248
    %250 = vmatprep.subr.mxu0 0.0
    %v251 = vand.u32 %v59, 4294901760
    %v252 = vsub.f32 %v59, %v251
    %v253 = vand.u32 %v252, 4294901760
    %v254 = vsub.f32 %v252, %v253
    %v255 = vand.u32 %v254, 4294901760
    %256 = vmatpush1.msra.mxu0 %v255
    %257 = vmatprep.subr.mxu0 0.0
    %v258 = vand.u32 %v60, 4294901760
    %v259 = vsub.f32 %v60, %v258
    %v260 = vand.u32 %v259, 4294901760
    %v261 = vsub.f32 %v259, %v260
    %v262 = vand.u32 %v261, 4294901760
    %263 = vmatpush1.msra.mxu0 %v262
    %264 = vmatprep.subr.mxu0 0.0
    %265 = vmatpush1.msra.mxu0 0.0
    %266 = vmatprep.subr.mxu0 0.0
    %267 = vmatpush1.msra.mxu0 0.0
    %268 = vmatprep.subr.mxu0 0.0
    %269 = vmatpush1.msra.mxu0 0.0
    %270 = vmatprep.subr.mxu0 0.0
    %271 = vmatpush1.msra.mxu0 0.0
    %272 = vmatprep.subr.mxu0 0.0
    %273 = vmatpush1.msra.mxu0 0.0
    %274 = vmatprep.subr.mxu0 0.0
    %275 = vmatpush1.msra.mxu0 0.0
    %276 = vmatprep.subr.mxu0 0.0
    %277 = vmatpush1.msra.mxu0 0.0
    %278 = vmatprep.subr.mxu0 0.0
    %279 = vmatpush1.msra.mxu0 0.0
    %280 = vmatprep.subr.mxu0 0.0
    %281 = vmatpush1.msra.mxu0 0.0
    %282 = vmatprep.subr.mxu0 0.0
    %283 = vmatpush1.msra.mxu0 0.0
    %284 = vmatprep.subr.mxu0 0.0
    %285 = vmatpush1.msra.mxu0 0.0
    %286 = vmatprep.subr.mxu0 0.0
    %287 = vmatpush1.msra.mxu0 0.0
    %288 = vmatprep.subr.mxu0 0.0
    %289 = vmatpush1.msra.mxu0 0.0
    %290 = vmatprep.subr.mxu0 0.0
    %291 = vmatpush1.msra.mxu0 0.0
    %292 = vmatprep.subr.mxu0 0.0
    %293 = vmatpush1.msra.mxu0 0.0
    %294 = vmatprep.subr.mxu0 0.0
    %295 = vmatpush1.msra.mxu0 0.0
    %296 = vmatprep.mubr.f32.mxu0 0.0
    %v297 = vand.u32 %v44, 4294901760
    %298 = vmatmul.mubr.f32.gmra.mrb[0].mxu0 %v297
    %v299 = vpop.f32.mrb[0].mxu0
    %v300 = vadd.f32 %v149, %v299
    %v301 = vpop.f32.mrb[0].mxu0
    %302 = vdwg.mxu0
    %303 = vmatprep.subr.mxu0 0.0
    %v304 = vand.u32 %v45, 4294901760
    %v305 = vsub.f32 %v45, %v304
    %306 = vmatpush1.msra.mxu0 %v305
    %307 = vmatprep.subr.mxu0 0.0
    %v308 = vand.u32 %v46, 4294901760
    %v309 = vsub.f32 %v46, %v308
    %310 = vmatpush1.msra.mxu0 %v309
    %311 = vmatprep.subr.mxu0 0.0
    %v312 = vand.u32 %v47, 4294901760
    %v313 = vsub.f32 %v47, %v312
    %314 = vmatpush1.msra.mxu0 %v313
    %315 = vmatprep.subr.mxu0 0.0
    %v316 = vand.u32 %v48, 4294901760
    %v317 = vsub.f32 %v48, %v316
    %318 = vmatpush1.msra.mxu0 %v317
    %319 = vmatprep.subr.mxu0 0.0
    %v320 = vand.u32 %v49, 4294901760
    %v321 = vsub.f32 %v49, %v320
    %322 = vmatpush1.msra.mxu0 %v321
    %323 = vmatprep.subr.mxu0 0.0
    %v324 = vand.u32 %v50, 4294901760
    %v325 = vsub.f32 %v50, %v324
    %326 = vmatpush1.msra.mxu0 %v325
    %327 = vmatprep.subr.mxu0 0.0
    %v328 = vand.u32 %v51, 4294901760
    %v329 = vsub.f32 %v51, %v328
    %330 = vmatpush1.msra.mxu0 %v329
    %331 = vmatprep.subr.mxu0 0.0
    %v332 = vand.u32 %v52, 4294901760
    %v333 = vsub.f32 %v52, %v332
    %334 = vmatpush1.msra.mxu0 %v333
    %335 = vmatprep.subr.mxu0 0.0
    %v336 = vand.u32 %v53, 4294901760
    %v337 = vsub.f32 %v53, %v336
    %338 = vmatpush1.msra.mxu0 %v337
    %339 = vmatprep.subr.mxu0 0.0
    %v340 = vand.u32 %v54, 4294901760
    %v341 = vsub.f32 %v54, %v340
    %342 = vmatpush1.msra.mxu0 %v341
    %343 = vmatprep.subr.mxu0 0.0
    %v344 = vand.u32 %v55, 4294901760
    %v345 = vsub.f32 %v55, %v344
    %346 = vmatpush1.msra.mxu0 %v345
    %347 = vmatprep.subr.mxu0 0.0
    %v348 = vand.u32 %v56, 4294901760
    %v349 = vsub.f32 %v56, %v348
    %350 = vmatpush1.msra.mxu0 %v349
    %351 = vmatprep.subr.mxu0 0.0
    %v352 = vand.u32 %v57, 4294901760
    %v353 = vsub.f32 %v57, %v352
    %354 = vmatpush1.msra.mxu0 %v353
    %355 = vmatprep.subr.mxu0 0.0
    %v356 = vand.u32 %v58, 4294901760
    %v357 = vsub.f32 %v58, %v356
    %358 = vmatpush1.msra.mxu0 %v357
    %359 = vmatprep.subr.mxu0 0.0
    %v360 = vand.u32 %v59, 4294901760
    %v361 = vsub.f32 %v59, %v360
    %362 = vmatpush1.msra.mxu0 %v361
    %363 = vmatprep.subr.mxu0 0.0
    %v364 = vand.u32 %v60, 4294901760
    %v365 = vsub.f32 %v60, %v364
    %366 = vmatpush1.msra.mxu0 %v365
    %367 = vmatprep.subr.mxu0 0.0
    %368 = vmatpush1.msra.mxu0 0.0
    %369 = vmatprep.subr.mxu0 0.0
    %370 = vmatpush1.msra.mxu0 0.0
    %371 = vmatprep.subr.mxu0 0.0
    %372 = vmatpush1.msra.mxu0 0.0
    %373 = vmatprep.subr.mxu0 0.0
    %374 = vmatpush1.msra.mxu0 0.0
    %375 = vmatprep.subr.mxu0 0.0
    %376 = vmatpush1.msra.mxu0 0.0
    %377 = vmatprep.subr.mxu0 0.0
    %378 = vmatpush1.msra.mxu0 0.0
    %379 = vmatprep.subr.mxu0 0.0
    %380 = vmatpush1.msra.mxu0 0.0
    %381 = vmatprep.subr.mxu0 0.0
    %382 = vmatpush1.msra.mxu0 0.0
    %383 = vmatprep.subr.mxu0 0.0
    %384 = vmatpush1.msra.mxu0 0.0
    %385 = vmatprep.subr.mxu0 0.0
    %386 = vmatpush1.msra.mxu0 0.0
    %387 = vmatprep.subr.mxu0 0.0
    %388 = vmatpush1.msra.mxu0 0.0
    %389 = vmatprep.subr.mxu0 0.0
    %390 = vmatpush1.msra.mxu0 0.0
    %391 = vmatprep.subr.mxu0 0.0
    %392 = vmatpush1.msra.mxu0 0.0
    %393 = vmatprep.subr.mxu0 0.0
    %394 = vmatpush1.msra.mxu0 0.0
    %395 = vmatprep.subr.mxu0 0.0
    %396 = vmatpush1.msra.mxu0 0.0
    %397 = vmatprep.subr.mxu0 0.0
    %398 = vmatpush1.msra.mxu0 0.0
    %399 = vmatprep.mubr.f32.mxu0 0.0
    %v400 = vand.u32 %v44, 4294901760
    %v401 = vsub.f32 %v44, %v400
    %402 = vmatmul.mubr.f32.gmra.mrb[0].mxu0 %v401
    %v403 = vpop.f32.mrb[0].mxu0
    %v404 = vadd.f32 %v300, %v403
    %v405 = vpop.f32.mrb[0].mxu0
    %406 = vdwg.mxu0
    %407 = vmatprep.subr.mxu0 0.0
    %v408 = vand.u32 %v45, 4294901760
    %409 = vmatpush1.msra.mxu0 %v408
    %410 = vmatprep.subr.mxu0 0.0
    %v411 = vand.u32 %v46, 4294901760
    %412 = vmatpush1.msra.mxu0 %v411
    %413 = vmatprep.subr.mxu0 0.0
    %v414 = vand.u32 %v47, 4294901760
    %415 = vmatpush1.msra.mxu0 %v414
    %416 = vmatprep.subr.mxu0 0.0
    %v417 = vand.u32 %v48, 4294901760
    %418 = vmatpush1.msra.mxu0 %v417
    %419 = vmatprep.subr.mxu0 0.0
    %v420 = vand.u32 %v49, 4294901760
    %421 = vmatpush1.msra.mxu0 %v420
    %422 = vmatprep.subr.mxu0 0.0
    %v423 = vand.u32 %v50, 4294901760
    %424 = vmatpush1.msra.mxu0 %v423
    %425 = vmatprep.subr.mxu0 0.0
    %v426 = vand.u32 %v51, 4294901760
    %427 = vmatpush1.msra.mxu0 %v426
    %428 = vmatprep.subr.mxu0 0.0
    %v429 = vand.u32 %v52, 4294901760
    %430 = vmatpush1.msra.mxu0 %v429
    %431 = vmatprep.subr.mxu0 0.0
    %v432 = vand.u32 %v53, 4294901760
    %433 = vmatpush1.msra.mxu0 %v432
    %434 = vmatprep.subr.mxu0 0.0
    %v435 = vand.u32 %v54, 4294901760
    %436 = vmatpush1.msra.mxu0 %v435
    %437 = vmatprep.subr.mxu0 0.0
    %v438 = vand.u32 %v55, 4294901760
    %439 = vmatpush1.msra.mxu0 %v438
    %440 = vmatprep.subr.mxu0 0.0
    %v441 = vand.u32 %v56, 4294901760
    %442 = vmatpush1.msra.mxu0 %v441
    %443 = vmatprep.subr.mxu0 0.0
    %v444 = vand.u32 %v57, 4294901760
    %445 = vmatpush1.msra.mxu0 %v444
    %446 = vmatprep.subr.mxu0 0.0
    %v447 = vand.u32 %v58, 4294901760
    %448 = vmatpush1.msra.mxu0 %v447
    %449 = vmatprep.subr.mxu0 0.0
    %v450 = vand.u32 %v59, 4294901760
    %451 = vmatpush1.msra.mxu0 %v450
    %452 = vmatprep.subr.mxu0 0.0
    %v453 = vand.u32 %v60, 4294901760
    %454 = vmatpush1.msra.mxu0 %v453
    %455 = vmatprep.subr.mxu0 0.0
    %456 = vmatpush1.msra.mxu0 0.0
    %457 = vmatprep.subr.mxu0 0.0
    %458 = vmatpush1.msra.mxu0 0.0
    %459 = vmatprep.subr.mxu0 0.0
    %460 = vmatpush1.msra.mxu0 0.0
    %461 = vmatprep.subr.mxu0 0.0
    %462 = vmatpush1.msra.mxu0 0.0
    %463 = vmatprep.subr.mxu0 0.0
    %464 = vmatpush1.msra.mxu0 0.0
    %465 = vmatprep.subr.mxu0 0.0
    %466 = vmatpush1.msra.mxu0 0.0
    %467 = vmatprep.subr.mxu0 0.0
    %468 = vmatpush1.msra.mxu0 0.0
    %469 = vmatprep.subr.mxu0 0.0
    %470 = vmatpush1.msra.mxu0 0.0
    %471 = vmatprep.subr.mxu0 0.0
    %472 = vmatpush1.msra.mxu0 0.0
    %473 = vmatprep.subr.mxu0 0.0
    %474 = vmatpush1.msra.mxu0 0.0
    %475 = vmatprep.subr.mxu0 0.0
    %476 = vmatpush1.msra.mxu0 0.0
    %477 = vmatprep.subr.mxu0 0.0
    %478 = vmatpush1.msra.mxu0 0.0
    %479 = vmatprep.subr.mxu0 0.0
    %480 = vmatpush1.msra.mxu0 0.0
    %481 = vmatprep.subr.mxu0 0.0
    %482 = vmatpush1.msra.mxu0 0.0
    %483 = vmatprep.subr.mxu0 0.0
    %484 = vmatpush1.msra.mxu0 0.0
    %485 = vmatprep.subr.mxu0 0.0
    %486 = vmatpush1.msra.mxu0 0.0
    %487 = vmatprep.mubr.f32.mxu0 0.0
    %v488 = vand.u32 %v44, 4294901760
    %v489 = vsub.f32 %v44, %v488
    %v490 = vand.u32 %v489, 4294901760
    %491 = vmatmul.mubr.f32.gmra.mrb[0].mxu0 %v490
    %v492 = vpop.f32.mrb[0].mxu0
    %v493 = vadd.f32 %v404, %v492
    %v494 = vpop.f32.mrb[0].mxu0
    %495 = vdwg.mxu0
    %496 = vmatprep.subr.mxu0 0.0
    %v497 = vand.u32 %v45, 4294901760
    %v498 = vsub.f32 %v45, %v497
    %v499 = vand.u32 %v498, 4294901760
    %500 = vmatpush1.msra.mxu0 %v499
    %501 = vmatprep.subr.mxu0 0.0
    %v502 = vand.u32 %v46, 4294901760
    %v503 = vsub.f32 %v46, %v502
    %v504 = vand.u32 %v503, 4294901760
    %505 = vmatpush1.msra.mxu0 %v504
    %506 = vmatprep.subr.mxu0 0.0
    %v507 = vand.u32 %v47, 4294901760
    %v508 = vsub.f32 %v47, %v507
    %v509 = vand.u32 %v508, 4294901760
    %510 = vmatpush1.msra.mxu0 %v509
    %511 = vmatprep.subr.mxu0 0.0
    %v512 = vand.u32 %v48, 4294901760
    %v513 = vsub.f32 %v48, %v512
    %v514 = vand.u32 %v513, 4294901760
    %515 = vmatpush1.msra.mxu0 %v514
    %516 = vmatprep.subr.mxu0 0.0
    %v517 = vand.u32 %v49, 4294901760
    %v518 = vsub.f32 %v49, %v517
    %v519 = vand.u32 %v518, 4294901760
    %520 = vmatpush1.msra.mxu0 %v519
    %521 = vmatprep.subr.mxu0 0.0
    %v522 = vand.u32 %v50, 4294901760
    %v523 = vsub.f32 %v50, %v522
    %v524 = vand.u32 %v523, 4294901760
    %525 = vmatpush1.msra.mxu0 %v524
    %526 = vmatprep.subr.mxu0 0.0
    %v527 = vand.u32 %v51, 4294901760
    %v528 = vsub.f32 %v51, %v527
    %v529 = vand.u32 %v528, 4294901760
    %530 = vmatpush1.msra.mxu0 %v529
    %531 = vmatprep.subr.mxu0 0.0
    %v532 = vand.u32 %v52, 4294901760
    %v533 = vsub.f32 %v52, %v532
    %v534 = vand.u32 %v533, 4294901760
    %535 = vmatpush1.msra.mxu0 %v534
    %536 = vmatprep.subr.mxu0 0.0
    %v537 = vand.u32 %v53, 4294901760
    %v538 = vsub.f32 %v53, %v537
    %v539 = vand.u32 %v538, 4294901760
    %540 = vmatpush1.msra.mxu0 %v539
    %541 = vmatprep.subr.mxu0 0.0
    %v542 = vand.u32 %v54, 4294901760
    %v543 = vsub.f32 %v54, %v542
    %v544 = vand.u32 %v543, 4294901760
    %545 = vmatpush1.msra.mxu0 %v544
    %546 = vmatprep.subr.mxu0 0.0
    %v547 = vand.u32 %v55, 4294901760
    %v548 = vsub.f32 %v55, %v547
    %v549 = vand.u32 %v548, 4294901760
    %550 = vmatpush1.msra.mxu0 %v549
    %551 = vmatprep.subr.mxu0 0.0
    %v552 = vand.u32 %v56, 4294901760
    %v553 = vsub.f32 %v56, %v552
    %v554 = vand.u32 %v553, 4294901760
    %555 = vmatpush1.msra.mxu0 %v554
    %556 = vmatprep.subr.mxu0 0.0
    %v557 = vand.u32 %v57, 4294901760
    %v558 = vsub.f32 %v57, %v557
    %v559 = vand.u32 %v558, 4294901760
    %560 = vmatpush1.msra.mxu0 %v559
    %561 = vmatprep.subr.mxu0 0.0
    %v562 = vand.u32 %v58, 4294901760
    %v563 = vsub.f32 %v58, %v562
    %v564 = vand.u32 %v563, 4294901760
    %565 = vmatpush1.msra.mxu0 %v564
    %566 = vmatprep.subr.mxu0 0.0
    %v567 = vand.u32 %v59, 4294901760
    %v568 = vsub.f32 %v59, %v567
    %v569 = vand.u32 %v568, 4294901760
    %570 = vmatpush1.msra.mxu0 %v569
    %571 = vmatprep.subr.mxu0 0.0
    %v572 = vand.u32 %v60, 4294901760
    %v573 = vsub.f32 %v60, %v572
    %v574 = vand.u32 %v573, 4294901760
    %575 = vmatpush1.msra.mxu0 %v574
    %576 = vmatprep.subr.mxu0 0.0
    %577 = vmatpush1.msra.mxu0 0.0
    %578 = vmatprep.subr.mxu0 0.0
    %579 = vmatpush1.msra.mxu0 0.0
    %580 = vmatprep.subr.mxu0 0.0
    %581 = vmatpush1.msra.mxu0 0.0
    %582 = vmatprep.subr.mxu0 0.0
    %583 = vmatpush1.msra.mxu0 0.0
    %584 = vmatprep.subr.mxu0 0.0
    %585 = vmatpush1.msra.mxu0 0.0
    %586 = vmatprep.subr.mxu0 0.0
    %587 = vmatpush1.msra.mxu0 0.0
    %588 = vmatprep.subr.mxu0 0.0
    %589 = vmatpush1.msra.mxu0 0.0
    %590 = vmatprep.subr.mxu0 0.0
    %591 = vmatpush1.msra.mxu0 0.0
    %592 = vmatprep.subr.mxu0 0.0
    %593 = vmatpush1.msra.mxu0 0.0
    %594 = vmatprep.subr.mxu0 0.0
    %595 = vmatpush1.msra.mxu0 0.0
    %596 = vmatprep.subr.mxu0 0.0
    %597 = vmatpush1.msra.mxu0 0.0
    %598 = vmatprep.subr.mxu0 0.0
    %599 = vmatpush1.msra.mxu0 0.0
    %600 = vmatprep.subr.mxu0 0.0
    %601 = vmatpush1.msra.mxu0 0.0
    %602 = vmatprep.subr.mxu0 0.0
    %603 = vmatpush1.msra.mxu0 0.0
    %604 = vmatprep.subr.mxu0 0.0
    %605 = vmatpush1.msra.mxu0 0.0
    %606 = vmatprep.subr.mxu0 0.0
    %607 = vmatpush1.msra.mxu0 0.0
    %608 = vmatprep.mubr.f32.mxu0 0.0
    %v609 = vand.u32 %v44, 4294901760
    %610 = vmatmul.mubr.f32.gmra.mrb[0].mxu0 %v609
    %v611 = vpop.f32.mrb[0].mxu0
    %v612 = vadd.f32 %v493, %v611
    %v613 = vpop.f32.mrb[0].mxu0
    %614 = vdwg.mxu0
    %615 = vmatprep.subr.mxu0 0.0
    %v616 = vand.u32 %v45, 4294901760
    %617 = vmatpush1.msra.mxu0 %v616
    %618 = vmatprep.subr.mxu0 0.0
    %v619 = vand.u32 %v46, 4294901760
    %620 = vmatpush1.msra.mxu0 %v619
    %621 = vmatprep.subr.mxu0 0.0
    %v622 = vand.u32 %v47, 4294901760
    %623 = vmatpush1.msra.mxu0 %v622
    %624 = vmatprep.subr.mxu0 0.0
    %v625 = vand.u32 %v48, 4294901760
    %626 = vmatpush1.msra.mxu0 %v625
    %627 = vmatprep.subr.mxu0 0.0
    %v628 = vand.u32 %v49, 4294901760
    %629 = vmatpush1.msra.mxu0 %v628
    %630 = vmatprep.subr.mxu0 0.0
    %v631 = vand.u32 %v50, 4294901760
    %632 = vmatpush1.msra.mxu0 %v631
    %633 = vmatprep.subr.mxu0 0.0
    %v634 = vand.u32 %v51, 4294901760
    %635 = vmatpush1.msra.mxu0 %v634
    %636 = vmatprep.subr.mxu0 0.0
    %v637 = vand.u32 %v52, 4294901760
    %638 = vmatpush1.msra.mxu0 %v637
    %639 = vmatprep.subr.mxu0 0.0
    %v640 = vand.u32 %v53, 4294901760
    %641 = vmatpush1.msra.mxu0 %v640
    %642 = vmatprep.subr.mxu0 0.0
    %v643 = vand.u32 %v54, 4294901760
    %644 = vmatpush1.msra.mxu0 %v643
    %645 = vmatprep.subr.mxu0 0.0
    %v646 = vand.u32 %v55, 4294901760
    %647 = vmatpush1.msra.mxu0 %v646
    %648 = vmatprep.subr.mxu0 0.0
    %v649 = vand.u32 %v56, 4294901760
    %650 = vmatpush1.msra.mxu0 %v649
    %651 = vmatprep.subr.mxu0 0.0
    %v652 = vand.u32 %v57, 4294901760
    %653 = vmatpush1.msra.mxu0 %v652
    %654 = vmatprep.subr.mxu0 0.0
    %v655 = vand.u32 %v58, 4294901760
    %656 = vmatpush1.msra.mxu0 %v655
    %657 = vmatprep.subr.mxu0 0.0
    %v658 = vand.u32 %v59, 4294901760
    %659 = vmatpush1.msra.mxu0 %v658
    %660 = vmatprep.subr.mxu0 0.0
    %v661 = vand.u32 %v60, 4294901760
    %662 = vmatpush1.msra.mxu0 %v661
    %663 = vmatprep.subr.mxu0 0.0
    %664 = vmatpush1.msra.mxu0 0.0
    %665 = vmatprep.subr.mxu0 0.0
    %666 = vmatpush1.msra.mxu0 0.0
    %667 = vmatprep.subr.mxu0 0.0
    %668 = vmatpush1.msra.mxu0 0.0
    %669 = vmatprep.subr.mxu0 0.0
    %670 = vmatpush1.msra.mxu0 0.0
    %671 = vmatprep.subr.mxu0 0.0
    %672 = vmatpush1.msra.mxu0 0.0
    %673 = vmatprep.subr.mxu0 0.0
    %674 = vmatpush1.msra.mxu0 0.0
    %675 = vmatprep.subr.mxu0 0.0
    %676 = vmatpush1.msra.mxu0 0.0
    %677 = vmatprep.subr.mxu0 0.0
    %678 = vmatpush1.msra.mxu0 0.0
    %679 = vmatprep.subr.mxu0 0.0
    %680 = vmatpush1.msra.mxu0 0.0
    %681 = vmatprep.subr.mxu0 0.0
    %682 = vmatpush1.msra.mxu0 0.0
    %683 = vmatprep.subr.mxu0 0.0
    %684 = vmatpush1.msra.mxu0 0.0
    %685 = vmatprep.subr.mxu0 0.0
    %686 = vmatpush1.msra.mxu0 0.0
    %687 = vmatprep.subr.mxu0 0.0
    %688 = vmatpush1.msra.mxu0 0.0
    %689 = vmatprep.subr.mxu0 0.0
    %690 = vmatpush1.msra.mxu0 0.0
    %691 = vmatprep.subr.mxu0 0.0
    %692 = vmatpush1.msra.mxu0 0.0
    %693 = vmatprep.subr.mxu0 0.0
    %694 = vmatpush1.msra.mxu0 0.0
    %695 = vmatprep.mubr.f32.mxu0 0.0
    %v696 = vand.u32 %v44, 4294901760
    %697 = vmatmul.mubr.f32.gmra.mrb[0].mxu0 %v696
    %v698 = vpop.f32.mrb[0].mxu0
    %v699 = vadd.f32 %v612, %v698
    %v700 = vpop.f32.mrb[0].mxu0
    %701 = vdwg.mxu0
    %v702 = vmul.f32 %v44, %v44
    %703 = vmatprep.subr.mxu0 0.0
    %v704 = vand.u32 %v45, 4294901760
    %705 = vmatpush1.msra.mxu0 %v704
    %706 = vmatprep.subr.mxu0 0.0
    %v707 = vand.u32 %v46, 4294901760
    %708 = vmatpush1.msra.mxu0 %v707
    %709 = vmatprep.subr.mxu0 0.0
    %v710 = vand.u32 %v47, 4294901760
    %711 = vmatpush1.msra.mxu0 %v710
    %712 = vmatprep.subr.mxu0 0.0
    %v713 = vand.u32 %v48, 4294901760
    %714 = vmatpush1.msra.mxu0 %v713
    %715 = vmatprep.subr.mxu0 0.0
    %v716 = vand.u32 %v49, 4294901760
    %717 = vmatpush1.msra.mxu0 %v716
    %718 = vmatprep.subr.mxu0 0.0
    %v719 = vand.u32 %v50, 4294901760
    %720 = vmatpush1.msra.mxu0 %v719
    %721 = vmatprep.subr.mxu0 0.0
    %v722 = vand.u32 %v51, 4294901760
    %723 = vmatpush1.msra.mxu0 %v722
    %724 = vmatprep.subr.mxu0 0.0
    %v725 = vand.u32 %v52, 4294901760
    %726 = vmatpush1.msra.mxu0 %v725
    %727 = vmatprep.subr.mxu0 0.0
    %v728 = vand.u32 %v53, 4294901760
    %729 = vmatpush1.msra.mxu0 %v728
    %730 = vmatprep.subr.mxu0 0.0
    %v731 = vand.u32 %v54, 4294901760
    %732 = vmatpush1.msra.mxu0 %v731
    %733 = vmatprep.subr.mxu0 0.0
    %v734 = vand.u32 %v55, 4294901760
    %735 = vmatpush1.msra.mxu0 %v734
    %736 = vmatprep.subr.mxu0 0.0
    %v737 = vand.u32 %v56, 4294901760
    %738 = vmatpush1.msra.mxu0 %v737
    %739 = vmatprep.subr.mxu0 0.0
    %v740 = vand.u32 %v57, 4294901760
    %741 = vmatpush1.msra.mxu0 %v740
    %742 = vmatprep.subr.mxu0 0.0
    %v743 = vand.u32 %v58, 4294901760
    %744 = vmatpush1.msra.mxu0 %v743
    %745 = vmatprep.subr.mxu0 0.0
    %v746 = vand.u32 %v59, 4294901760
    %747 = vmatpush1.msra.mxu0 %v746
    %748 = vmatprep.subr.mxu0 0.0
    %v749 = vand.u32 %v60, 4294901760
    %750 = vmatpush1.msra.mxu0 %v749
    %751 = vmatprep.subr.mxu0 0.0
    %752 = vmatpush1.msra.mxu0 0.0
    %753 = vmatprep.subr.mxu0 0.0
    %754 = vmatpush1.msra.mxu0 0.0
    %755 = vmatprep.subr.mxu0 0.0
    %756 = vmatpush1.msra.mxu0 0.0
    %757 = vmatprep.subr.mxu0 0.0
    %758 = vmatpush1.msra.mxu0 0.0
    %759 = vmatprep.subr.mxu0 0.0
    %760 = vmatpush1.msra.mxu0 0.0
    %761 = vmatprep.subr.mxu0 0.0
    %762 = vmatpush1.msra.mxu0 0.0
    %763 = vmatprep.subr.mxu0 0.0
    %764 = vmatpush1.msra.mxu0 0.0
    %765 = vmatprep.subr.mxu0 0.0
    %766 = vmatpush1.msra.mxu0 0.0
    %767 = vmatprep.subr.mxu0 0.0
    %768 = vmatpush1.msra.mxu0 0.0
    %769 = vmatprep.subr.mxu0 0.0
    %770 = vmatpush1.msra.mxu0 0.0
    %771 = vmatprep.subr.mxu0 0.0
    %772 = vmatpush1.msra.mxu0 0.0
    %773 = vmatprep.subr.mxu0 0.0
    %774 = vmatpush1.msra.mxu0 0.0
    %775 = vmatprep.subr.mxu0 0.0
    %776 = vmatpush1.msra.mxu0 0.0
    %777 = vmatprep.subr.mxu0 0.0
    %778 = vmatpush1.msra.mxu0 0.0
    %779 = vmatprep.subr.mxu0 0.0
    %780 = vmatpush1.msra.mxu0 0.0
    %781 = vmatprep.subr.mxu0 0.0
    %782 = vmatpush1.msra.mxu0 0.0
    %783 = vmatprep.mubr.f32.mxu0 0.0
    %v784 = vand.u32 %v702, 4294901760
    %v785 = vsub.f32 %v702, %v784
    %v786 = vand.u32 %v785, 4294901760
    %v787 = vsub.f32 %v785, %v786
    %v788 = vand.u32 %v787, 4294901760
    %789 = vmatmul.mubr.f32.gmra.mrb[0].mxu0 %v788
    %v790 = vpop.f32.mrb[0].mxu0
    %v791 = vadd.f32 0.0, %v790
    %v792 = vpop.f32.mrb[0].mxu0
    %793 = vdwg.mxu0
    %794 = vmatprep.subr.mxu0 0.0
    %v795 = vand.u32 %v45, 4294901760
    %v796 = vsub.f32 %v45, %v795
    %v797 = vand.u32 %v796, 4294901760
    %v798 = vsub.f32 %v796, %v797
    %v799 = vand.u32 %v798, 4294901760
    %800 = vmatpush1.msra.mxu0 %v799
    %801 = vmatprep.subr.mxu0 0.0
    %v802 = vand.u32 %v46, 4294901760
    %v803 = vsub.f32 %v46, %v802
    %v804 = vand.u32 %v803, 4294901760
    %v805 = vsub.f32 %v803, %v804
    %v806 = vand.u32 %v805, 4294901760
    %807 = vmatpush1.msra.mxu0 %v806
    %808 = vmatprep.subr.mxu0 0.0
    %v809 = vand.u32 %v47, 4294901760
    %v810 = vsub.f32 %v47, %v809
    %v811 = vand.u32 %v810, 4294901760
    %v812 = vsub.f32 %v810, %v811
    %v813 = vand.u32 %v812, 4294901760
    %814 = vmatpush1.msra.mxu0 %v813
    %815 = vmatprep.subr.mxu0 0.0
    %v816 = vand.u32 %v48, 4294901760
    %v817 = vsub.f32 %v48, %v816
    %v818 = vand.u32 %v817, 4294901760
    %v819 = vsub.f32 %v817, %v818
    %v820 = vand.u32 %v819, 4294901760
    %821 = vmatpush1.msra.mxu0 %v820
    %822 = vmatprep.subr.mxu0 0.0
    %v823 = vand.u32 %v49, 4294901760
    %v824 = vsub.f32 %v49, %v823
    %v825 = vand.u32 %v824, 4294901760
    %v826 = vsub.f32 %v824, %v825
    %v827 = vand.u32 %v826, 4294901760
    %828 = vmatpush1.msra.mxu0 %v827
    %829 = vmatprep.subr.mxu0 0.0
    %v830 = vand.u32 %v50, 4294901760
    %v831 = vsub.f32 %v50, %v830
    %v832 = vand.u32 %v831, 4294901760
    %v833 = vsub.f32 %v831, %v832
    %v834 = vand.u32 %v833, 4294901760
    %835 = vmatpush1.msra.mxu0 %v834
    %836 = vmatprep.subr.mxu0 0.0
    %v837 = vand.u32 %v51, 4294901760
    %v838 = vsub.f32 %v51, %v837
    %v839 = vand.u32 %v838, 4294901760
    %v840 = vsub.f32 %v838, %v839
    %v841 = vand.u32 %v840, 4294901760
    %842 = vmatpush1.msra.mxu0 %v841
    %843 = vmatprep.subr.mxu0 0.0
    %v844 = vand.u32 %v52, 4294901760
    %v845 = vsub.f32 %v52, %v844
    %v846 = vand.u32 %v845, 4294901760
    %v847 = vsub.f32 %v845, %v846
    %v848 = vand.u32 %v847, 4294901760
    %849 = vmatpush1.msra.mxu0 %v848
    %850 = vmatprep.subr.mxu0 0.0
    %v851 = vand.u32 %v53, 4294901760
    %v852 = vsub.f32 %v53, %v851
    %v853 = vand.u32 %v852, 4294901760
    %v854 = vsub.f32 %v852, %v853
    %v855 = vand.u32 %v854, 4294901760
    %856 = vmatpush1.msra.mxu0 %v855
    %857 = vmatprep.subr.mxu0 0.0
    %v858 = vand.u32 %v54, 4294901760
    %v859 = vsub.f32 %v54, %v858
    %v860 = vand.u32 %v859, 4294901760
    %v861 = vsub.f32 %v859, %v860
    %v862 = vand.u32 %v861, 4294901760
    %863 = vmatpush1.msra.mxu0 %v862
    %864 = vmatprep.subr.mxu0 0.0
    %v865 = vand.u32 %v55, 4294901760
    %v866 = vsub.f32 %v55, %v865
    %v867 = vand.u32 %v866, 4294901760
    %v868 = vsub.f32 %v866, %v867
    %v869 = vand.u32 %v868, 4294901760
    %870 = vmatpush1.msra.mxu0 %v869
    %871 = vmatprep.subr.mxu0 0.0
    %v872 = vand.u32 %v56, 4294901760
    %v873 = vsub.f32 %v56, %v872
    %v874 = vand.u32 %v873, 4294901760
    %v875 = vsub.f32 %v873, %v874
    %v876 = vand.u32 %v875, 4294901760
    %877 = vmatpush1.msra.mxu0 %v876
    %878 = vmatprep.subr.mxu0 0.0
    %v879 = vand.u32 %v57, 4294901760
    %v880 = vsub.f32 %v57, %v879
    %v881 = vand.u32 %v880, 4294901760
    %v882 = vsub.f32 %v880, %v881
    %v883 = vand.u32 %v882, 4294901760
    %884 = vmatpush1.msra.mxu0 %v883
    %885 = vmatprep.subr.mxu0 0.0
    %v886 = vand.u32 %v58, 4294901760
    %v887 = vsub.f32 %v58, %v886
    %v888 = vand.u32 %v887, 4294901760
    %v889 = vsub.f32 %v887, %v888
    %v890 = vand.u32 %v889, 4294901760
    %891 = vmatpush1.msra.mxu0 %v890
    %892 = vmatprep.subr.mxu0 0.0
    %v893 = vand.u32 %v59, 4294901760
    %v894 = vsub.f32 %v59, %v893
    %v895 = vand.u32 %v894, 4294901760
    %v896 = vsub.f32 %v894, %v895
    %v897 = vand.u32 %v896, 4294901760
    %898 = vmatpush1.msra.mxu0 %v897
    %899 = vmatprep.subr.mxu0 0.0
    %v900 = vand.u32 %v60, 4294901760
    %v901 = vsub.f32 %v60, %v900
    %v902 = vand.u32 %v901, 4294901760
    %v903 = vsub.f32 %v901, %v902
    %v904 = vand.u32 %v903, 4294901760
    %905 = vmatpush1.msra.mxu0 %v904
    %906 = vmatprep.subr.mxu0 0.0
    %907 = vmatpush1.msra.mxu0 0.0
    %908 = vmatprep.subr.mxu0 0.0
    %909 = vmatpush1.msra.mxu0 0.0
    %910 = vmatprep.subr.mxu0 0.0
    %911 = vmatpush1.msra.mxu0 0.0
    %912 = vmatprep.subr.mxu0 0.0
    %913 = vmatpush1.msra.mxu0 0.0
    %914 = vmatprep.subr.mxu0 0.0
    %915 = vmatpush1.msra.mxu0 0.0
    %916 = vmatprep.subr.mxu0 0.0
    %917 = vmatpush1.msra.mxu0 0.0
    %918 = vmatprep.subr.mxu0 0.0
    %919 = vmatpush1.msra.mxu0 0.0
    %920 = vmatprep.subr.mxu0 0.0
    %921 = vmatpush1.msra.mxu0 0.0
    %922 = vmatprep.subr.mxu0 0.0
    %923 = vmatpush1.msra.mxu0 0.0
    %924 = vmatprep.subr.mxu0 0.0
    %925 = vmatpush1.msra.mxu0 0.0
    %926 = vmatprep.subr.mxu0 0.0
    %927 = vmatpush1.msra.mxu0 0.0
    %928 = vmatprep.subr.mxu0 0.0
    %929 = vmatpush1.msra.mxu0 0.0
    %930 = vmatprep.subr.mxu0 0.0
    %931 = vmatpush1.msra.mxu0 0.0
    %932 = vmatprep.subr.mxu0 0.0
    %933 = vmatpush1.msra.mxu0 0.0
    %934 = vmatprep.subr.mxu0 0.0
    %935 = vmatpush1.msra.mxu0 0.0
    %936 = vmatprep.subr.mxu0 0.0
    %937 = vmatpush1.msra.mxu0 0.0
    %938 = vmatprep.mubr.f32.mxu0 0.0
    %v939 = vand.u32 %v702, 4294901760
    %940 = vmatmul.mubr.f32.gmra.mrb[0].mxu0 %v939
    %v941 = vpop.f32.mrb[0].mxu0
    %v942 = vadd.f32 %v791, %v941
    %v943 = vpop.f32.mrb[0].mxu0
    %944 = vdwg.mxu0
    %945 = vmatprep.subr.mxu0 0.0
    %v946 = vand.u32 %v45, 4294901760
    %v947 = vsub.f32 %v45, %v946
    %948 = vmatpush1.msra.mxu0 %v947
    %949 = vmatprep.subr.mxu0 0.0
    %v950 = vand.u32 %v46, 4294901760
    %v951 = vsub.f32 %v46, %v950
    %952 = vmatpush1.msra.mxu0 %v951
    %953 = vmatprep.subr.mxu0 0.0
    %v954 = vand.u32 %v47, 4294901760
    %v955 = vsub.f32 %v47, %v954
    %956 = vmatpush1.msra.mxu0 %v955
    %957 = vmatprep.subr.mxu0 0.0
    %v958 = vand.u32 %v48, 4294901760
    %v959 = vsub.f32 %v48, %v958
    %960 = vmatpush1.msra.mxu0 %v959
    %961 = vmatprep.subr.mxu0 0.0
    %v962 = vand.u32 %v49, 4294901760
    %v963 = vsub.f32 %v49, %v962
    %964 = vmatpush1.msra.mxu0 %v963
    %965 = vmatprep.subr.mxu0 0.0
    %v966 = vand.u32 %v50, 4294901760
    %v967 = vsub.f32 %v50, %v966
    %968 = vmatpush1.msra.mxu0 %v967
    %969 = vmatprep.subr.mxu0 0.0
    %v970 = vand.u32 %v51, 4294901760
    %v971 = vsub.f32 %v51, %v970
    %972 = vmatpush1.msra.mxu0 %v971
    %973 = vmatprep.subr.mxu0 0.0
    %v974 = vand.u32 %v52, 4294901760
    %v975 = vsub.f32 %v52, %v974
    %976 = vmatpush1.msra.mxu0 %v975
    %977 = vmatprep.subr.mxu0 0.0
    %v978 = vand.u32 %v53, 4294901760
    %v979 = vsub.f32 %v53, %v978
    %980 = vmatpush1.msra.mxu0 %v979
    %981 = vmatprep.subr.mxu0 0.0
    %v982 = vand.u32 %v54, 4294901760
    %v983 = vsub.f32 %v54, %v982
    %984 = vmatpush1.msra.mxu0 %v983
    %985 = vmatprep.subr.mxu0 0.0
    %v986 = vand.u32 %v55, 4294901760
    %v987 = vsub.f32 %v55, %v986
    %988 = vmatpush1.msra.mxu0 %v987
    %989 = vmatprep.subr.mxu0 0.0
    %v990 = vand.u32 %v56, 4294901760
    %v991 = vsub.f32 %v56, %v990
    %992 = vmatpush1.msra.mxu0 %v991
    %993 = vmatprep.subr.mxu0 0.0
    %v994 = vand.u32 %v57, 4294901760
    %v995 = vsub.f32 %v57, %v994
    %996 = vmatpush1.msra.mxu0 %v995
    %997 = vmatprep.subr.mxu0 0.0
    %v998 = vand.u32 %v58, 4294901760
    %v999 = vsub.f32 %v58, %v998
    %1000 = vmatpush1.msra.mxu0 %v999
    %1001 = vmatprep.subr.mxu0 0.0
    %v1002 = vand.u32 %v59, 4294901760
    %v1003 = vsub.f32 %v59, %v1002
    %1004 = vmatpush1.msra.mxu0 %v1003
    %1005 = vmatprep.subr.mxu0 0.0
    %v1006 = vand.u32 %v60, 4294901760
    %v1007 = vsub.f32 %v60, %v1006
    %1008 = vmatpush1.msra.mxu0 %v1007
    %1009 = vmatprep.subr.mxu0 0.0
    %1010 = vmatpush1.msra.mxu0 0.0
    %1011 = vmatprep.subr.mxu0 0.0
    %1012 = vmatpush1.msra.mxu0 0.0
    %1013 = vmatprep.subr.mxu0 0.0
    %1014 = vmatpush1.msra.mxu0 0.0
    %1015 = vmatprep.subr.mxu0 0.0
    %1016 = vmatpush1.msra.mxu0 0.0
    %1017 = vmatprep.subr.mxu0 0.0
    %1018 = vmatpush1.msra.mxu0 0.0
    %1019 = vmatprep.subr.mxu0 0.0
    %1020 = vmatpush1.msra.mxu0 0.0
    %1021 = vmatprep.subr.mxu0 0.0
    %1022 = vmatpush1.msra.mxu0 0.0
    %1023 = vmatprep.subr.mxu0 0.0
    %1024 = vmatpush1.msra.mxu0 0.0
    %1025 = vmatprep.subr.mxu0 0.0
    %1026 = vmatpush1.msra.mxu0 0.0
    %1027 = vmatprep.subr.mxu0 0.0
    %1028 = vmatpush1.msra.mxu0 0.0
    %1029 = vmatprep.subr.mxu0 0.0
    %1030 = vmatpush1.msra.mxu0 0.0
    %1031 = vmatprep.subr.mxu0 0.0
    %1032 = vmatpush1.msra.mxu0 0.0
    %1033 = vmatprep.subr.mxu0 0.0
    %1034 = vmatpush1.msra.mxu0 0.0
    %1035 = vmatprep.subr.mxu0 0.0
    %1036 = vmatpush1.msra.mxu0 0.0
    %1037 = vmatprep.subr.mxu0 0.0
    %1038 = vmatpush1.msra.mxu0 0.0
    %1039 = vmatprep.subr.mxu0 0.0
    %1040 = vmatpush1.msra.mxu0 0.0
    %1041 = vmatprep.mubr.f32.mxu0 0.0
    %v1042 = vand.u32 %v702, 4294901760
    %v1043 = vsub.f32 %v702, %v1042
    %1044 = vmatmul.mubr.f32.gmra.mrb[0].mxu0 %v1043
    %v1045 = vpop.f32.mrb[0].mxu0
    %v1046 = vadd.f32 %v942, %v1045
    %v1047 = vpop.f32.mrb[0].mxu0
    %1048 = vdwg.mxu0
    %1049 = vmatprep.subr.mxu0 0.0
    %v1050 = vand.u32 %v45, 4294901760
    %1051 = vmatpush1.msra.mxu0 %v1050
    %1052 = vmatprep.subr.mxu0 0.0
    %v1053 = vand.u32 %v46, 4294901760
    %1054 = vmatpush1.msra.mxu0 %v1053
    %1055 = vmatprep.subr.mxu0 0.0
    %v1056 = vand.u32 %v47, 4294901760
    %1057 = vmatpush1.msra.mxu0 %v1056
    %1058 = vmatprep.subr.mxu0 0.0
    %v1059 = vand.u32 %v48, 4294901760
    %1060 = vmatpush1.msra.mxu0 %v1059
    %1061 = vmatprep.subr.mxu0 0.0
    %v1062 = vand.u32 %v49, 4294901760
    %1063 = vmatpush1.msra.mxu0 %v1062
    %1064 = vmatprep.subr.mxu0 0.0
    %v1065 = vand.u32 %v50, 4294901760
    %1066 = vmatpush1.msra.mxu0 %v1065
    %1067 = vmatprep.subr.mxu0 0.0
    %v1068 = vand.u32 %v51, 4294901760
    %1069 = vmatpush1.msra.mxu0 %v1068
    %1070 = vmatprep.subr.mxu0 0.0
    %v1071 = vand.u32 %v52, 4294901760
    %1072 = vmatpush1.msra.mxu0 %v1071
    %1073 = vmatprep.subr.mxu0 0.0
    %v1074 = vand.u32 %v53, 4294901760
    %1075 = vmatpush1.msra.mxu0 %v1074
    %1076 = vmatprep.subr.mxu0 0.0
    %v1077 = vand.u32 %v54, 4294901760
    %1078 = vmatpush1.msra.mxu0 %v1077
    %1079 = vmatprep.subr.mxu0 0.0
    %v1080 = vand.u32 %v55, 4294901760
    %1081 = vmatpush1.msra.mxu0 %v1080
    %1082 = vmatprep.subr.mxu0 0.0
    %v1083 = vand.u32 %v56, 4294901760
    %1084 = vmatpush1.msra.mxu0 %v1083
    %1085 = vmatprep.subr.mxu0 0.0
    %v1086 = vand.u32 %v57, 4294901760
    %1087 = vmatpush1.msra.mxu0 %v1086
    %1088 = vmatprep.subr.mxu0 0.0
    %v1089 = vand.u32 %v58, 4294901760
    %1090 = vmatpush1.msra.mxu0 %v1089
    %1091 = vmatprep.subr.mxu0 0.0
    %v1092 = vand.u32 %v59, 4294901760
    %1093 = vmatpush1.msra.mxu0 %v1092
    %1094 = vmatprep.subr.mxu0 0.0
    %v1095 = vand.u32 %v60, 4294901760
    %1096 = vmatpush1.msra.mxu0 %v1095
    %1097 = vmatprep.subr.mxu0 0.0
    %1098 = vmatpush1.msra.mxu0 0.0
    %1099 = vmatprep.subr.mxu0 0.0
    %1100 = vmatpush1.msra.mxu0 0.0
    %1101 = vmatprep.subr.mxu0 0.0
    %1102 = vmatpush1.msra.mxu0 0.0
    %1103 = vmatprep.subr.mxu0 0.0
    %1104 = vmatpush1.msra.mxu0 0.0
    %1105 = vmatprep.subr.mxu0 0.0
    %1106 = vmatpush1.msra.mxu0 0.0
    %1107 = vmatprep.subr.mxu0 0.0
    %1108 = vmatpush1.msra.mxu0 0.0
    %1109 = vmatprep.subr.mxu0 0.0
    %1110 = vmatpush1.msra.mxu0 0.0
    %1111 = vmatprep.subr.mxu0 0.0
    %1112 = vmatpush1.msra.mxu0 0.0
    %1113 = vmatprep.subr.mxu0 0.0
    %1114 = vmatpush1.msra.mxu0 0.0
    %1115 = vmatprep.subr.mxu0 0.0
    %1116 = vmatpush1.msra.mxu0 0.0
    %1117 = vmatprep.subr.mxu0 0.0
    %1118 = vmatpush1.msra.mxu0 0.0
    %1119 = vmatprep.subr.mxu0 0.0
    %1120 = vmatpush1.msra.mxu0 0.0
    %1121 = vmatprep.subr.mxu0 0.0
    %1122 = vmatpush1.msra.mxu0 0.0
    %1123 = vmatprep.subr.mxu0 0.0
    %1124 = vmatpush1.msra.mxu0 0.0
    %1125 = vmatprep.subr.mxu0 0.0
    %1126 = vmatpush1.msra.mxu0 0.0
    %1127 = vmatprep.subr.mxu0 0.0
    %1128 = vmatpush1.msra.mxu0 0.0
    %1129 = vmatprep.mubr.f32.mxu0 0.0
    %v1130 = vand.u32 %v702, 4294901760
    %v1131 = vsub.f32 %v702, %v1130
    %v1132 = vand.u32 %v1131, 4294901760
    %1133 = vmatmul.mubr.f32.gmra.mrb[0].mxu0 %v1132
    %v1134 = vpop.f32.mrb[0].mxu0
    %v1135 = vadd.f32 %v1046, %v1134
    %v1136 = vpop.f32.mrb[0].mxu0
    %1137 = vdwg.mxu0
    %1138 = vmatprep.subr.mxu0 0.0
    %v1139 = vand.u32 %v45, 4294901760
    %v1140 = vsub.f32 %v45, %v1139
    %v1141 = vand.u32 %v1140, 4294901760
    %1142 = vmatpush1.msra.mxu0 %v1141
    %1143 = vmatprep.subr.mxu0 0.0
    %v1144 = vand.u32 %v46, 4294901760
    %v1145 = vsub.f32 %v46, %v1144
    %v1146 = vand.u32 %v1145, 4294901760
    %1147 = vmatpush1.msra.mxu0 %v1146
    %1148 = vmatprep.subr.mxu0 0.0
    %v1149 = vand.u32 %v47, 4294901760
    %v1150 = vsub.f32 %v47, %v1149
    %v1151 = vand.u32 %v1150, 4294901760
    %1152 = vmatpush1.msra.mxu0 %v1151
    %1153 = vmatprep.subr.mxu0 0.0
    %v1154 = vand.u32 %v48, 4294901760
    %v1155 = vsub.f32 %v48, %v1154
    %v1156 = vand.u32 %v1155, 4294901760
    %1157 = vmatpush1.msra.mxu0 %v1156
    %1158 = vmatprep.subr.mxu0 0.0
    %v1159 = vand.u32 %v49, 4294901760
    %v1160 = vsub.f32 %v49, %v1159
    %v1161 = vand.u32 %v1160, 4294901760
    %1162 = vmatpush1.msra.mxu0 %v1161
    %1163 = vmatprep.subr.mxu0 0.0
    %v1164 = vand.u32 %v50, 4294901760
    %v1165 = vsub.f32 %v50, %v1164
    %v1166 = vand.u32 %v1165, 4294901760
    %1167 = vmatpush1.msra.mxu0 %v1166
    %1168 = vmatprep.subr.mxu0 0.0
    %v1169 = vand.u32 %v51, 4294901760
    %v1170 = vsub.f32 %v51, %v1169
    %v1171 = vand.u32 %v1170, 4294901760
    %1172 = vmatpush1.msra.mxu0 %v1171
    %1173 = vmatprep.subr.mxu0 0.0
    %v1174 = vand.u32 %v52, 4294901760
    %v1175 = vsub.f32 %v52, %v1174
    %v1176 = vand.u32 %v1175, 4294901760
    %1177 = vmatpush1.msra.mxu0 %v1176
    %1178 = vmatprep.subr.mxu0 0.0
    %v1179 = vand.u32 %v53, 4294901760
    %v1180 = vsub.f32 %v53, %v1179
    %v1181 = vand.u32 %v1180, 4294901760
    %1182 = vmatpush1.msra.mxu0 %v1181
    %1183 = vmatprep.subr.mxu0 0.0
    %v1184 = vand.u32 %v54, 4294901760
    %v1185 = vsub.f32 %v54, %v1184
    %v1186 = vand.u32 %v1185, 4294901760
    %1187 = vmatpush1.msra.mxu0 %v1186
    %1188 = vmatprep.subr.mxu0 0.0
    %v1189 = vand.u32 %v55, 4294901760
    %v1190 = vsub.f32 %v55, %v1189
    %v1191 = vand.u32 %v1190, 4294901760
    %1192 = vmatpush1.msra.mxu0 %v1191
    %1193 = vmatprep.subr.mxu0 0.0
    %v1194 = vand.u32 %v56, 4294901760
    %v1195 = vsub.f32 %v56, %v1194
    %v1196 = vand.u32 %v1195, 4294901760
    %1197 = vmatpush1.msra.mxu0 %v1196
    %1198 = vmatprep.subr.mxu0 0.0
    %v1199 = vand.u32 %v57, 4294901760
    %v1200 = vsub.f32 %v57, %v1199
    %v1201 = vand.u32 %v1200, 4294901760
    %1202 = vmatpush1.msra.mxu0 %v1201
    %1203 = vmatprep.subr.mxu0 0.0
    %v1204 = vand.u32 %v58, 4294901760
    %v1205 = vsub.f32 %v58, %v1204
    %v1206 = vand.u32 %v1205, 4294901760
    %1207 = vmatpush1.msra.mxu0 %v1206
    %1208 = vmatprep.subr.mxu0 0.0
    %v1209 = vand.u32 %v59, 4294901760
    %v1210 = vsub.f32 %v59, %v1209
    %v1211 = vand.u32 %v1210, 4294901760
    %1212 = vmatpush1.msra.mxu0 %v1211
    %1213 = vmatprep.subr.mxu0 0.0
    %v1214 = vand.u32 %v60, 4294901760
    %v1215 = vsub.f32 %v60, %v1214
    %v1216 = vand.u32 %v1215, 4294901760
    %1217 = vmatpush1.msra.mxu0 %v1216
    %1218 = vmatprep.subr.mxu0 0.0
    %1219 = vmatpush1.msra.mxu0 0.0
    %1220 = vmatprep.subr.mxu0 0.0
    %1221 = vmatpush1.msra.mxu0 0.0
    %1222 = vmatprep.subr.mxu0 0.0
    %1223 = vmatpush1.msra.mxu0 0.0
    %1224 = vmatprep.subr.mxu0 0.0
    %1225 = vmatpush1.msra.mxu0 0.0
    %1226 = vmatprep.subr.mxu0 0.0
    %1227 = vmatpush1.msra.mxu0 0.0
    %1228 = vmatprep.subr.mxu0 0.0
    %1229 = vmatpush1.msra.mxu0 0.0
    %1230 = vmatprep.subr.mxu0 0.0
    %1231 = vmatpush1.msra.mxu0 0.0
    %1232 = vmatprep.subr.mxu0 0.0
    %1233 = vmatpush1.msra.mxu0 0.0
    %1234 = vmatprep.subr.mxu0 0.0
    %1235 = vmatpush1.msra.mxu0 0.0
    %1236 = vmatprep.subr.mxu0 0.0
    %1237 = vmatpush1.msra.mxu0 0.0
    %1238 = vmatprep.subr.mxu0 0.0
    %1239 = vmatpush1.msra.mxu0 0.0
    %1240 = vmatprep.subr.mxu0 0.0
    %1241 = vmatpush1.msra.mxu0 0.0
    %1242 = vmatprep.subr.mxu0 0.0
    %1243 = vmatpush1.msra.mxu0 0.0
    %1244 = vmatprep.subr.mxu0 0.0
    %1245 = vmatpush1.msra.mxu0 0.0
    %1246 = vmatprep.subr.mxu0 0.0
    %1247 = vmatpush1.msra.mxu0 0.0
    %1248 = vmatprep.subr.mxu0 0.0
    %1249 = vmatpush1.msra.mxu0 0.0
    %1250 = vmatprep.mubr.f32.mxu0 0.0
    %v1251 = vand.u32 %v702, 4294901760
    %1252 = vmatmul.mubr.f32.gmra.mrb[0].mxu0 %v1251
    %v1253 = vpop.f32.mrb[0].mxu0
    %v1254 = vadd.f32 %v1135, %v1253
    %v1255 = vpop.f32.mrb[0].mxu0
    %1256 = vdwg.mxu0
    %1257 = vmatprep.subr.mxu0 0.0
    %v1258 = vand.u32 %v45, 4294901760
    %1259 = vmatpush1.msra.mxu0 %v1258
    %1260 = vmatprep.subr.mxu0 0.0
    %v1261 = vand.u32 %v46, 4294901760
    %1262 = vmatpush1.msra.mxu0 %v1261
    %1263 = vmatprep.subr.mxu0 0.0
    %v1264 = vand.u32 %v47, 4294901760
    %1265 = vmatpush1.msra.mxu0 %v1264
    %1266 = vmatprep.subr.mxu0 0.0
    %v1267 = vand.u32 %v48, 4294901760
    %1268 = vmatpush1.msra.mxu0 %v1267
    %1269 = vmatprep.subr.mxu0 0.0
    %v1270 = vand.u32 %v49, 4294901760
    %1271 = vmatpush1.msra.mxu0 %v1270
    %1272 = vmatprep.subr.mxu0 0.0
    %v1273 = vand.u32 %v50, 4294901760
    %1274 = vmatpush1.msra.mxu0 %v1273
    %1275 = vmatprep.subr.mxu0 0.0
    %v1276 = vand.u32 %v51, 4294901760
    %1277 = vmatpush1.msra.mxu0 %v1276
    %1278 = vmatprep.subr.mxu0 0.0
    %v1279 = vand.u32 %v52, 4294901760
    %1280 = vmatpush1.msra.mxu0 %v1279
    %1281 = vmatprep.subr.mxu0 0.0
    %v1282 = vand.u32 %v53, 4294901760
    %1283 = vmatpush1.msra.mxu0 %v1282
    %1284 = vmatprep.subr.mxu0 0.0
    %v1285 = vand.u32 %v54, 4294901760
    %1286 = vmatpush1.msra.mxu0 %v1285
    %1287 = vmatprep.subr.mxu0 0.0
    %v1288 = vand.u32 %v55, 4294901760
    %1289 = vmatpush1.msra.mxu0 %v1288
    %1290 = vmatprep.subr.mxu0 0.0
    %v1291 = vand.u32 %v56, 4294901760
    %1292 = vmatpush1.msra.mxu0 %v1291
    %1293 = vmatprep.subr.mxu0 0.0
    %v1294 = vand.u32 %v57, 4294901760
    %1295 = vmatpush1.msra.mxu0 %v1294
    %1296 = vmatprep.subr.mxu0 0.0
    %v1297 = vand.u32 %v58, 4294901760
    %1298 = vmatpush1.msra.mxu0 %v1297
    %1299 = vmatprep.subr.mxu0 0.0
    %v1300 = vand.u32 %v59, 4294901760
    %1301 = vmatpush1.msra.mxu0 %v1300
    %1302 = vmatprep.subr.mxu0 0.0
    %v1303 = vand.u32 %v60, 4294901760
    %1304 = vmatpush1.msra.mxu0 %v1303
    %1305 = vmatprep.subr.mxu0 0.0
    %1306 = vmatpush1.msra.mxu0 0.0
    %1307 = vmatprep.subr.mxu0 0.0
    %1308 = vmatpush1.msra.mxu0 0.0
    %1309 = vmatprep.subr.mxu0 0.0
    %1310 = vmatpush1.msra.mxu0 0.0
    %1311 = vmatprep.subr.mxu0 0.0
    %1312 = vmatpush1.msra.mxu0 0.0
    %1313 = vmatprep.subr.mxu0 0.0
    %1314 = vmatpush1.msra.mxu0 0.0
    %1315 = vmatprep.subr.mxu0 0.0
    %1316 = vmatpush1.msra.mxu0 0.0
    %1317 = vmatprep.subr.mxu0 0.0
    %1318 = vmatpush1.msra.mxu0 0.0
    %1319 = vmatprep.subr.mxu0 0.0
    %1320 = vmatpush1.msra.mxu0 0.0
    %1321 = vmatprep.subr.mxu0 0.0
    %1322 = vmatpush1.msra.mxu0 0.0
    %1323 = vmatprep.subr.mxu0 0.0
    %1324 = vmatpush1.msra.mxu0 0.0
    %1325 = vmatprep.subr.mxu0 0.0
    %1326 = vmatpush1.msra.mxu0 0.0
    %1327 = vmatprep.subr.mxu0 0.0
    %1328 = vmatpush1.msra.mxu0 0.0
    %1329 = vmatprep.subr.mxu0 0.0
    %1330 = vmatpush1.msra.mxu0 0.0
    %1331 = vmatprep.subr.mxu0 0.0
    %1332 = vmatpush1.msra.mxu0 0.0
    %1333 = vmatprep.subr.mxu0 0.0
    %1334 = vmatpush1.msra.mxu0 0.0
    %1335 = vmatprep.subr.mxu0 0.0
    %1336 = vmatpush1.msra.mxu0 0.0
    %1337 = vmatprep.mubr.f32.mxu0 0.0
    %v1338 = vand.u32 %v702, 4294901760
    %1339 = vmatmul.mubr.f32.gmra.mrb[0].mxu0 %v1338
    %v1340 = vpop.f32.mrb[0].mxu0
    %v1341 = vadd.f32 %v1254, %v1340
    %v1342 = vpop.f32.mrb[0].mxu0
    %1343 = vdwg.mxu0
    %v1344 = vmul.f32 %v699, %v699
    %v1345 = vsub.f32 %v1341, %v1344
    %v1346 = vadd.f32 %v1345, 1e-05
    %v1347 = vrsqrt.pop %v1346
    %v1348 = vsub.f32 %v44, %v699
    %v1349 = vmul.f32 %v1348, %v1347
    %v1350 = vld [vmem:[%s2] sm:$0x1]
    %v1352 = vlaneseq
    %v1353 = vshrl.u32 %v1352, 7
    %v1354 = vsub.s32 0, %v1353
    %v1355 = vrot.slane %v1350, %v1354
    %v1357 = vmul.f32 %v1349, %v1355
    %v1358 = vld [vmem:[%s3] sm:$0x1]
    %v1360 = vlaneseq
    %v1361 = vshrl.u32 %v1360, 7
    %v1362 = vsub.s32 0, %v1361
    %v1363 = vrot.slane %v1358, %v1362
    %v1365 = vadd.f32 %v1357, %v1363
    %1366 = vst [vmem:[#allocation7] sm:$0xff] %v1365
    // Predicated region
    $region26: #{tpu_custom_call.1} parent=1 // pred_check
      _
    $region27: #{tpu_custom_call.1} parent=1 // pred_check_branch
      %1368 = sbr.rel (0) target = $region29
    $region28: #{tpu_custom_call.1} parent=1 // pred_region
      %s1370 = ssub.s32 128, 128
      %1371 = vsyncadd [#allocation4], %s1370
      %s1373 = sshll.u32 [#allocation7], 4
      %s1374 = int_to_ptr.vmem [resolvable:$true] %s1373
      %1376 = dma.vmem_to_hbm [thread:$0]  %s1374, 128, %s4, [#allocation4]
    $region29: #{tpu_custom_call.1} parent=1 // pred_fallthru
      _
    // Predicated region
    $region30: #{tpu_custom_call.1} parent=1 // pred_check
      _
    $region31: #{tpu_custom_call.1} parent=1 // pred_check_branch
      %1378 = sbr.rel (0) target = $region33
    $region32: #{tpu_custom_call.1} parent=1 // pred_region
      %1379 = dma.done [#allocation4], 128
    $region33: #{tpu_custom_call.1} parent=1 // pred_fallthru
      _
    %1380 = vsyncpa [#allocation3], 1
    %1381 = vsyncpa [#allocation6], 1
    %1382 = vsyncpa [#allocation4], 1

</llo_original>
